<compile_context>
chip_gen: v5e
topology: v5e:2x2
jax: 0.10.0
libtpu: 0.0.40
codegen_flags: <defaults>
</compile_context>

<pallas_src>
import functools
import numpy as np
import jax
import jax.numpy as jnp
from jax.experimental import pallas as pl
from jax.experimental.pallas import tpu as pltpu


# Fixed DARTS "normal" genotype used by this Cell.
_OP_NAMES = ('sep_conv_3x3', 'sep_conv_5x5', 'sep_conv_3x3', 'sep_conv_3x3',
             'sep_conv_3x3', 'dil_conv_3x3', 'sep_conv_3x3', 'dil_conv_3x3')
_INDICES = (1, 0, 0, 2, 3, 1, 2, 3)
# concat = states[2:6], multiplier = 4


# ---------------------------------------------------------------------------
# Host-side matrix builders (numpy)
# ---------------------------------------------------------------------------
def _interp_matrix_np(out_size, in_size):
    """Bilinear interpolation matrix (align_corners=True): out = M @ in."""
    m = np.zeros((out_size, in_size), np.float32)
    if out_size == 1:
        m[0, 0] = 1.0
        return m
    scale = (in_size - 1) / (out_size - 1)
    for i in range(out_size):
        src = i * scale
        lo = min(int(np.floor(src)), in_size - 1)
        hi = min(lo + 1, in_size - 1)
        frac = src - lo
        m[i, lo] += 1.0 - frac
        m[i, hi] += frac
    return m


def _up_chain_np(in_size, times):
    """Compose `times` successive x2 bilinear upsamples into one matrix."""
    m = np.eye(in_size, dtype=np.float32)
    s = in_size
    for _ in range(times):
        m = _interp_matrix_np(2 * s, s) @ m
        s *= 2
    return m


def _shift_matrix(n, off):
    """m[a, b] = 1 iff b == a + off (and 0 <= b < n); otherwise 0."""
    m = np.zeros((n, n), np.float32)
    for a in range(n):
        b = a + off
        if 0 <= b < n:
            m[a, b] = 1.0
    return m


def _interp_matrix(out_size, in_size):
    return jnp.asarray(_interp_matrix_np(out_size, in_size))


# ---------------------------------------------------------------------------
# Parameter packing: fold upsample / pad / depthwise / pointwise / BN into
# matrices acting on the (H, W*C) lane layout.
# ---------------------------------------------------------------------------
def pack_up_params(params, x1_shape, x2_shape, left_shape, start=True):
    _, C_pp, H1, W1 = x1_shape
    _, C2, H2, W2 = x2_shape
    N, CL, H, W = left_shape
    C = params['pre0']['w'].shape[1]
    assert params['pre1']['w'].shape[0] == CL + C2
    WC = W * C

    # --- bilinear upsample matrices (x1: 1 or 2 doublings; x2: 1 doubling + zero-pad) ---
    times = 1 if start else 2
    u1h = _up_chain_np(H1, times)                       # (H, H1)
    u1w = _up_chain_np(W1, times)                       # (W, W1)
    assert u1h.shape[0] == H and u1w.shape[0] == W, "x1 upsample must match left_x size"
    u1wc = np.kron(u1w.T, np.eye(C_pp, dtype=np.float32))   # (W1*C_pp, W*C_pp)

    H2o, W2o = 2 * H2, 2 * W2
    dY, dX = H - H2o, W - W2o
    u2h = np.zeros((H, H2), np.float32)                 # upsample + top/bottom zero-pad
    u2h[dY // 2: dY // 2 + H2o, :] = _interp_matrix_np(H2o, H2)
    u2w = np.zeros((W, W2), np.float32)                 # upsample + left/right zero-pad
    u2w[dX // 2: dX // 2 + W2o, :] = _interp_matrix_np(W2o, W2)
    u2wc = np.kron(u2w.T, np.eye(C2, dtype=np.float32))      # (W2*C2, W*C2)

    eyeW = np.eye(W, dtype=np.float32)

    def bd1x1(w_small, scale):          # (cin, C) -> (W*cin, W*C); BN scale folded in
        return jnp.kron(jnp.asarray(eyeW), w_small * scale[None, :])

    def tile_bias(b):                   # (C,) -> (1, W*C), laid out as [b, b, ..., b]
        return jnp.tile(b, W)[None, :]

    pw_blocks, dwm_blocks, rsh_blocks, bias_rows = [], [], [], []

    def add_pw(m):
        off = sum(x.shape[0] for x in pw_blocks)
        pw_blocks.append(m)
        return off

    def add_bias(b):
        bias_rows.append(tile_bias(b))
        return len(bias_rows) - 1

    def add_dw_block(wd, wp, scale, dil):
        # One ReLU -> depthwise KxK (dilated) -> pointwise 1x1 -> BN block, as
        # K (per-row-tap) matrices: out = sum_i (R_i @ relu(h)) @ M_i + bias.
        K = wd.shape[0]
        pad = dil * (K - 1) // 2
        wps = wp * scale[None, :]                                   # fold BN scale
        # lane-axis (W,C) mixing matrices, one per row tap i, pointwise folded in
        S = np.stack([_shift_matrix(W, pad - j * dil) for j in range(K)])   # (K, W, W)
        m = jnp.einsum('jab,ijc,cd->iacbd', jnp.asarray(S), wd, wps)        # (K,W,C,W,C)
        m = m.reshape(K * W * C, W * C)
        # row (H) shift selectors, one per row tap i
        R = np.concatenate([_shift_matrix(H, i * dil - pad) for i in range(K)], axis=0)
        dwm_off = sum(x.shape[0] for x in dwm_blocks)
        rsh_off = sum(x.shape[0] for x in rsh_blocks)
        dwm_blocks.append(m)
        rsh_blocks.append(jnp.asarray(R))
        return dict(K=K, dwm=dwm_off, rsh=rsh_off)

    meta = dict(indices=_INDICES, dims=dict(H=H, W=W, C=C))

    p0 = params['pre0']
    meta['pre0'] = (add_pw(bd1x1(p0['w'], p0['scale'])), W * C_pp, add_bias(p0['bias']))
    p1 = params['pre1']
    # s1 = concat([left_x, x2_up_pad], channels); split the 1x1 weight accordingly.
    meta['pre1a'] = (add_pw(bd1x1(p1['w'][:CL], p1['scale'])), W * CL)
    meta['pre1b'] = (add_pw(bd1x1(p1['w'][CL:], p1['scale'])), W * C2)
    meta['pre1_bias'] = add_bias(p1['bias'])

    ops_meta = []
    for p in params['ops']:
        blocks = []
        if p['kind'] == 'sep':
            blk = add_dw_block(p['dw1'], p['pw1'], p['scale1'], 1)
            blk['b'] = add_bias(p['bias1'])
            blocks.append(blk)
            blk = add_dw_block(p['dw2'], p['pw2'], p['scale2'], 1)
            blk['b'] = add_bias(p['bias2'])
            blocks.append(blk)
        else:   # dil_conv
            blk = add_dw_block(p['dw'], p['pw'], p['scale'], p['dilation'])
            blk['b'] = add_bias(p['bias'])
            blocks.append(blk)
        ops_meta.append(blocks)
    meta['ops'] = ops_meta

    arrays = dict(
        u1h=jnp.asarray(u1h), u1wc=jnp.asarray(u1wc),
        u2h=jnp.asarray(u2h), u2wc=jnp.asarray(u2wc),
        pw=jnp.concatenate(pw_blocks, axis=0).astype(jnp.float32),
        dwm=jnp.concatenate(dwm_blocks, axis=0).astype(jnp.float32),
        rsh=jnp.concatenate(rsh_blocks, axis=0).astype(jnp.float32),
        bias=jnp.concatenate(bias_rows, axis=0).astype(jnp.float32),
    )
    return arrays, meta


# ---------------------------------------------------------------------------
# The single fused Pallas kernel: whole Up forward for one batch image.
# ---------------------------------------------------------------------------
def _up_cell_kernel(x1_ref, x2_ref, left_ref,
                    u1h_ref, u1wc_ref, u2h_ref, u2wc_ref,
                    pw_ref, dwm_ref, rsh_ref, b_ref, o_ref, *, meta):
    dims = meta['dims']
    H, W, C = dims['H'], dims['W'], dims['C']
    WC = W * C
    f32 = jnp.float32

    def mm(a, b):
        return jnp.dot(a, b, preferred_element_type=f32)

    def bias(idx):
        return b_ref[idx:idx + 1, :]                 # (1, W*C), broadcast over rows

    # --- bilinear x2 upsample (x2 path also includes the zero-pad, folded in) ---
    s0_in = mm(u1h_ref[...], mm(x1_ref[0].astype(f32), u1wc_ref[...]))   # (H, W*C_pp)
    x2u = mm(u2h_ref[...], mm(x2_ref[0].astype(f32), u2wc_ref[...]))     # (H, W*C2)
    left = left_ref[0].astype(f32)                                       # (H, W*CL)

    # --- preprocess0/1: ReLU -> 1x1 conv (BN scale folded) -> + bias ---
    o0, r0, b0 = meta['pre0']
    s0 = mm(jnp.maximum(s0_in, 0.0), pw_ref[o0:o0 + r0, :]) + bias(b0)
    oa, ra = meta['pre1a']
    ob, rb = meta['pre1b']
    # channel-concat [left_x, x2] is folded into the split 1x1 weight.
    s1 = (mm(jnp.maximum(left, 0.0), pw_ref[oa:oa + ra, :])
          + mm(jnp.maximum(x2u, 0.0), pw_ref[ob:ob + rb, :])
          + bias(meta['pre1_bias']))

    # --- ReLU -> depthwise KxK -> pointwise 1x1 -> BN, entirely as matmuls ---
    def dw_block(h, blk):
        xr = jnp.maximum(h, 0.0)                      # (H, W*C)
        acc = None
        for i in range(blk['K']):
            r_i = rsh_ref[blk['rsh'] + i * H: blk['rsh'] + (i + 1) * H, :]     # (H, H)
            m_i = dwm_ref[blk['dwm'] + i * WC: blk['dwm'] + (i + 1) * WC, :]   # (WC, WC)
            c = mm(mm(r_i, xr), m_i)
            acc = c if acc is None else acc + c
        return acc + bias(blk['b'])

    def apply_op(blocks, h):
        for blk in blocks:                            # sep_conv = 2 blocks, dil_conv = 1
            h = dw_block(h, blk)
        return h

    states = [s0, s1]
    for step in range(4):
        i1 = meta['indices'][2 * step]
        i2 = meta['indices'][2 * step + 1]
        h1 = apply_op(meta['ops'][2 * step], states[i1])
        h2 = apply_op(meta['ops'][2 * step + 1], states[i2])
        states.append(h1 + h2)                        # drop_path is a no-op (eval)

    # concat(states[2:6]) -> four lane-dense (H, W*C) slabs of the output block
    for k in range(4):
        o_ref[0, k, :, :] = states[2 + k].astype(o_ref.dtype)


def up_fused_forward(arrays, x1, x2, left_x, *, meta):
    """x1/x2/left_x in NCHW; returns NCHW (N, 4*C, H, W)."""
    H, W, C = meta['dims']['H'], meta['dims']['W'], meta['dims']['C']
    WC = W * C
    N = x1.shape[0]

    def to_layout(x):   # NCHW -> (N, H, W*Cin): channels onto the lane axis (tiny XLA op)
        n, c, h, w = x.shape
        return jnp.transpose(x, (0, 2, 3, 1)).reshape(n, h, w * c)

    x1l, x2l, leftl = to_layout(x1), to_layout(x2), to_layout(left_x)

    kernel = functools.partial(_up_cell_kernel, meta=meta)
    const2 = lambda n: (0, 0)

    out = pl.pallas_call(
        kernel,
        out_shape=jax.ShapeDtypeStruct((N, 4, H, WC), x1.dtype),
        grid=(N,),
        in_specs=[
            pl.BlockSpec((1, x1l.shape[1], x1l.shape[2]), lambda n: (n, 0, 0)),
            pl.BlockSpec((1, x2l.shape[1], x2l.shape[2]), lambda n: (n, 0, 0)),
            pl.BlockSpec((1, leftl.shape[1], leftl.shape[2]), lambda n: (n, 0, 0)),
            pl.BlockSpec(arrays['u1h'].shape, const2),
            pl.BlockSpec(arrays['u1wc'].shape, const2),
            pl.BlockSpec(arrays['u2h'].shape, const2),
            pl.BlockSpec(arrays['u2wc'].shape, const2),
            pl.BlockSpec(arrays['pw'].shape, const2),
            pl.BlockSpec(arrays['dwm'].shape, const2),
            pl.BlockSpec(arrays['rsh'].shape, const2),
            pl.BlockSpec(arrays['bias'].shape, const2),
        ],
        out_specs=pl.BlockSpec((1, 4, H, WC), lambda n: (n, 0, 0, 0)),
        compiler_params=pltpu.CompilerParams(
            dimension_semantics=("parallel",)),        # v7x: 2 TCs split the batch
    )(x1l, x2l, leftl,
      arrays['u1h'], arrays['u1wc'], arrays['u2h'], arrays['u2wc'],
      arrays['pw'], arrays['dwm'], arrays['rsh'], arrays['bias'])

    # (N, 4, H, W*C) -> NCHW (N, 4C, H, W): one tiny XLA transpose on the output
    out = out.reshape(N, 4, H, W, C)
    out = jnp.transpose(out, (0, 1, 4, 2, 3)).reshape(N, 4 * C, H, W)
    return out


def pallas_up_forward(params, x1, x2, left_x, start=True):
    arrays, meta = pack_up_params(params, x1.shape, x2.shape, left_x.shape, start)
    return up_fused_forward(arrays, x1, x2, left_x, meta=meta)


# ---------------------------------------------------------------------------
# Pure-JAX reference (for correctness check)
# ---------------------------------------------------------------------------
def _ref_up2(x):
    N, C, H, W = x.shape
    wh = _interp_matrix(2 * H, H)
    ww = _interp_matrix(2 * W, W)
    return jnp.einsum('ph,nchw,qw->ncpq', wh, x, ww)


def _ref_conv1x1(x, p):
    y = jnp.einsum('nhwc,cd->nhwd', jnp.maximum(x, 0.0), p['w'])
    return y * p['scale'] + p['bias']


def _ref_dwblock(x, wd, wp, scale, bias, dilation):
    xr = jnp.maximum(x, 0.0)
    K = wd.shape[0]
    C = x.shape[-1]
    pad = dilation * (K - 1) // 2
    y = jax.lax.conv_general_dilated(
        xr, wd[:, :, None, :], (1, 1), [(pad, pad), (pad, pad)],
        rhs_dilation=(dilation, dilation),
        dimension_numbers=('NHWC', 'HWIO', 'NHWC'), feature_group_count=C)
    y = jnp.einsum('nhwc,cd->nhwd', y, wp)
    return y * scale + bias


def ref_up_forward(params, x1, x2, left_x, start=True):
    x2u = _ref_up2(x2)
    x1u = _ref_up2(x1)
    if not start:
        x1u = _ref_up2(x1u)
    diffY = left_x.shape[2] - x2u.shape[2]
    diffX = left_x.shape[3] - x2u.shape[3]
    x2p = jnp.pad(x2u, ((0, 0), (0, 0),
                        (diffY // 2, diffY - diffY // 2),
                        (diffX // 2, diffX - diffX // 2)))
    x2c = jnp.concatenate([left_x, x2p], axis=1)
    s0 = jnp.transpose(x1u, (0, 2, 3, 1))
    s1 = jnp.transpose(x2c, (0, 2, 3, 1))
    s0 = _ref_conv1x1(s0, params['pre0'])
    s1 = _ref_conv1x1(s1, params['pre1'])
    states = [s0, s1]

    def apply_op(p, h):
        if p['kind'] == 'sep':
            h = _ref_dwblock(h, p['dw1'], p['pw1'], p['scale1'], p['bias1'], 1)
            return _ref_dwblock(h, p['dw2'], p['pw2'], p['scale2'], p['bias2'], 1)
        return _ref_dwblock(h, p['dw'], p['pw'], p['scale'], p['bias'], p['dilation'])

    for step in range(4):
        h1 = apply_op(params['ops'][2 * step], states[_INDICES[2 * step]])
        h2 = apply_op(params['ops'][2 * step + 1], states[_INDICES[2 * step + 1]])
        states.append(h1 + h2)
    out = jnp.concatenate(states[2:6], axis=-1)
    return jnp.transpose(out, (0, 3, 1, 2))


# ---------------------------------------------------------------------------
# Deterministic parameter init (shapes per Cell(C_pp, C_prev, C, False, False))
# ---------------------------------------------------------------------------
def init_params(key, C_pp, C_prev, C):
    keys = iter(jax.random.split(key, 64))

    def conv_w(cin, cout):
        return 0.2 * jax.random.normal(next(keys), (cin, cout), jnp.float32)

    def dw_w(k):
        return 0.2 * jax.random.normal(next(keys), (k, k, C), jnp.float32)

    def bn(c):
        k1, k2, k3, k4 = jax.random.split(next(keys), 4)
        gamma = 1.0 + 0.1 * jax.random.normal(k1, (c,), jnp.float32)
        beta = 0.05 * jax.random.normal(k2, (c,), jnp.float32)
        mean = 0.05 * jax.random.normal(k3, (c,), jnp.float32)
        var = 1.0 + 0.1 * jax.random.uniform(k4, (c,), jnp.float32)
        scale = gamma / jnp.sqrt(var + 1e-5)   # eval-mode BN folded
        bias = beta - mean * scale
        return scale, bias

    params = {}
    s, b = bn(C)
    params['pre0'] = dict(w=conv_w(C_pp, C), scale=s, bias=b)
    s, b = bn(C)
    params['pre1'] = dict(w=conv_w(C_prev, C), scale=s, bias=b)

    ops = []
    for name in _OP_NAMES:
        if name.startswith('sep'):
            k = 3 if '3x3' in name else 5
            s1_, b1_ = bn(C)
            s2_, b2_ = bn(C)
            ops.append(dict(kind='sep',
                            dw1=dw_w(k), pw1=conv_w(C, C), scale1=s1_, bias1=b1_,
                            dw2=dw_w(k), pw2=conv_w(C, C), scale2=s2_, bias2=b2_))
        else:  # dil_conv_3x3: kernel 3, dilation 2, padding 2
            s_, b_ = bn(C)
            ops.append(dict(kind='dil', dilation=2,
                            dw=dw_w(3), pw=conv_w(C, C), scale=s_, bias=b_))
    params['ops'] = ops
    return params


# ---------------------------------------------------------------------------
if __name__ == "__main__":
    # Up(C_prev_prev=8, C_prev=16, C=8)
    C_pp, C_prev, C = 8, 16, 8
    N = 2

    key = jax.random.PRNGKey(0)
    kp, k1, k2, k3 = jax.random.split(key, 4)
    params = init_params(kp, C_pp, C_prev, C)

    # x1: (N, C_pp, 8, 8)  -> upsampled to 16x16
    # x2: (N, 8, 8, 8)     -> upsampled to 16x16, concat with left_x (8 ch) -> C_prev=16
    x1 = jax.random.normal(k1, (N, C_pp, 8, 8), jnp.float32)
    x2 = jax.random.normal(k2, (N, 8, 8, 8), jnp.float32)
    left_x = jax.random.normal(k3, (N, 8, 16, 16), jnp.float32)

    # Pack weights once (outside jit): upsample/pad/depthwise/pointwise/BN all
    # folded into matrices acting on the (H, W*C) lane layout.
    arrays, meta = pack_up_params(params, x1.shape, x2.shape, left_x.shape, start=True)

    fwd = jax.jit(functools.partial(up_fused_forward, meta=meta))
    out = jax.block_until_ready(fwd(arrays, x1, x2, left_x))

    assert out.shape == (N, 4 * C, 16, 16), out.shape

    ref = ref_up_forward(params, x1, x2, left_x, start=True)
    np.testing.assert_allclose(np.asarray(out), np.asarray(ref),
                               rtol=2e-3, atol=2e-3)
    print("KERNEL_OK")
</pallas_src>

<mosaic_0001>
module attributes {stable_mosaic.version = 11 : i64} {
  func.func @_up_cell_kernel(%arg0: i32, %arg1: memref<1x8x64xf32, #tpu.memory_space<vmem>>, %arg2: memref<1x8x64xf32, #tpu.memory_space<vmem>>, %arg3: memref<1x16x128xf32, #tpu.memory_space<vmem>>, %arg4: memref<16x8xf32, #tpu.memory_space<vmem>>, %arg5: memref<64x128xf32, #tpu.memory_space<vmem>>, %arg6: memref<16x8xf32, #tpu.memory_space<vmem>>, %arg7: memref<64x128xf32, #tpu.memory_space<vmem>>, %arg8: memref<384x128xf32, #tpu.memory_space<vmem>>, %arg9: memref<5888x128xf32, #tpu.memory_space<vmem>>, %arg10: memref<736x16xf32, #tpu.memory_space<vmem>>, %arg11: memref<16x128xf32, #tpu.memory_space<vmem>>, %arg12: memref<1x4x16x128xf32, #tpu.memory_space<vmem>>) attributes {dimension_semantics = [#tpu.dimension_semantics<parallel>], iteration_bounds = array<i64: 2>, scalar_prefetch = 0 : i64, scratch_operands = 0 : i64, tpu.core_type = #tpu.core_type<tc>, window_params = [{transform_indices = @transform_0, window_bounds = array<i64: 1, 8, 64>}, {transform_indices = @transform_1, window_bounds = array<i64: 1, 8, 64>}, {transform_indices = @transform_2, window_bounds = array<i64: 1, 16, 128>}, {pipeline_mode = #tpu.pipeline_mode<synchronous>, transform_indices = @transform_3, window_bounds = array<i64: 16, 8>}, {pipeline_mode = #tpu.pipeline_mode<synchronous>, transform_indices = @transform_4, window_bounds = array<i64: 64, 128>}, {pipeline_mode = #tpu.pipeline_mode<synchronous>, transform_indices = @transform_5, window_bounds = array<i64: 16, 8>}, {pipeline_mode = #tpu.pipeline_mode<synchronous>, transform_indices = @transform_6, window_bounds = array<i64: 64, 128>}, {pipeline_mode = #tpu.pipeline_mode<synchronous>, transform_indices = @transform_7, window_bounds = array<i64: 384, 128>}, {pipeline_mode = #tpu.pipeline_mode<synchronous>, transform_indices = @transform_8, window_bounds = array<i64: 5888, 128>}, {pipeline_mode = #tpu.pipeline_mode<synchronous>, transform_indices = @transform_9, window_bounds = array<i64: 736, 16>}, {pipeline_mode = #tpu.pipeline_mode<synchronous>, transform_indices = @transform_10, window_bounds = array<i64: 16, 128>}, {transform_indices = @transform_11, window_bounds = array<i64: 1, 4, 16, 128>}]} {
    %c0 = arith.constant 0 : index
    %c0_0 = arith.constant 0 : index
    %0 = vector.load %arg4[%c0, %c0_0] : memref<16x8xf32, #tpu.memory_space<vmem>>, vector<16x8xf32>
    %c0_1 = arith.constant 0 : index
    %c0_2 = arith.constant 0 : index
    %c0_3 = arith.constant 0 : index
    %1 = vector.load %arg1[%c0_1, %c0_2, %c0_3] : memref<1x8x64xf32, #tpu.memory_space<vmem>>, vector<1x8x64xf32>
    %2 = vector.shape_cast %1 : vector<1x8x64xf32> to vector<8x64xf32>
    %c0_4 = arith.constant 0 : index
    %c0_5 = arith.constant 0 : index
    %3 = vector.load %arg5[%c0_4, %c0_5] : memref<64x128xf32, #tpu.memory_space<vmem>>, vector<64x128xf32>
    %cst = arith.constant dense<0.000000e+00> : vector<8x128xf32>
    %4 = tpu.matmul %2, %3, %cst {dimension_numbers = #tpu.dot_dimension_numbers<[1], [0], [0], [1], [0, 0, 1, 1], [], []>} : vector<8x64xf32>, vector<64x128xf32>, vector<8x128xf32> -> vector<8x128xf32>
    %cst_6 = arith.constant dense<0.000000e+00> : vector<16x128xf32>
    %5 = tpu.matmul %0, %4, %cst_6 {dimension_numbers = #tpu.dot_dimension_numbers<[1], [0], [0], [1], [0, 0, 1, 1], [], []>} : vector<16x8xf32>, vector<8x128xf32>, vector<16x128xf32> -> vector<16x128xf32>
    %c0_7 = arith.constant 0 : index
    %c0_8 = arith.constant 0 : index
    %6 = vector.load %arg6[%c0_7, %c0_8] : memref<16x8xf32, #tpu.memory_space<vmem>>, vector<16x8xf32>
    %c0_9 = arith.constant 0 : index
    %c0_10 = arith.constant 0 : index
    %c0_11 = arith.constant 0 : index
    %7 = vector.load %arg2[%c0_9, %c0_10, %c0_11] : memref<1x8x64xf32, #tpu.memory_space<vmem>>, vector<1x8x64xf32>
    %8 = vector.shape_cast %7 : vector<1x8x64xf32> to vector<8x64xf32>
    %c0_12 = arith.constant 0 : index
    %c0_13 = arith.constant 0 : index
    %9 = vector.load %arg7[%c0_12, %c0_13] : memref<64x128xf32, #tpu.memory_space<vmem>>, vector<64x128xf32>
    %cst_14 = arith.constant dense<0.000000e+00> : vector<8x128xf32>
    %10 = tpu.matmul %8, %9, %cst_14 {dimension_numbers = #tpu.dot_dimension_numbers<[1], [0], [0], [1], [0, 0, 1, 1], [], []>} : vector<8x64xf32>, vector<64x128xf32>, vector<8x128xf32> -> vector<8x128xf32>
    %cst_15 = arith.constant dense<0.000000e+00> : vector<16x128xf32>
    %11 = tpu.matmul %6, %10, %cst_15 {dimension_numbers = #tpu.dot_dimension_numbers<[1], [0], [0], [1], [0, 0, 1, 1], [], []>} : vector<16x8xf32>, vector<8x128xf32>, vector<16x128xf32> -> vector<16x128xf32>
    %c0_16 = arith.constant 0 : index
    %c0_17 = arith.constant 0 : index
    %c0_18 = arith.constant 0 : index
    %12 = vector.load %arg3[%c0_16, %c0_17, %c0_18] : memref<1x16x128xf32, #tpu.memory_space<vmem>>, vector<1x16x128xf32>
    %13 = vector.shape_cast %12 : vector<1x16x128xf32> to vector<16x128xf32>
    %cst_19 = arith.constant 0.000000e+00 : f32
    %14 = vector.broadcast %cst_19 : f32 to vector<16x128xf32>
    %15 = arith.maximumf %5, %14 : vector<16x128xf32>
    %c0_20 = arith.constant 0 : index
    %c0_21 = arith.constant 0 : index
    %16 = vector.load %arg8[%c0_20, %c0_21] : memref<384x128xf32, #tpu.memory_space<vmem>>, vector<128x128xf32>
    %cst_22 = arith.constant dense<0.000000e+00> : vector<16x128xf32>
    %17 = tpu.matmul %15, %16, %cst_22 {dimension_numbers = #tpu.dot_dimension_numbers<[1], [0], [0], [1], [0, 0, 1, 1], [], []>} : vector<16x128xf32>, vector<128x128xf32>, vector<16x128xf32> -> vector<16x128xf32>
    %c0_23 = arith.constant 0 : index
    %c0_24 = arith.constant 0 : index
    %18 = vector.load %arg11[%c0_23, %c0_24] : memref<16x128xf32, #tpu.memory_space<vmem>>, vector<1x128xf32>
    %19 = vector.broadcast %18 : vector<1x128xf32> to vector<16x128xf32>
    %20 = arith.addf %17, %19 : vector<16x128xf32>
    %cst_25 = arith.constant 0.000000e+00 : f32
    %21 = vector.broadcast %cst_25 : f32 to vector<16x128xf32>
    %22 = arith.maximumf %13, %21 : vector<16x128xf32>
    %c128 = arith.constant 128 : index
    %c0_26 = arith.constant 0 : index
    %23 = vector.load %arg8[%c128, %c0_26] : memref<384x128xf32, #tpu.memory_space<vmem>>, vector<128x128xf32>
    %cst_27 = arith.constant dense<0.000000e+00> : vector<16x128xf32>
    %24 = tpu.matmul %22, %23, %cst_27 {dimension_numbers = #tpu.dot_dimension_numbers<[1], [0], [0], [1], [0, 0, 1, 1], [], []>} : vector<16x128xf32>, vector<128x128xf32>, vector<16x128xf32> -> vector<16x128xf32>
    %cst_28 = arith.constant 0.000000e+00 : f32
    %25 = vector.broadcast %cst_28 : f32 to vector<16x128xf32>
    %26 = arith.maximumf %11, %25 : vector<16x128xf32>
    %c256 = arith.constant 256 : index
    %c0_29 = arith.constant 0 : index
    %27 = vector.load %arg8[%c256, %c0_29] : memref<384x128xf32, #tpu.memory_space<vmem>>, vector<128x128xf32>
    %cst_30 = arith.constant dense<0.000000e+00> : vector<16x128xf32>
    %28 = tpu.matmul %26, %27, %cst_30 {dimension_numbers = #tpu.dot_dimension_numbers<[1], [0], [0], [1], [0, 0, 1, 1], [], []>} : vector<16x128xf32>, vector<128x128xf32>, vector<16x128xf32> -> vector<16x128xf32>
    %29 = arith.addf %24, %28 : vector<16x128xf32>
    %c1 = arith.constant 1 : index
    %c0_31 = arith.constant 0 : index
    %30 = vector.load %arg11[%c1, %c0_31] : memref<16x128xf32, #tpu.memory_space<vmem>>, vector<1x128xf32>
    %31 = vector.broadcast %30 : vector<1x128xf32> to vector<16x128xf32>
    %32 = arith.addf %29, %31 : vector<16x128xf32>
    %cst_32 = arith.constant 0.000000e+00 : f32
    %33 = vector.broadcast %cst_32 : f32 to vector<16x128xf32>
    %34 = arith.maximumf %32, %33 : vector<16x128xf32>
    %c0_33 = arith.constant 0 : index
    %c0_34 = arith.constant 0 : index
    %35 = vector.load %arg10[%c0_33, %c0_34] : memref<736x16xf32, #tpu.memory_space<vmem>>, vector<16x16xf32>
    %c0_35 = arith.constant 0 : index
    %c0_36 = arith.constant 0 : index
    %36 = vector.load %arg9[%c0_35, %c0_36] : memref<5888x128xf32, #tpu.memory_space<vmem>>, vector<128x128xf32>
    %cst_37 = arith.constant dense<0.000000e+00> : vector<16x128xf32>
    %37 = tpu.matmul %35, %34, %cst_37 {dimension_numbers = #tpu.dot_dimension_numbers<[1], [0], [0], [1], [0, 0, 1, 1], [], []>} : vector<16x16xf32>, vector<16x128xf32>, vector<16x128xf32> -> vector<16x128xf32>
    %cst_38 = arith.constant dense<0.000000e+00> : vector<16x128xf32>
    %38 = tpu.matmul %37, %36, %cst_38 {dimension_numbers = #tpu.dot_dimension_numbers<[1], [0], [0], [1], [0, 0, 1, 1], [], []>} : vector<16x128xf32>, vector<128x128xf32>, vector<16x128xf32> -> vector<16x128xf32>
    %c16 = arith.constant 16 : index
    %c0_39 = arith.constant 0 : index
    %39 = vector.load %arg10[%c16, %c0_39] : memref<736x16xf32, #tpu.memory_space<vmem>>, vector<16x16xf32>
    %c128_40 = arith.constant 128 : index
    %c0_41 = arith.constant 0 : index
    %40 = vector.load %arg9[%c128_40, %c0_41] : memref<5888x128xf32, #tpu.memory_space<vmem>>, vector<128x128xf32>
    %cst_42 = arith.constant dense<0.000000e+00> : vector<16x128xf32>
    %41 = tpu.matmul %39, %34, %cst_42 {dimension_numbers = #tpu.dot_dimension_numbers<[1], [0], [0], [1], [0, 0, 1, 1], [], []>} : vector<16x16xf32>, vector<16x128xf32>, vector<16x128xf32> -> vector<16x128xf32>
    %cst_43 = arith.constant dense<0.000000e+00> : vector<16x128xf32>
    %42 = tpu.matmul %41, %40, %cst_43 {dimension_numbers = #tpu.dot_dimension_numbers<[1], [0], [0], [1], [0, 0, 1, 1], [], []>} : vector<16x128xf32>, vector<128x128xf32>, vector<16x128xf32> -> vector<16x128xf32>
    %43 = arith.addf %38, %42 : vector<16x128xf32>
    %c32 = arith.constant 32 : index
    %c0_44 = arith.constant 0 : index
    %44 = vector.load %arg10[%c32, %c0_44] : memref<736x16xf32, #tpu.memory_space<vmem>>, vector<16x16xf32>
    %c256_45 = arith.constant 256 : index
    %c0_46 = arith.constant 0 : index
    %45 = vector.load %arg9[%c256_45, %c0_46] : memref<5888x128xf32, #tpu.memory_space<vmem>>, vector<128x128xf32>
    %cst_47 = arith.constant dense<0.000000e+00> : vector<16x128xf32>
    %46 = tpu.matmul %44, %34, %cst_47 {dimension_numbers = #tpu.dot_dimension_numbers<[1], [0], [0], [1], [0, 0, 1, 1], [], []>} : vector<16x16xf32>, vector<16x128xf32>, vector<16x128xf32> -> vector<16x128xf32>
    %cst_48 = arith.constant dense<0.000000e+00> : vector<16x128xf32>
    %47 = tpu.matmul %46, %45, %cst_48 {dimension_numbers = #tpu.dot_dimension_numbers<[1], [0], [0], [1], [0, 0, 1, 1], [], []>} : vector<16x128xf32>, vector<128x128xf32>, vector<16x128xf32> -> vector<16x128xf32>
    %48 = arith.addf %43, %47 : vector<16x128xf32>
    %c2 = arith.constant 2 : index
    %c0_49 = arith.constant 0 : index
    %49 = vector.load %arg11[%c2, %c0_49] : memref<16x128xf32, #tpu.memory_space<vmem>>, vector<1x128xf32>
    %50 = vector.broadcast %49 : vector<1x128xf32> to vector<16x128xf32>
    %51 = arith.addf %48, %50 : vector<16x128xf32>
    %cst_50 = arith.constant 0.000000e+00 : f32
    %52 = vector.broadcast %cst_50 : f32 to vector<16x128xf32>
    %53 = arith.maximumf %51, %52 : vector<16x128xf32>
    %c48 = arith.constant 48 : index
    %c0_51 = arith.constant 0 : index
    %54 = vector.load %arg10[%c48, %c0_51] : memref<736x16xf32, #tpu.memory_space<vmem>>, vector<16x16xf32>
    %c384 = arith.constant 384 : index
    %c0_52 = arith.constant 0 : index
    %55 = vector.load %arg9[%c384, %c0_52] : memref<5888x128xf32, #tpu.memory_space<vmem>>, vector<128x128xf32>
    %cst_53 = arith.constant dense<0.000000e+00> : vector<16x128xf32>
    %56 = tpu.matmul %54, %53, %cst_53 {dimension_numbers = #tpu.dot_dimension_numbers<[1], [0], [0], [1], [0, 0, 1, 1], [], []>} : vector<16x16xf32>, vector<16x128xf32>, vector<16x128xf32> -> vector<16x128xf32>
    %cst_54 = arith.constant dense<0.000000e+00> : vector<16x128xf32>
    %57 = tpu.matmul %56, %55, %cst_54 {dimension_numbers = #tpu.dot_dimension_numbers<[1], [0], [0], [1], [0, 0, 1, 1], [], []>} : vector<16x128xf32>, vector<128x128xf32>, vector<16x128xf32> -> vector<16x128xf32>
    %c64 = arith.constant 64 : index
    %c0_55 = arith.constant 0 : index
    %58 = vector.load %arg10[%c64, %c0_55] : memref<736x16xf32, #tpu.memory_space<vmem>>, vector<16x16xf32>
    %c512 = arith.constant 512 : index
    %c0_56 = arith.constant 0 : index
    %59 = vector.load %arg9[%c512, %c0_56] : memref<5888x128xf32, #tpu.memory_space<vmem>>, vector<128x128xf32>
    %cst_57 = arith.constant dense<0.000000e+00> : vector<16x128xf32>
    %60 = tpu.matmul %58, %53, %cst_57 {dimension_numbers = #tpu.dot_dimension_numbers<[1], [0], [0], [1], [0, 0, 1, 1], [], []>} : vector<16x16xf32>, vector<16x128xf32>, vector<16x128xf32> -> vector<16x128xf32>
    %cst_58 = arith.constant dense<0.000000e+00> : vector<16x128xf32>
    %61 = tpu.matmul %60, %59, %cst_58 {dimension_numbers = #tpu.dot_dimension_numbers<[1], [0], [0], [1], [0, 0, 1, 1], [], []>} : vector<16x128xf32>, vector<128x128xf32>, vector<16x128xf32> -> vector<16x128xf32>
    %62 = arith.addf %57, %61 : vector<16x128xf32>
    %c80 = arith.constant 80 : index
    %c0_59 = arith.constant 0 : index
    %63 = vector.load %arg10[%c80, %c0_59] : memref<736x16xf32, #tpu.memory_space<vmem>>, vector<16x16xf32>
    %c640 = arith.constant 640 : index
    %c0_60 = arith.constant 0 : index
    %64 = vector.load %arg9[%c640, %c0_60] : memref<5888x128xf32, #tpu.memory_space<vmem>>, vector<128x128xf32>
    %cst_61 = arith.constant dense<0.000000e+00> : vector<16x128xf32>
    %65 = tpu.matmul %63, %53, %cst_61 {dimension_numbers = #tpu.dot_dimension_numbers<[1], [0], [0], [1], [0, 0, 1, 1], [], []>} : vector<16x16xf32>, vector<16x128xf32>, vector<16x128xf32> -> vector<16x128xf32>
    %cst_62 = arith.constant dense<0.000000e+00> : vector<16x128xf32>
    %66 = tpu.matmul %65, %64, %cst_62 {dimension_numbers = #tpu.dot_dimension_numbers<[1], [0], [0], [1], [0, 0, 1, 1], [], []>} : vector<16x128xf32>, vector<128x128xf32>, vector<16x128xf32> -> vector<16x128xf32>
    %67 = arith.addf %62, %66 : vector<16x128xf32>
    %c3 = arith.constant 3 : index
    %c0_63 = arith.constant 0 : index
    %68 = vector.load %arg11[%c3, %c0_63] : memref<16x128xf32, #tpu.memory_space<vmem>>, vector<1x128xf32>
    %69 = vector.broadcast %68 : vector<1x128xf32> to vector<16x128xf32>
    %70 = arith.addf %67, %69 : vector<16x128xf32>
    %cst_64 = arith.constant 0.000000e+00 : f32
    %71 = vector.broadcast %cst_64 : f32 to vector<16x128xf32>
    %72 = arith.maximumf %20, %71 : vector<16x128xf32>
    %c96 = arith.constant 96 : index
    %c0_65 = arith.constant 0 : index
    %73 = vector.load %arg10[%c96, %c0_65] : memref<736x16xf32, #tpu.memory_space<vmem>>, vector<16x16xf32>
    %c768 = arith.constant 768 : index
    %c0_66 = arith.constant 0 : index
    %74 = vector.load %arg9[%c768, %c0_66] : memref<5888x128xf32, #tpu.memory_space<vmem>>, vector<128x128xf32>
    %cst_67 = arith.constant dense<0.000000e+00> : vector<16x128xf32>
    %75 = tpu.matmul %73, %72, %cst_67 {dimension_numbers = #tpu.dot_dimension_numbers<[1], [0], [0], [1], [0, 0, 1, 1], [], []>} : vector<16x16xf32>, vector<16x128xf32>, vector<16x128xf32> -> vector<16x128xf32>
    %cst_68 = arith.constant dense<0.000000e+00> : vector<16x128xf32>
    %76 = tpu.matmul %75, %74, %cst_68 {dimension_numbers = #tpu.dot_dimension_numbers<[1], [0], [0], [1], [0, 0, 1, 1], [], []>} : vector<16x128xf32>, vector<128x128xf32>, vector<16x128xf32> -> vector<16x128xf32>
    %c112 = arith.constant 112 : index
    %c0_69 = arith.constant 0 : index
    %77 = vector.load %arg10[%c112, %c0_69] : memref<736x16xf32, #tpu.memory_space<vmem>>, vector<16x16xf32>
    %c896 = arith.constant 896 : index
    %c0_70 = arith.constant 0 : index
    %78 = vector.load %arg9[%c896, %c0_70] : memref<5888x128xf32, #tpu.memory_space<vmem>>, vector<128x128xf32>
    %cst_71 = arith.constant dense<0.000000e+00> : vector<16x128xf32>
    %79 = tpu.matmul %77, %72, %cst_71 {dimension_numbers = #tpu.dot_dimension_numbers<[1], [0], [0], [1], [0, 0, 1, 1], [], []>} : vector<16x16xf32>, vector<16x128xf32>, vector<16x128xf32> -> vector<16x128xf32>
    %cst_72 = arith.constant dense<0.000000e+00> : vector<16x128xf32>
    %80 = tpu.matmul %79, %78, %cst_72 {dimension_numbers = #tpu.dot_dimension_numbers<[1], [0], [0], [1], [0, 0, 1, 1], [], []>} : vector<16x128xf32>, vector<128x128xf32>, vector<16x128xf32> -> vector<16x128xf32>
    %81 = arith.addf %76, %80 : vector<16x128xf32>
    %c128_73 = arith.constant 128 : index
    %c0_74 = arith.constant 0 : index
    %82 = vector.load %arg10[%c128_73, %c0_74] : memref<736x16xf32, #tpu.memory_space<vmem>>, vector<16x16xf32>
    %c1024 = arith.constant 1024 : index
    %c0_75 = arith.constant 0 : index
    %83 = vector.load %arg9[%c1024, %c0_75] : memref<5888x128xf32, #tpu.memory_space<vmem>>, vector<128x128xf32>
    %cst_76 = arith.constant dense<0.000000e+00> : vector<16x128xf32>
    %84 = tpu.matmul %82, %72, %cst_76 {dimension_numbers = #tpu.dot_dimension_numbers<[1], [0], [0], [1], [0, 0, 1, 1], [], []>} : vector<16x16xf32>, vector<16x128xf32>, vector<16x128xf32> -> vector<16x128xf32>
    %cst_77 = arith.constant dense<0.000000e+00> : vector<16x128xf32>
    %85 = tpu.matmul %84, %83, %cst_77 {dimension_numbers = #tpu.dot_dimension_numbers<[1], [0], [0], [1], [0, 0, 1, 1], [], []>} : vector<16x128xf32>, vector<128x128xf32>, vector<16x128xf32> -> vector<16x128xf32>
    %86 = arith.addf %81, %85 : vector<16x128xf32>
    %c144 = arith.constant 144 : index
    %c0_78 = arith.constant 0 : index
    %87 = vector.load %arg10[%c144, %c0_78] : memref<736x16xf32, #tpu.memory_space<vmem>>, vector<16x16xf32>
    %c1152 = arith.constant 1152 : index
    %c0_79 = arith.constant 0 : index
    %88 = vector.load %arg9[%c1152, %c0_79] : memref<5888x128xf32, #tpu.memory_space<vmem>>, vector<128x128xf32>
    %cst_80 = arith.constant dense<0.000000e+00> : vector<16x128xf32>
    %89 = tpu.matmul %87, %72, %cst_80 {dimension_numbers = #tpu.dot_dimension_numbers<[1], [0], [0], [1], [0, 0, 1, 1], [], []>} : vector<16x16xf32>, vector<16x128xf32>, vector<16x128xf32> -> vector<16x128xf32>
    %cst_81 = arith.constant dense<0.000000e+00> : vector<16x128xf32>
    %90 = tpu.matmul %89, %88, %cst_81 {dimension_numbers = #tpu.dot_dimension_numbers<[1], [0], [0], [1], [0, 0, 1, 1], [], []>} : vector<16x128xf32>, vector<128x128xf32>, vector<16x128xf32> -> vector<16x128xf32>
    %91 = arith.addf %86, %90 : vector<16x128xf32>
    %c160 = arith.constant 160 : index
    %c0_82 = arith.constant 0 : index
    %92 = vector.load %arg10[%c160, %c0_82] : memref<736x16xf32, #tpu.memory_space<vmem>>, vector<16x16xf32>
    %c1280 = arith.constant 1280 : index
    %c0_83 = arith.constant 0 : index
    %93 = vector.load %arg9[%c1280, %c0_83] : memref<5888x128xf32, #tpu.memory_space<vmem>>, vector<128x128xf32>
    %cst_84 = arith.constant dense<0.000000e+00> : vector<16x128xf32>
    %94 = tpu.matmul %92, %72, %cst_84 {dimension_numbers = #tpu.dot_dimension_numbers<[1], [0], [0], [1], [0, 0, 1, 1], [], []>} : vector<16x16xf32>, vector<16x128xf32>, vector<16x128xf32> -> vector<16x128xf32>
    %cst_85 = arith.constant dense<0.000000e+00> : vector<16x128xf32>
    %95 = tpu.matmul %94, %93, %cst_85 {dimension_numbers = #tpu.dot_dimension_numbers<[1], [0], [0], [1], [0, 0, 1, 1], [], []>} : vector<16x128xf32>, vector<128x128xf32>, vector<16x128xf32> -> vector<16x128xf32>
    %96 = arith.addf %91, %95 : vector<16x128xf32>
    %c4 = arith.constant 4 : index
    %c0_86 = arith.constant 0 : index
    %97 = vector.load %arg11[%c4, %c0_86] : memref<16x128xf32, #tpu.memory_space<vmem>>, vector<1x128xf32>
    %98 = vector.broadcast %97 : vector<1x128xf32> to vector<16x128xf32>
    %99 = arith.addf %96, %98 : vector<16x128xf32>
    %cst_87 = arith.constant 0.000000e+00 : f32
    %100 = vector.broadcast %cst_87 : f32 to vector<16x128xf32>
    %101 = arith.maximumf %99, %100 : vector<16x128xf32>
    %c176 = arith.constant 176 : index
    %c0_88 = arith.constant 0 : index
    %102 = vector.load %arg10[%c176, %c0_88] : memref<736x16xf32, #tpu.memory_space<vmem>>, vector<16x16xf32>
    %c1408 = arith.constant 1408 : index
    %c0_89 = arith.constant 0 : index
    %103 = vector.load %arg9[%c1408, %c0_89] : memref<5888x128xf32, #tpu.memory_space<vmem>>, vector<128x128xf32>
    %cst_90 = arith.constant dense<0.000000e+00> : vector<16x128xf32>
    %104 = tpu.matmul %102, %101, %cst_90 {dimension_numbers = #tpu.dot_dimension_numbers<[1], [0], [0], [1], [0, 0, 1, 1], [], []>} : vector<16x16xf32>, vector<16x128xf32>, vector<16x128xf32> -> vector<16x128xf32>
    %cst_91 = arith.constant dense<0.000000e+00> : vector<16x128xf32>
    %105 = tpu.matmul %104, %103, %cst_91 {dimension_numbers = #tpu.dot_dimension_numbers<[1], [0], [0], [1], [0, 0, 1, 1], [], []>} : vector<16x128xf32>, vector<128x128xf32>, vector<16x128xf32> -> vector<16x128xf32>
    %c192 = arith.constant 192 : index
    %c0_92 = arith.constant 0 : index
    %106 = vector.load %arg10[%c192, %c0_92] : memref<736x16xf32, #tpu.memory_space<vmem>>, vector<16x16xf32>
    %c1536 = arith.constant 1536 : index
    %c0_93 = arith.constant 0 : index
    %107 = vector.load %arg9[%c1536, %c0_93] : memref<5888x128xf32, #tpu.memory_space<vmem>>, vector<128x128xf32>
    %cst_94 = arith.constant dense<0.000000e+00> : vector<16x128xf32>
    %108 = tpu.matmul %106, %101, %cst_94 {dimension_numbers = #tpu.dot_dimension_numbers<[1], [0], [0], [1], [0, 0, 1, 1], [], []>} : vector<16x16xf32>, vector<16x128xf32>, vector<16x128xf32> -> vector<16x128xf32>
    %cst_95 = arith.constant dense<0.000000e+00> : vector<16x128xf32>
    %109 = tpu.matmul %108, %107, %cst_95 {dimension_numbers = #tpu.dot_dimension_numbers<[1], [0], [0], [1], [0, 0, 1, 1], [], []>} : vector<16x128xf32>, vector<128x128xf32>, vector<16x128xf32> -> vector<16x128xf32>
    %110 = arith.addf %105, %109 : vector<16x128xf32>
    %c208 = arith.constant 208 : index
    %c0_96 = arith.constant 0 : index
    %111 = vector.load %arg10[%c208, %c0_96] : memref<736x16xf32, #tpu.memory_space<vmem>>, vector<16x16xf32>
    %c1664 = arith.constant 1664 : index
    %c0_97 = arith.constant 0 : index
    %112 = vector.load %arg9[%c1664, %c0_97] : memref<5888x128xf32, #tpu.memory_space<vmem>>, vector<128x128xf32>
    %cst_98 = arith.constant dense<0.000000e+00> : vector<16x128xf32>
    %113 = tpu.matmul %111, %101, %cst_98 {dimension_numbers = #tpu.dot_dimension_numbers<[1], [0], [0], [1], [0, 0, 1, 1], [], []>} : vector<16x16xf32>, vector<16x128xf32>, vector<16x128xf32> -> vector<16x128xf32>
    %cst_99 = arith.constant dense<0.000000e+00> : vector<16x128xf32>
    %114 = tpu.matmul %113, %112, %cst_99 {dimension_numbers = #tpu.dot_dimension_numbers<[1], [0], [0], [1], [0, 0, 1, 1], [], []>} : vector<16x128xf32>, vector<128x128xf32>, vector<16x128xf32> -> vector<16x128xf32>
    %115 = arith.addf %110, %114 : vector<16x128xf32>
    %c224 = arith.constant 224 : index
    %c0_100 = arith.constant 0 : index
    %116 = vector.load %arg10[%c224, %c0_100] : memref<736x16xf32, #tpu.memory_space<vmem>>, vector<16x16xf32>
    %c1792 = arith.constant 1792 : index
    %c0_101 = arith.constant 0 : index
    %117 = vector.load %arg9[%c1792, %c0_101] : memref<5888x128xf32, #tpu.memory_space<vmem>>, vector<128x128xf32>
    %cst_102 = arith.constant dense<0.000000e+00> : vector<16x128xf32>
    %118 = tpu.matmul %116, %101, %cst_102 {dimension_numbers = #tpu.dot_dimension_numbers<[1], [0], [0], [1], [0, 0, 1, 1], [], []>} : vector<16x16xf32>, vector<16x128xf32>, vector<16x128xf32> -> vector<16x128xf32>
    %cst_103 = arith.constant dense<0.000000e+00> : vector<16x128xf32>
    %119 = tpu.matmul %118, %117, %cst_103 {dimension_numbers = #tpu.dot_dimension_numbers<[1], [0], [0], [1], [0, 0, 1, 1], [], []>} : vector<16x128xf32>, vector<128x128xf32>, vector<16x128xf32> -> vector<16x128xf32>
    %120 = arith.addf %115, %119 : vector<16x128xf32>
    %c240 = arith.constant 240 : index
    %c0_104 = arith.constant 0 : index
    %121 = vector.load %arg10[%c240, %c0_104] : memref<736x16xf32, #tpu.memory_space<vmem>>, vector<16x16xf32>
    %c1920 = arith.constant 1920 : index
    %c0_105 = arith.constant 0 : index
    %122 = vector.load %arg9[%c1920, %c0_105] : memref<5888x128xf32, #tpu.memory_space<vmem>>, vector<128x128xf32>
    %cst_106 = arith.constant dense<0.000000e+00> : vector<16x128xf32>
    %123 = tpu.matmul %121, %101, %cst_106 {dimension_numbers = #tpu.dot_dimension_numbers<[1], [0], [0], [1], [0, 0, 1, 1], [], []>} : vector<16x16xf32>, vector<16x128xf32>, vector<16x128xf32> -> vector<16x128xf32>
    %cst_107 = arith.constant dense<0.000000e+00> : vector<16x128xf32>
    %124 = tpu.matmul %123, %122, %cst_107 {dimension_numbers = #tpu.dot_dimension_numbers<[1], [0], [0], [1], [0, 0, 1, 1], [], []>} : vector<16x128xf32>, vector<128x128xf32>, vector<16x128xf32> -> vector<16x128xf32>
    %125 = arith.addf %120, %124 : vector<16x128xf32>
    %c5 = arith.constant 5 : index
    %c0_108 = arith.constant 0 : index
    %126 = vector.load %arg11[%c5, %c0_108] : memref<16x128xf32, #tpu.memory_space<vmem>>, vector<1x128xf32>
    %127 = vector.broadcast %126 : vector<1x128xf32> to vector<16x128xf32>
    %128 = arith.addf %125, %127 : vector<16x128xf32>
    %129 = arith.addf %70, %128 : vector<16x128xf32>
    %cst_109 = arith.constant 0.000000e+00 : f32
    %130 = vector.broadcast %cst_109 : f32 to vector<16x128xf32>
    %131 = arith.maximumf %20, %130 : vector<16x128xf32>
    %c256_110 = arith.constant 256 : index
    %c0_111 = arith.constant 0 : index
    %132 = vector.load %arg10[%c256_110, %c0_111] : memref<736x16xf32, #tpu.memory_space<vmem>>, vector<16x16xf32>
    %c2048 = arith.constant 2048 : index
    %c0_112 = arith.constant 0 : index
    %133 = vector.load %arg9[%c2048, %c0_112] : memref<5888x128xf32, #tpu.memory_space<vmem>>, vector<128x128xf32>
    %cst_113 = arith.constant dense<0.000000e+00> : vector<16x128xf32>
    %134 = tpu.matmul %132, %131, %cst_113 {dimension_numbers = #tpu.dot_dimension_numbers<[1], [0], [0], [1], [0, 0, 1, 1], [], []>} : vector<16x16xf32>, vector<16x128xf32>, vector<16x128xf32> -> vector<16x128xf32>
    %cst_114 = arith.constant dense<0.000000e+00> : vector<16x128xf32>
    %135 = tpu.matmul %134, %133, %cst_114 {dimension_numbers = #tpu.dot_dimension_numbers<[1], [0], [0], [1], [0, 0, 1, 1], [], []>} : vector<16x128xf32>, vector<128x128xf32>, vector<16x128xf32> -> vector<16x128xf32>
    %c272 = arith.constant 272 : index
    %c0_115 = arith.constant 0 : index
    %136 = vector.load %arg10[%c272, %c0_115] : memref<736x16xf32, #tpu.memory_space<vmem>>, vector<16x16xf32>
    %c2176 = arith.constant 2176 : index
    %c0_116 = arith.constant 0 : index
    %137 = vector.load %arg9[%c2176, %c0_116] : memref<5888x128xf32, #tpu.memory_space<vmem>>, vector<128x128xf32>
    %cst_117 = arith.constant dense<0.000000e+00> : vector<16x128xf32>
    %138 = tpu.matmul %136, %131, %cst_117 {dimension_numbers = #tpu.dot_dimension_numbers<[1], [0], [0], [1], [0, 0, 1, 1], [], []>} : vector<16x16xf32>, vector<16x128xf32>, vector<16x128xf32> -> vector<16x128xf32>
    %cst_118 = arith.constant dense<0.000000e+00> : vector<16x128xf32>
    %139 = tpu.matmul %138, %137, %cst_118 {dimension_numbers = #tpu.dot_dimension_numbers<[1], [0], [0], [1], [0, 0, 1, 1], [], []>} : vector<16x128xf32>, vector<128x128xf32>, vector<16x128xf32> -> vector<16x128xf32>
    %140 = arith.addf %135, %139 : vector<16x128xf32>
    %c288 = arith.constant 288 : index
    %c0_119 = arith.constant 0 : index
    %141 = vector.load %arg10[%c288, %c0_119] : memref<736x16xf32, #tpu.memory_space<vmem>>, vector<16x16xf32>
    %c2304 = arith.constant 2304 : index
    %c0_120 = arith.constant 0 : index
    %142 = vector.load %arg9[%c2304, %c0_120] : memref<5888x128xf32, #tpu.memory_space<vmem>>, vector<128x128xf32>
    %cst_121 = arith.constant dense<0.000000e+00> : vector<16x128xf32>
    %143 = tpu.matmul %141, %131, %cst_121 {dimension_numbers = #tpu.dot_dimension_numbers<[1], [0], [0], [1], [0, 0, 1, 1], [], []>} : vector<16x16xf32>, vector<16x128xf32>, vector<16x128xf32> -> vector<16x128xf32>
    %cst_122 = arith.constant dense<0.000000e+00> : vector<16x128xf32>
    %144 = tpu.matmul %143, %142, %cst_122 {dimension_numbers = #tpu.dot_dimension_numbers<[1], [0], [0], [1], [0, 0, 1, 1], [], []>} : vector<16x128xf32>, vector<128x128xf32>, vector<16x128xf32> -> vector<16x128xf32>
    %145 = arith.addf %140, %144 : vector<16x128xf32>
    %c6 = arith.constant 6 : index
    %c0_123 = arith.constant 0 : index
    %146 = vector.load %arg11[%c6, %c0_123] : memref<16x128xf32, #tpu.memory_space<vmem>>, vector<1x128xf32>
    %147 = vector.broadcast %146 : vector<1x128xf32> to vector<16x128xf32>
    %148 = arith.addf %145, %147 : vector<16x128xf32>
    %cst_124 = arith.constant 0.000000e+00 : f32
    %149 = vector.broadcast %cst_124 : f32 to vector<16x128xf32>
    %150 = arith.maximumf %148, %149 : vector<16x128xf32>
    %c304 = arith.constant 304 : index
    %c0_125 = arith.constant 0 : index
    %151 = vector.load %arg10[%c304, %c0_125] : memref<736x16xf32, #tpu.memory_space<vmem>>, vector<16x16xf32>
    %c2432 = arith.constant 2432 : index
    %c0_126 = arith.constant 0 : index
    %152 = vector.load %arg9[%c2432, %c0_126] : memref<5888x128xf32, #tpu.memory_space<vmem>>, vector<128x128xf32>
    %cst_127 = arith.constant dense<0.000000e+00> : vector<16x128xf32>
    %153 = tpu.matmul %151, %150, %cst_127 {dimension_numbers = #tpu.dot_dimension_numbers<[1], [0], [0], [1], [0, 0, 1, 1], [], []>} : vector<16x16xf32>, vector<16x128xf32>, vector<16x128xf32> -> vector<16x128xf32>
    %cst_128 = arith.constant dense<0.000000e+00> : vector<16x128xf32>
    %154 = tpu.matmul %153, %152, %cst_128 {dimension_numbers = #tpu.dot_dimension_numbers<[1], [0], [0], [1], [0, 0, 1, 1], [], []>} : vector<16x128xf32>, vector<128x128xf32>, vector<16x128xf32> -> vector<16x128xf32>
    %c320 = arith.constant 320 : index
    %c0_129 = arith.constant 0 : index
    %155 = vector.load %arg10[%c320, %c0_129] : memref<736x16xf32, #tpu.memory_space<vmem>>, vector<16x16xf32>
    %c2560 = arith.constant 2560 : index
    %c0_130 = arith.constant 0 : index
    %156 = vector.load %arg9[%c2560, %c0_130] : memref<5888x128xf32, #tpu.memory_space<vmem>>, vector<128x128xf32>
    %cst_131 = arith.constant dense<0.000000e+00> : vector<16x128xf32>
    %157 = tpu.matmul %155, %150, %cst_131 {dimension_numbers = #tpu.dot_dimension_numbers<[1], [0], [0], [1], [0, 0, 1, 1], [], []>} : vector<16x16xf32>, vector<16x128xf32>, vector<16x128xf32> -> vector<16x128xf32>
    %cst_132 = arith.constant dense<0.000000e+00> : vector<16x128xf32>
    %158 = tpu.matmul %157, %156, %cst_132 {dimension_numbers = #tpu.dot_dimension_numbers<[1], [0], [0], [1], [0, 0, 1, 1], [], []>} : vector<16x128xf32>, vector<128x128xf32>, vector<16x128xf32> -> vector<16x128xf32>
    %159 = arith.addf %154, %158 : vector<16x128xf32>
    %c336 = arith.constant 336 : index
    %c0_133 = arith.constant 0 : index
    %160 = vector.load %arg10[%c336, %c0_133] : memref<736x16xf32, #tpu.memory_space<vmem>>, vector<16x16xf32>
    %c2688 = arith.constant 2688 : index
    %c0_134 = arith.constant 0 : index
    %161 = vector.load %arg9[%c2688, %c0_134] : memref<5888x128xf32, #tpu.memory_space<vmem>>, vector<128x128xf32>
    %cst_135 = arith.constant dense<0.000000e+00> : vector<16x128xf32>
    %162 = tpu.matmul %160, %150, %cst_135 {dimension_numbers = #tpu.dot_dimension_numbers<[1], [0], [0], [1], [0, 0, 1, 1], [], []>} : vector<16x16xf32>, vector<16x128xf32>, vector<16x128xf32> -> vector<16x128xf32>
    %cst_136 = arith.constant dense<0.000000e+00> : vector<16x128xf32>
    %163 = tpu.matmul %162, %161, %cst_136 {dimension_numbers = #tpu.dot_dimension_numbers<[1], [0], [0], [1], [0, 0, 1, 1], [], []>} : vector<16x128xf32>, vector<128x128xf32>, vector<16x128xf32> -> vector<16x128xf32>
    %164 = arith.addf %159, %163 : vector<16x128xf32>
    %c7 = arith.constant 7 : index
    %c0_137 = arith.constant 0 : index
    %165 = vector.load %arg11[%c7, %c0_137] : memref<16x128xf32, #tpu.memory_space<vmem>>, vector<1x128xf32>
    %166 = vector.broadcast %165 : vector<1x128xf32> to vector<16x128xf32>
    %167 = arith.addf %164, %166 : vector<16x128xf32>
    %cst_138 = arith.constant 0.000000e+00 : f32
    %168 = vector.broadcast %cst_138 : f32 to vector<16x128xf32>
    %169 = arith.maximumf %129, %168 : vector<16x128xf32>
    %c352 = arith.constant 352 : index
    %c0_139 = arith.constant 0 : index
    %170 = vector.load %arg10[%c352, %c0_139] : memref<736x16xf32, #tpu.memory_space<vmem>>, vector<16x16xf32>
    %c2816 = arith.constant 2816 : index
    %c0_140 = arith.constant 0 : index
    %171 = vector.load %arg9[%c2816, %c0_140] : memref<5888x128xf32, #tpu.memory_space<vmem>>, vector<128x128xf32>
    %cst_141 = arith.constant dense<0.000000e+00> : vector<16x128xf32>
    %172 = tpu.matmul %170, %169, %cst_141 {dimension_numbers = #tpu.dot_dimension_numbers<[1], [0], [0], [1], [0, 0, 1, 1], [], []>} : vector<16x16xf32>, vector<16x128xf32>, vector<16x128xf32> -> vector<16x128xf32>
    %cst_142 = arith.constant dense<0.000000e+00> : vector<16x128xf32>
    %173 = tpu.matmul %172, %171, %cst_142 {dimension_numbers = #tpu.dot_dimension_numbers<[1], [0], [0], [1], [0, 0, 1, 1], [], []>} : vector<16x128xf32>, vector<128x128xf32>, vector<16x128xf32> -> vector<16x128xf32>
    %c368 = arith.constant 368 : index
    %c0_143 = arith.constant 0 : index
    %174 = vector.load %arg10[%c368, %c0_143] : memref<736x16xf32, #tpu.memory_space<vmem>>, vector<16x16xf32>
    %c2944 = arith.constant 2944 : index
    %c0_144 = arith.constant 0 : index
    %175 = vector.load %arg9[%c2944, %c0_144] : memref<5888x128xf32, #tpu.memory_space<vmem>>, vector<128x128xf32>
    %cst_145 = arith.constant dense<0.000000e+00> : vector<16x128xf32>
    %176 = tpu.matmul %174, %169, %cst_145 {dimension_numbers = #tpu.dot_dimension_numbers<[1], [0], [0], [1], [0, 0, 1, 1], [], []>} : vector<16x16xf32>, vector<16x128xf32>, vector<16x128xf32> -> vector<16x128xf32>
    %cst_146 = arith.constant dense<0.000000e+00> : vector<16x128xf32>
    %177 = tpu.matmul %176, %175, %cst_146 {dimension_numbers = #tpu.dot_dimension_numbers<[1], [0], [0], [1], [0, 0, 1, 1], [], []>} : vector<16x128xf32>, vector<128x128xf32>, vector<16x128xf32> -> vector<16x128xf32>
    %178 = arith.addf %173, %177 : vector<16x128xf32>
    %c384_147 = arith.constant 384 : index
    %c0_148 = arith.constant 0 : index
    %179 = vector.load %arg10[%c384_147, %c0_148] : memref<736x16xf32, #tpu.memory_space<vmem>>, vector<16x16xf32>
    %c3072 = arith.constant 3072 : index
    %c0_149 = arith.constant 0 : index
    %180 = vector.load %arg9[%c3072, %c0_149] : memref<5888x128xf32, #tpu.memory_space<vmem>>, vector<128x128xf32>
    %cst_150 = arith.constant dense<0.000000e+00> : vector<16x128xf32>
    %181 = tpu.matmul %179, %169, %cst_150 {dimension_numbers = #tpu.dot_dimension_numbers<[1], [0], [0], [1], [0, 0, 1, 1], [], []>} : vector<16x16xf32>, vector<16x128xf32>, vector<16x128xf32> -> vector<16x128xf32>
    %cst_151 = arith.constant dense<0.000000e+00> : vector<16x128xf32>
    %182 = tpu.matmul %181, %180, %cst_151 {dimension_numbers = #tpu.dot_dimension_numbers<[1], [0], [0], [1], [0, 0, 1, 1], [], []>} : vector<16x128xf32>, vector<128x128xf32>, vector<16x128xf32> -> vector<16x128xf32>
    %183 = arith.addf %178, %182 : vector<16x128xf32>
    %c8 = arith.constant 8 : index
    %c0_152 = arith.constant 0 : index
    %184 = vector.load %arg11[%c8, %c0_152] : memref<16x128xf32, #tpu.memory_space<vmem>>, vector<1x128xf32>
    %185 = vector.broadcast %184 : vector<1x128xf32> to vector<16x128xf32>
    %186 = arith.addf %183, %185 : vector<16x128xf32>
    %cst_153 = arith.constant 0.000000e+00 : f32
    %187 = vector.broadcast %cst_153 : f32 to vector<16x128xf32>
    %188 = arith.maximumf %186, %187 : vector<16x128xf32>
    %c400 = arith.constant 400 : index
    %c0_154 = arith.constant 0 : index
    %189 = vector.load %arg10[%c400, %c0_154] : memref<736x16xf32, #tpu.memory_space<vmem>>, vector<16x16xf32>
    %c3200 = arith.constant 3200 : index
    %c0_155 = arith.constant 0 : index
    %190 = vector.load %arg9[%c3200, %c0_155] : memref<5888x128xf32, #tpu.memory_space<vmem>>, vector<128x128xf32>
    %cst_156 = arith.constant dense<0.000000e+00> : vector<16x128xf32>
    %191 = tpu.matmul %189, %188, %cst_156 {dimension_numbers = #tpu.dot_dimension_numbers<[1], [0], [0], [1], [0, 0, 1, 1], [], []>} : vector<16x16xf32>, vector<16x128xf32>, vector<16x128xf32> -> vector<16x128xf32>
    %cst_157 = arith.constant dense<0.000000e+00> : vector<16x128xf32>
    %192 = tpu.matmul %191, %190, %cst_157 {dimension_numbers = #tpu.dot_dimension_numbers<[1], [0], [0], [1], [0, 0, 1, 1], [], []>} : vector<16x128xf32>, vector<128x128xf32>, vector<16x128xf32> -> vector<16x128xf32>
    %c416 = arith.constant 416 : index
    %c0_158 = arith.constant 0 : index
    %193 = vector.load %arg10[%c416, %c0_158] : memref<736x16xf32, #tpu.memory_space<vmem>>, vector<16x16xf32>
    %c3328 = arith.constant 3328 : index
    %c0_159 = arith.constant 0 : index
    %194 = vector.load %arg9[%c3328, %c0_159] : memref<5888x128xf32, #tpu.memory_space<vmem>>, vector<128x128xf32>
    %cst_160 = arith.constant dense<0.000000e+00> : vector<16x128xf32>
    %195 = tpu.matmul %193, %188, %cst_160 {dimension_numbers = #tpu.dot_dimension_numbers<[1], [0], [0], [1], [0, 0, 1, 1], [], []>} : vector<16x16xf32>, vector<16x128xf32>, vector<16x128xf32> -> vector<16x128xf32>
    %cst_161 = arith.constant dense<0.000000e+00> : vector<16x128xf32>
    %196 = tpu.matmul %195, %194, %cst_161 {dimension_numbers = #tpu.dot_dimension_numbers<[1], [0], [0], [1], [0, 0, 1, 1], [], []>} : vector<16x128xf32>, vector<128x128xf32>, vector<16x128xf32> -> vector<16x128xf32>
    %197 = arith.addf %192, %196 : vector<16x128xf32>
    %c432 = arith.constant 432 : index
    %c0_162 = arith.constant 0 : index
    %198 = vector.load %arg10[%c432, %c0_162] : memref<736x16xf32, #tpu.memory_space<vmem>>, vector<16x16xf32>
    %c3456 = arith.constant 3456 : index
    %c0_163 = arith.constant 0 : index
    %199 = vector.load %arg9[%c3456, %c0_163] : memref<5888x128xf32, #tpu.memory_space<vmem>>, vector<128x128xf32>
    %cst_164 = arith.constant dense<0.000000e+00> : vector<16x128xf32>
    %200 = tpu.matmul %198, %188, %cst_164 {dimension_numbers = #tpu.dot_dimension_numbers<[1], [0], [0], [1], [0, 0, 1, 1], [], []>} : vector<16x16xf32>, vector<16x128xf32>, vector<16x128xf32> -> vector<16x128xf32>
    %cst_165 = arith.constant dense<0.000000e+00> : vector<16x128xf32>
    %201 = tpu.matmul %200, %199, %cst_165 {dimension_numbers = #tpu.dot_dimension_numbers<[1], [0], [0], [1], [0, 0, 1, 1], [], []>} : vector<16x128xf32>, vector<128x128xf32>, vector<16x128xf32> -> vector<16x128xf32>
    %202 = arith.addf %197, %201 : vector<16x128xf32>
    %c9 = arith.constant 9 : index
    %c0_166 = arith.constant 0 : index
    %203 = vector.load %arg11[%c9, %c0_166] : memref<16x128xf32, #tpu.memory_space<vmem>>, vector<1x128xf32>
    %204 = vector.broadcast %203 : vector<1x128xf32> to vector<16x128xf32>
    %205 = arith.addf %202, %204 : vector<16x128xf32>
    %206 = arith.addf %167, %205 : vector<16x128xf32>
    %cst_167 = arith.constant 0.000000e+00 : f32
    %207 = vector.broadcast %cst_167 : f32 to vector<16x128xf32>
    %208 = arith.maximumf %206, %207 : vector<16x128xf32>
    %c448 = arith.constant 448 : index
    %c0_168 = arith.constant 0 : index
    %209 = vector.load %arg10[%c448, %c0_168] : memref<736x16xf32, #tpu.memory_space<vmem>>, vector<16x16xf32>
    %c3584 = arith.constant 3584 : index
    %c0_169 = arith.constant 0 : index
    %210 = vector.load %arg9[%c3584, %c0_169] : memref<5888x128xf32, #tpu.memory_space<vmem>>, vector<128x128xf32>
    %cst_170 = arith.constant dense<0.000000e+00> : vector<16x128xf32>
    %211 = tpu.matmul %209, %208, %cst_170 {dimension_numbers = #tpu.dot_dimension_numbers<[1], [0], [0], [1], [0, 0, 1, 1], [], []>} : vector<16x16xf32>, vector<16x128xf32>, vector<16x128xf32> -> vector<16x128xf32>
    %cst_171 = arith.constant dense<0.000000e+00> : vector<16x128xf32>
    %212 = tpu.matmul %211, %210, %cst_171 {dimension_numbers = #tpu.dot_dimension_numbers<[1], [0], [0], [1], [0, 0, 1, 1], [], []>} : vector<16x128xf32>, vector<128x128xf32>, vector<16x128xf32> -> vector<16x128xf32>
    %c464 = arith.constant 464 : index
    %c0_172 = arith.constant 0 : index
    %213 = vector.load %arg10[%c464, %c0_172] : memref<736x16xf32, #tpu.memory_space<vmem>>, vector<16x16xf32>
    %c3712 = arith.constant 3712 : index
    %c0_173 = arith.constant 0 : index
    %214 = vector.load %arg9[%c3712, %c0_173] : memref<5888x128xf32, #tpu.memory_space<vmem>>, vector<128x128xf32>
    %cst_174 = arith.constant dense<0.000000e+00> : vector<16x128xf32>
    %215 = tpu.matmul %213, %208, %cst_174 {dimension_numbers = #tpu.dot_dimension_numbers<[1], [0], [0], [1], [0, 0, 1, 1], [], []>} : vector<16x16xf32>, vector<16x128xf32>, vector<16x128xf32> -> vector<16x128xf32>
    %cst_175 = arith.constant dense<0.000000e+00> : vector<16x128xf32>
    %216 = tpu.matmul %215, %214, %cst_175 {dimension_numbers = #tpu.dot_dimension_numbers<[1], [0], [0], [1], [0, 0, 1, 1], [], []>} : vector<16x128xf32>, vector<128x128xf32>, vector<16x128xf32> -> vector<16x128xf32>
    %217 = arith.addf %212, %216 : vector<16x128xf32>
    %c480 = arith.constant 480 : index
    %c0_176 = arith.constant 0 : index
    %218 = vector.load %arg10[%c480, %c0_176] : memref<736x16xf32, #tpu.memory_space<vmem>>, vector<16x16xf32>
    %c3840 = arith.constant 3840 : index
    %c0_177 = arith.constant 0 : index
    %219 = vector.load %arg9[%c3840, %c0_177] : memref<5888x128xf32, #tpu.memory_space<vmem>>, vector<128x128xf32>
    %cst_178 = arith.constant dense<0.000000e+00> : vector<16x128xf32>
    %220 = tpu.matmul %218, %208, %cst_178 {dimension_numbers = #tpu.dot_dimension_numbers<[1], [0], [0], [1], [0, 0, 1, 1], [], []>} : vector<16x16xf32>, vector<16x128xf32>, vector<16x128xf32> -> vector<16x128xf32>
    %cst_179 = arith.constant dense<0.000000e+00> : vector<16x128xf32>
    %221 = tpu.matmul %220, %219, %cst_179 {dimension_numbers = #tpu.dot_dimension_numbers<[1], [0], [0], [1], [0, 0, 1, 1], [], []>} : vector<16x128xf32>, vector<128x128xf32>, vector<16x128xf32> -> vector<16x128xf32>
    %222 = arith.addf %217, %221 : vector<16x128xf32>
    %c10 = arith.constant 10 : index
    %c0_180 = arith.constant 0 : index
    %223 = vector.load %arg11[%c10, %c0_180] : memref<16x128xf32, #tpu.memory_space<vmem>>, vector<1x128xf32>
    %224 = vector.broadcast %223 : vector<1x128xf32> to vector<16x128xf32>
    %225 = arith.addf %222, %224 : vector<16x128xf32>
    %cst_181 = arith.constant 0.000000e+00 : f32
    %226 = vector.broadcast %cst_181 : f32 to vector<16x128xf32>
    %227 = arith.maximumf %225, %226 : vector<16x128xf32>
    %c496 = arith.constant 496 : index
    %c0_182 = arith.constant 0 : index
    %228 = vector.load %arg10[%c496, %c0_182] : memref<736x16xf32, #tpu.memory_space<vmem>>, vector<16x16xf32>
    %c3968 = arith.constant 3968 : index
    %c0_183 = arith.constant 0 : index
    %229 = vector.load %arg9[%c3968, %c0_183] : memref<5888x128xf32, #tpu.memory_space<vmem>>, vector<128x128xf32>
    %cst_184 = arith.constant dense<0.000000e+00> : vector<16x128xf32>
    %230 = tpu.matmul %228, %227, %cst_184 {dimension_numbers = #tpu.dot_dimension_numbers<[1], [0], [0], [1], [0, 0, 1, 1], [], []>} : vector<16x16xf32>, vector<16x128xf32>, vector<16x128xf32> -> vector<16x128xf32>
    %cst_185 = arith.constant dense<0.000000e+00> : vector<16x128xf32>
    %231 = tpu.matmul %230, %229, %cst_185 {dimension_numbers = #tpu.dot_dimension_numbers<[1], [0], [0], [1], [0, 0, 1, 1], [], []>} : vector<16x128xf32>, vector<128x128xf32>, vector<16x128xf32> -> vector<16x128xf32>
    %c512_186 = arith.constant 512 : index
    %c0_187 = arith.constant 0 : index
    %232 = vector.load %arg10[%c512_186, %c0_187] : memref<736x16xf32, #tpu.memory_space<vmem>>, vector<16x16xf32>
    %c4096 = arith.constant 4096 : index
    %c0_188 = arith.constant 0 : index
    %233 = vector.load %arg9[%c4096, %c0_188] : memref<5888x128xf32, #tpu.memory_space<vmem>>, vector<128x128xf32>
    %cst_189 = arith.constant dense<0.000000e+00> : vector<16x128xf32>
    %234 = tpu.matmul %232, %227, %cst_189 {dimension_numbers = #tpu.dot_dimension_numbers<[1], [0], [0], [1], [0, 0, 1, 1], [], []>} : vector<16x16xf32>, vector<16x128xf32>, vector<16x128xf32> -> vector<16x128xf32>
    %cst_190 = arith.constant dense<0.000000e+00> : vector<16x128xf32>
    %235 = tpu.matmul %234, %233, %cst_190 {dimension_numbers = #tpu.dot_dimension_numbers<[1], [0], [0], [1], [0, 0, 1, 1], [], []>} : vector<16x128xf32>, vector<128x128xf32>, vector<16x128xf32> -> vector<16x128xf32>
    %236 = arith.addf %231, %235 : vector<16x128xf32>
    %c528 = arith.constant 528 : index
    %c0_191 = arith.constant 0 : index
    %237 = vector.load %arg10[%c528, %c0_191] : memref<736x16xf32, #tpu.memory_space<vmem>>, vector<16x16xf32>
    %c4224 = arith.constant 4224 : index
    %c0_192 = arith.constant 0 : index
    %238 = vector.load %arg9[%c4224, %c0_192] : memref<5888x128xf32, #tpu.memory_space<vmem>>, vector<128x128xf32>
    %cst_193 = arith.constant dense<0.000000e+00> : vector<16x128xf32>
    %239 = tpu.matmul %237, %227, %cst_193 {dimension_numbers = #tpu.dot_dimension_numbers<[1], [0], [0], [1], [0, 0, 1, 1], [], []>} : vector<16x16xf32>, vector<16x128xf32>, vector<16x128xf32> -> vector<16x128xf32>
    %cst_194 = arith.constant dense<0.000000e+00> : vector<16x128xf32>
    %240 = tpu.matmul %239, %238, %cst_194 {dimension_numbers = #tpu.dot_dimension_numbers<[1], [0], [0], [1], [0, 0, 1, 1], [], []>} : vector<16x128xf32>, vector<128x128xf32>, vector<16x128xf32> -> vector<16x128xf32>
    %241 = arith.addf %236, %240 : vector<16x128xf32>
    %c11 = arith.constant 11 : index
    %c0_195 = arith.constant 0 : index
    %242 = vector.load %arg11[%c11, %c0_195] : memref<16x128xf32, #tpu.memory_space<vmem>>, vector<1x128xf32>
    %243 = vector.broadcast %242 : vector<1x128xf32> to vector<16x128xf32>
    %244 = arith.addf %241, %243 : vector<16x128xf32>
    %cst_196 = arith.constant 0.000000e+00 : f32
    %245 = vector.broadcast %cst_196 : f32 to vector<16x128xf32>
    %246 = arith.maximumf %32, %245 : vector<16x128xf32>
    %c544 = arith.constant 544 : index
    %c0_197 = arith.constant 0 : index
    %247 = vector.load %arg10[%c544, %c0_197] : memref<736x16xf32, #tpu.memory_space<vmem>>, vector<16x16xf32>
    %c4352 = arith.constant 4352 : index
    %c0_198 = arith.constant 0 : index
    %248 = vector.load %arg9[%c4352, %c0_198] : memref<5888x128xf32, #tpu.memory_space<vmem>>, vector<128x128xf32>
    %cst_199 = arith.constant dense<0.000000e+00> : vector<16x128xf32>
    %249 = tpu.matmul %247, %246, %cst_199 {dimension_numbers = #tpu.dot_dimension_numbers<[1], [0], [0], [1], [0, 0, 1, 1], [], []>} : vector<16x16xf32>, vector<16x128xf32>, vector<16x128xf32> -> vector<16x128xf32>
    %cst_200 = arith.constant dense<0.000000e+00> : vector<16x128xf32>
    %250 = tpu.matmul %249, %248, %cst_200 {dimension_numbers = #tpu.dot_dimension_numbers<[1], [0], [0], [1], [0, 0, 1, 1], [], []>} : vector<16x128xf32>, vector<128x128xf32>, vector<16x128xf32> -> vector<16x128xf32>
    %c560 = arith.constant 560 : index
    %c0_201 = arith.constant 0 : index
    %251 = vector.load %arg10[%c560, %c0_201] : memref<736x16xf32, #tpu.memory_space<vmem>>, vector<16x16xf32>
    %c4480 = arith.constant 4480 : index
    %c0_202 = arith.constant 0 : index
    %252 = vector.load %arg9[%c4480, %c0_202] : memref<5888x128xf32, #tpu.memory_space<vmem>>, vector<128x128xf32>
    %cst_203 = arith.constant dense<0.000000e+00> : vector<16x128xf32>
    %253 = tpu.matmul %251, %246, %cst_203 {dimension_numbers = #tpu.dot_dimension_numbers<[1], [0], [0], [1], [0, 0, 1, 1], [], []>} : vector<16x16xf32>, vector<16x128xf32>, vector<16x128xf32> -> vector<16x128xf32>
    %cst_204 = arith.constant dense<0.000000e+00> : vector<16x128xf32>
    %254 = tpu.matmul %253, %252, %cst_204 {dimension_numbers = #tpu.dot_dimension_numbers<[1], [0], [0], [1], [0, 0, 1, 1], [], []>} : vector<16x128xf32>, vector<128x128xf32>, vector<16x128xf32> -> vector<16x128xf32>
    %255 = arith.addf %250, %254 : vector<16x128xf32>
    %c576 = arith.constant 576 : index
    %c0_205 = arith.constant 0 : index
    %256 = vector.load %arg10[%c576, %c0_205] : memref<736x16xf32, #tpu.memory_space<vmem>>, vector<16x16xf32>
    %c4608 = arith.constant 4608 : index
    %c0_206 = arith.constant 0 : index
    %257 = vector.load %arg9[%c4608, %c0_206] : memref<5888x128xf32, #tpu.memory_space<vmem>>, vector<128x128xf32>
    %cst_207 = arith.constant dense<0.000000e+00> : vector<16x128xf32>
    %258 = tpu.matmul %256, %246, %cst_207 {dimension_numbers = #tpu.dot_dimension_numbers<[1], [0], [0], [1], [0, 0, 1, 1], [], []>} : vector<16x16xf32>, vector<16x128xf32>, vector<16x128xf32> -> vector<16x128xf32>
    %cst_208 = arith.constant dense<0.000000e+00> : vector<16x128xf32>
    %259 = tpu.matmul %258, %257, %cst_208 {dimension_numbers = #tpu.dot_dimension_numbers<[1], [0], [0], [1], [0, 0, 1, 1], [], []>} : vector<16x128xf32>, vector<128x128xf32>, vector<16x128xf32> -> vector<16x128xf32>
    %260 = arith.addf %255, %259 : vector<16x128xf32>
    %c12 = arith.constant 12 : index
    %c0_209 = arith.constant 0 : index
    %261 = vector.load %arg11[%c12, %c0_209] : memref<16x128xf32, #tpu.memory_space<vmem>>, vector<1x128xf32>
    %262 = vector.broadcast %261 : vector<1x128xf32> to vector<16x128xf32>
    %263 = arith.addf %260, %262 : vector<16x128xf32>
    %264 = arith.addf %244, %263 : vector<16x128xf32>
    %cst_210 = arith.constant 0.000000e+00 : f32
    %265 = vector.broadcast %cst_210 : f32 to vector<16x128xf32>
    %266 = arith.maximumf %129, %265 : vector<16x128xf32>
    %c592 = arith.constant 592 : index
    %c0_211 = arith.constant 0 : index
    %267 = vector.load %arg10[%c592, %c0_211] : memref<736x16xf32, #tpu.memory_space<vmem>>, vector<16x16xf32>
    %c4736 = arith.constant 4736 : index
    %c0_212 = arith.constant 0 : index
    %268 = vector.load %arg9[%c4736, %c0_212] : memref<5888x128xf32, #tpu.memory_space<vmem>>, vector<128x128xf32>
    %cst_213 = arith.constant dense<0.000000e+00> : vector<16x128xf32>
    %269 = tpu.matmul %267, %266, %cst_213 {dimension_numbers = #tpu.dot_dimension_numbers<[1], [0], [0], [1], [0, 0, 1, 1], [], []>} : vector<16x16xf32>, vector<16x128xf32>, vector<16x128xf32> -> vector<16x128xf32>
    %cst_214 = arith.constant dense<0.000000e+00> : vector<16x128xf32>
    %270 = tpu.matmul %269, %268, %cst_214 {dimension_numbers = #tpu.dot_dimension_numbers<[1], [0], [0], [1], [0, 0, 1, 1], [], []>} : vector<16x128xf32>, vector<128x128xf32>, vector<16x128xf32> -> vector<16x128xf32>
    %c608 = arith.constant 608 : index
    %c0_215 = arith.constant 0 : index
    %271 = vector.load %arg10[%c608, %c0_215] : memref<736x16xf32, #tpu.memory_space<vmem>>, vector<16x16xf32>
    %c4864 = arith.constant 4864 : index
    %c0_216 = arith.constant 0 : index
    %272 = vector.load %arg9[%c4864, %c0_216] : memref<5888x128xf32, #tpu.memory_space<vmem>>, vector<128x128xf32>
    %cst_217 = arith.constant dense<0.000000e+00> : vector<16x128xf32>
    %273 = tpu.matmul %271, %266, %cst_217 {dimension_numbers = #tpu.dot_dimension_numbers<[1], [0], [0], [1], [0, 0, 1, 1], [], []>} : vector<16x16xf32>, vector<16x128xf32>, vector<16x128xf32> -> vector<16x128xf32>
    %cst_218 = arith.constant dense<0.000000e+00> : vector<16x128xf32>
    %274 = tpu.matmul %273, %272, %cst_218 {dimension_numbers = #tpu.dot_dimension_numbers<[1], [0], [0], [1], [0, 0, 1, 1], [], []>} : vector<16x128xf32>, vector<128x128xf32>, vector<16x128xf32> -> vector<16x128xf32>
    %275 = arith.addf %270, %274 : vector<16x128xf32>
    %c624 = arith.constant 624 : index
    %c0_219 = arith.constant 0 : index
    %276 = vector.load %arg10[%c624, %c0_219] : memref<736x16xf32, #tpu.memory_space<vmem>>, vector<16x16xf32>
    %c4992 = arith.constant 4992 : index
    %c0_220 = arith.constant 0 : index
    %277 = vector.load %arg9[%c4992, %c0_220] : memref<5888x128xf32, #tpu.memory_space<vmem>>, vector<128x128xf32>
    %cst_221 = arith.constant dense<0.000000e+00> : vector<16x128xf32>
    %278 = tpu.matmul %276, %266, %cst_221 {dimension_numbers = #tpu.dot_dimension_numbers<[1], [0], [0], [1], [0, 0, 1, 1], [], []>} : vector<16x16xf32>, vector<16x128xf32>, vector<16x128xf32> -> vector<16x128xf32>
    %cst_222 = arith.constant dense<0.000000e+00> : vector<16x128xf32>
    %279 = tpu.matmul %278, %277, %cst_222 {dimension_numbers = #tpu.dot_dimension_numbers<[1], [0], [0], [1], [0, 0, 1, 1], [], []>} : vector<16x128xf32>, vector<128x128xf32>, vector<16x128xf32> -> vector<16x128xf32>
    %280 = arith.addf %275, %279 : vector<16x128xf32>
    %c13 = arith.constant 13 : index
    %c0_223 = arith.constant 0 : index
    %281 = vector.load %arg11[%c13, %c0_223] : memref<16x128xf32, #tpu.memory_space<vmem>>, vector<1x128xf32>
    %282 = vector.broadcast %281 : vector<1x128xf32> to vector<16x128xf32>
    %283 = arith.addf %280, %282 : vector<16x128xf32>
    %cst_224 = arith.constant 0.000000e+00 : f32
    %284 = vector.broadcast %cst_224 : f32 to vector<16x128xf32>
    %285 = arith.maximumf %283, %284 : vector<16x128xf32>
    %c640_225 = arith.constant 640 : index
    %c0_226 = arith.constant 0 : index
    %286 = vector.load %arg10[%c640_225, %c0_226] : memref<736x16xf32, #tpu.memory_space<vmem>>, vector<16x16xf32>
    %c5120 = arith.constant 5120 : index
    %c0_227 = arith.constant 0 : index
    %287 = vector.load %arg9[%c5120, %c0_227] : memref<5888x128xf32, #tpu.memory_space<vmem>>, vector<128x128xf32>
    %cst_228 = arith.constant dense<0.000000e+00> : vector<16x128xf32>
    %288 = tpu.matmul %286, %285, %cst_228 {dimension_numbers = #tpu.dot_dimension_numbers<[1], [0], [0], [1], [0, 0, 1, 1], [], []>} : vector<16x16xf32>, vector<16x128xf32>, vector<16x128xf32> -> vector<16x128xf32>
    %cst_229 = arith.constant dense<0.000000e+00> : vector<16x128xf32>
    %289 = tpu.matmul %288, %287, %cst_229 {dimension_numbers = #tpu.dot_dimension_numbers<[1], [0], [0], [1], [0, 0, 1, 1], [], []>} : vector<16x128xf32>, vector<128x128xf32>, vector<16x128xf32> -> vector<16x128xf32>
    %c656 = arith.constant 656 : index
    %c0_230 = arith.constant 0 : index
    %290 = vector.load %arg10[%c656, %c0_230] : memref<736x16xf32, #tpu.memory_space<vmem>>, vector<16x16xf32>
    %c5248 = arith.constant 5248 : index
    %c0_231 = arith.constant 0 : index
    %291 = vector.load %arg9[%c5248, %c0_231] : memref<5888x128xf32, #tpu.memory_space<vmem>>, vector<128x128xf32>
    %cst_232 = arith.constant dense<0.000000e+00> : vector<16x128xf32>
    %292 = tpu.matmul %290, %285, %cst_232 {dimension_numbers = #tpu.dot_dimension_numbers<[1], [0], [0], [1], [0, 0, 1, 1], [], []>} : vector<16x16xf32>, vector<16x128xf32>, vector<16x128xf32> -> vector<16x128xf32>
    %cst_233 = arith.constant dense<0.000000e+00> : vector<16x128xf32>
    %293 = tpu.matmul %292, %291, %cst_233 {dimension_numbers = #tpu.dot_dimension_numbers<[1], [0], [0], [1], [0, 0, 1, 1], [], []>} : vector<16x128xf32>, vector<128x128xf32>, vector<16x128xf32> -> vector<16x128xf32>
    %294 = arith.addf %289, %293 : vector<16x128xf32>
    %c672 = arith.constant 672 : index
    %c0_234 = arith.constant 0 : index
    %295 = vector.load %arg10[%c672, %c0_234] : memref<736x16xf32, #tpu.memory_space<vmem>>, vector<16x16xf32>
    %c5376 = arith.constant 5376 : index
    %c0_235 = arith.constant 0 : index
    %296 = vector.load %arg9[%c5376, %c0_235] : memref<5888x128xf32, #tpu.memory_space<vmem>>, vector<128x128xf32>
    %cst_236 = arith.constant dense<0.000000e+00> : vector<16x128xf32>
    %297 = tpu.matmul %295, %285, %cst_236 {dimension_numbers = #tpu.dot_dimension_numbers<[1], [0], [0], [1], [0, 0, 1, 1], [], []>} : vector<16x16xf32>, vector<16x128xf32>, vector<16x128xf32> -> vector<16x128xf32>
    %cst_237 = arith.constant dense<0.000000e+00> : vector<16x128xf32>
    %298 = tpu.matmul %297, %296, %cst_237 {dimension_numbers = #tpu.dot_dimension_numbers<[1], [0], [0], [1], [0, 0, 1, 1], [], []>} : vector<16x128xf32>, vector<128x128xf32>, vector<16x128xf32> -> vector<16x128xf32>
    %299 = arith.addf %294, %298 : vector<16x128xf32>
    %c14 = arith.constant 14 : index
    %c0_238 = arith.constant 0 : index
    %300 = vector.load %arg11[%c14, %c0_238] : memref<16x128xf32, #tpu.memory_space<vmem>>, vector<1x128xf32>
    %301 = vector.broadcast %300 : vector<1x128xf32> to vector<16x128xf32>
    %302 = arith.addf %299, %301 : vector<16x128xf32>
    %cst_239 = arith.constant 0.000000e+00 : f32
    %303 = vector.broadcast %cst_239 : f32 to vector<16x128xf32>
    %304 = arith.maximumf %206, %303 : vector<16x128xf32>
    %c688 = arith.constant 688 : index
    %c0_240 = arith.constant 0 : index
    %305 = vector.load %arg10[%c688, %c0_240] : memref<736x16xf32, #tpu.memory_space<vmem>>, vector<16x16xf32>
    %c5504 = arith.constant 5504 : index
    %c0_241 = arith.constant 0 : index
    %306 = vector.load %arg9[%c5504, %c0_241] : memref<5888x128xf32, #tpu.memory_space<vmem>>, vector<128x128xf32>
    %cst_242 = arith.constant dense<0.000000e+00> : vector<16x128xf32>
    %307 = tpu.matmul %305, %304, %cst_242 {dimension_numbers = #tpu.dot_dimension_numbers<[1], [0], [0], [1], [0, 0, 1, 1], [], []>} : vector<16x16xf32>, vector<16x128xf32>, vector<16x128xf32> -> vector<16x128xf32>
    %cst_243 = arith.constant dense<0.000000e+00> : vector<16x128xf32>
    %308 = tpu.matmul %307, %306, %cst_243 {dimension_numbers = #tpu.dot_dimension_numbers<[1], [0], [0], [1], [0, 0, 1, 1], [], []>} : vector<16x128xf32>, vector<128x128xf32>, vector<16x128xf32> -> vector<16x128xf32>
    %c704 = arith.constant 704 : index
    %c0_244 = arith.constant 0 : index
    %309 = vector.load %arg10[%c704, %c0_244] : memref<736x16xf32, #tpu.memory_space<vmem>>, vector<16x16xf32>
    %c5632 = arith.constant 5632 : index
    %c0_245 = arith.constant 0 : index
    %310 = vector.load %arg9[%c5632, %c0_245] : memref<5888x128xf32, #tpu.memory_space<vmem>>, vector<128x128xf32>
    %cst_246 = arith.constant dense<0.000000e+00> : vector<16x128xf32>
    %311 = tpu.matmul %309, %304, %cst_246 {dimension_numbers = #tpu.dot_dimension_numbers<[1], [0], [0], [1], [0, 0, 1, 1], [], []>} : vector<16x16xf32>, vector<16x128xf32>, vector<16x128xf32> -> vector<16x128xf32>
    %cst_247 = arith.constant dense<0.000000e+00> : vector<16x128xf32>
    %312 = tpu.matmul %311, %310, %cst_247 {dimension_numbers = #tpu.dot_dimension_numbers<[1], [0], [0], [1], [0, 0, 1, 1], [], []>} : vector<16x128xf32>, vector<128x128xf32>, vector<16x128xf32> -> vector<16x128xf32>
    %313 = arith.addf %308, %312 : vector<16x128xf32>
    %c720 = arith.constant 720 : index
    %c0_248 = arith.constant 0 : index
    %314 = vector.load %arg10[%c720, %c0_248] : memref<736x16xf32, #tpu.memory_space<vmem>>, vector<16x16xf32>
    %c5760 = arith.constant 5760 : index
    %c0_249 = arith.constant 0 : index
    %315 = vector.load %arg9[%c5760, %c0_249] : memref<5888x128xf32, #tpu.memory_space<vmem>>, vector<128x128xf32>
    %cst_250 = arith.constant dense<0.000000e+00> : vector<16x128xf32>
    %316 = tpu.matmul %314, %304, %cst_250 {dimension_numbers = #tpu.dot_dimension_numbers<[1], [0], [0], [1], [0, 0, 1, 1], [], []>} : vector<16x16xf32>, vector<16x128xf32>, vector<16x128xf32> -> vector<16x128xf32>
    %cst_251 = arith.constant dense<0.000000e+00> : vector<16x128xf32>
    %317 = tpu.matmul %316, %315, %cst_251 {dimension_numbers = #tpu.dot_dimension_numbers<[1], [0], [0], [1], [0, 0, 1, 1], [], []>} : vector<16x128xf32>, vector<128x128xf32>, vector<16x128xf32> -> vector<16x128xf32>
    %318 = arith.addf %313, %317 : vector<16x128xf32>
    %c15 = arith.constant 15 : index
    %c0_252 = arith.constant 0 : index
    %319 = vector.load %arg11[%c15, %c0_252] : memref<16x128xf32, #tpu.memory_space<vmem>>, vector<1x128xf32>
    %320 = vector.broadcast %319 : vector<1x128xf32> to vector<16x128xf32>
    %321 = arith.addf %318, %320 : vector<16x128xf32>
    %322 = arith.addf %302, %321 : vector<16x128xf32>
    %c0_253 = arith.constant 0 : index
    %c0_254 = arith.constant 0 : index
    %c0_255 = arith.constant 0 : index
    %c0_256 = arith.constant 0 : index
    %323 = vector.load %arg12[%c0_253, %c0_254, %c0_255, %c0_256] : memref<1x4x16x128xf32, #tpu.memory_space<vmem>>, vector<1x1x16x128xf32>
    %324 = vector.shape_cast %323 : vector<1x1x16x128xf32> to vector<16x128xf32>
    %325 = vector.shape_cast %129 : vector<16x128xf32> to vector<1x1x16x128xf32>
    tpu.vector_store %arg12[%c0_253, %c0_254, %c0_255, %c0_256], %325 {strides = array<i32>} : memref<1x4x16x128xf32, #tpu.memory_space<vmem>>, vector<1x1x16x128xf32>,
    %c0_257 = arith.constant 0 : index
    %c1_258 = arith.constant 1 : index
    %c0_259 = arith.constant 0 : index
    %c0_260 = arith.constant 0 : index
    %326 = vector.load %arg12[%c0_257, %c1_258, %c0_259, %c0_260] : memref<1x4x16x128xf32, #tpu.memory_space<vmem>>, vector<1x1x16x128xf32>
    %327 = vector.shape_cast %326 : vector<1x1x16x128xf32> to vector<16x128xf32>
    %328 = vector.shape_cast %206 : vector<16x128xf32> to vector<1x1x16x128xf32>
    tpu.vector_store %arg12[%c0_257, %c1_258, %c0_259, %c0_260], %328 {strides = array<i32>} : memref<1x4x16x128xf32, #tpu.memory_space<vmem>>, vector<1x1x16x128xf32>,
    %c0_261 = arith.constant 0 : index
    %c2_262 = arith.constant 2 : index
    %c0_263 = arith.constant 0 : index
    %c0_264 = arith.constant 0 : index
    %329 = vector.load %arg12[%c0_261, %c2_262, %c0_263, %c0_264] : memref<1x4x16x128xf32, #tpu.memory_space<vmem>>, vector<1x1x16x128xf32>
    %330 = vector.shape_cast %329 : vector<1x1x16x128xf32> to vector<16x128xf32>
    %331 = vector.shape_cast %264 : vector<16x128xf32> to vector<1x1x16x128xf32>
    tpu.vector_store %arg12[%c0_261, %c2_262, %c0_263, %c0_264], %331 {strides = array<i32>} : memref<1x4x16x128xf32, #tpu.memory_space<vmem>>, vector<1x1x16x128xf32>,
    %c0_265 = arith.constant 0 : index
    %c3_266 = arith.constant 3 : index
    %c0_267 = arith.constant 0 : index
    %c0_268 = arith.constant 0 : index
    %332 = vector.load %arg12[%c0_265, %c3_266, %c0_267, %c0_268] : memref<1x4x16x128xf32, #tpu.memory_space<vmem>>, vector<1x1x16x128xf32>
    %333 = vector.shape_cast %332 : vector<1x1x16x128xf32> to vector<16x128xf32>
    %334 = vector.shape_cast %322 : vector<16x128xf32> to vector<1x1x16x128xf32>
    tpu.vector_store %arg12[%c0_265, %c3_266, %c0_267, %c0_268], %334 {strides = array<i32>} : memref<1x4x16x128xf32, #tpu.memory_space<vmem>>, vector<1x1x16x128xf32>,
    return
  }
  func.func @transform_0(%arg0: i32) -> (i32, i32, i32) {
    %c0_i32 = arith.constant 0 : i32
    %c0_i32_0 = arith.constant 0 : i32
    %c0_i32_1 = arith.constant 0 : i32
    return %arg0, %c0_i32, %c0_i32_0 : i32, i32, i32
  }
  func.func @transform_1(%arg0: i32) -> (i32, i32, i32) {
    %c0_i32 = arith.constant 0 : i32
    %c0_i32_0 = arith.constant 0 : i32
    %c0_i32_1 = arith.constant 0 : i32
    return %arg0, %c0_i32, %c0_i32_0 : i32, i32, i32
  }
  func.func @transform_2(%arg0: i32) -> (i32, i32, i32) {
    %c0_i32 = arith.constant 0 : i32
    %c0_i32_0 = arith.constant 0 : i32
    %c0_i32_1 = arith.constant 0 : i32
    return %arg0, %c0_i32, %c0_i32_0 : i32, i32, i32
  }
  func.func @transform_3(%arg0: i32) -> (i32, i32) {
    %c0_i32 = arith.constant 0 : i32
    %c0_i32_0 = arith.constant 0 : i32
    %c0_i32_1 = arith.constant 0 : i32
    return %c0_i32, %c0_i32_0 : i32, i32
  }
  func.func @transform_4(%arg0: i32) -> (i32, i32) {
    %c0_i32 = arith.constant 0 : i32
    %c0_i32_0 = arith.constant 0 : i32
    %c0_i32_1 = arith.constant 0 : i32
    return %c0_i32, %c0_i32_0 : i32, i32
  }
  func.func @transform_5(%arg0: i32) -> (i32, i32) {
    %c0_i32 = arith.constant 0 : i32
    %c0_i32_0 = arith.constant 0 : i32
    %c0_i32_1 = arith.constant 0 : i32
    return %c0_i32, %c0_i32_0 : i32, i32
  }
  func.func @transform_6(%arg0: i32) -> (i32, i32) {
    %c0_i32 = arith.constant 0 : i32
    %c0_i32_0 = arith.constant 0 : i32
    %c0_i32_1 = arith.constant 0 : i32
    return %c0_i32, %c0_i32_0 : i32, i32
  }
  func.func @transform_7(%arg0: i32) -> (i32, i32) {
    %c0_i32 = arith.constant 0 : i32
    %c0_i32_0 = arith.constant 0 : i32
    %c0_i32_1 = arith.constant 0 : i32
    return %c0_i32, %c0_i32_0 : i32, i32
  }
  func.func @transform_8(%arg0: i32) -> (i32, i32) {
    %c0_i32 = arith.constant 0 : i32
    %c0_i32_0 = arith.constant 0 : i32
    %c0_i32_1 = arith.constant 0 : i32
    return %c0_i32, %c0_i32_0 : i32, i32
  }
  func.func @transform_9(%arg0: i32) -> (i32, i32) {
    %c0_i32 = arith.constant 0 : i32
    %c0_i32_0 = arith.constant 0 : i32
    %c0_i32_1 = arith.constant 0 : i32
    return %c0_i32, %c0_i32_0 : i32, i32
  }
  func.func @transform_10(%arg0: i32) -> (i32, i32) {
    %c0_i32 = arith.constant 0 : i32
    %c0_i32_0 = arith.constant 0 : i32
    %c0_i32_1 = arith.constant 0 : i32
    return %c0_i32, %c0_i32_0 : i32, i32
  }
  func.func @transform_11(%arg0: i32) -> (i32, i32, i32, i32) {
    %c0_i32 = arith.constant 0 : i32
    %c0_i32_0 = arith.constant 0 : i32
    %c0_i32_1 = arith.constant 0 : i32
    %c0_i32_2 = arith.constant 0 : i32
    return %arg0, %c0_i32, %c0_i32_0, %c0_i32_1 : i32, i32, i32, i32
  }
}

</mosaic_0001>

<llo_original>
// kernel: up_fused_forward.1
$region0: #{up_fused_forward.1}
  #allocation0 [shape = 'u32[]', space=smem, size = 0x4, offset = 0x4, fixed_abs, tag = 'smem constant byte address 0x4 - core index']
  #allocation1 [shape = 'u32[72,128]{1,0:T(1,128)}', space=vmem, size = 0x9000, scoped, tag = 'internal scratch']
  %s0 = inlined_call_operand.vmem [shape: f32[2,8,64], index: 0, kind: input, shape index: {}]
  %s1 = inlined_call_operand.vmem [shape: f32[2,8,64], index: 1, kind: input, shape index: {}]
  %s2 = inlined_call_operand.vmem [shape: f32[2,16,128], index: 2, kind: input, shape index: {}]
  %s3 = inlined_call_operand.vmem [shape: f32[16,8], index: 3, kind: input, shape index: {}]
  %s4 = inlined_call_operand.hbm [shape: f32[64,128], index: 4, kind: input, shape index: {}]
  %s5 = inlined_call_operand.vmem [shape: f32[16,8], index: 5, kind: input, shape index: {}]
  %s6 = inlined_call_operand.hbm [shape: f32[64,128], index: 6, kind: input, shape index: {}]
  %s7 = inlined_call_operand.hbm [shape: f32[384,128], index: 7, kind: input, shape index: {}]
  %s8 = inlined_call_operand.hbm [shape: f32[5888,128], index: 8, kind: input, shape index: {}]
  %s9 = inlined_call_operand.vmem [shape: f32[736,16], index: 9, kind: input, shape index: {}]
  %s10 = inlined_call_operand.hbm [shape: f32[16,128], index: 10, kind: input, shape index: {}]
  %s11 = inlined_call_operand.vmem [shape: f32[2,4,16,128], index: 11, kind: output, shape index: {}]
  %s12 = sld [smem:[#allocation0]]
  $region97: #{up_fused_forward.1} parent=0
    _
  %s14 = ssub.s32 1, %s12
  %s15 = scalar_select 0, %s14, %s12
  $region1: #{up_fused_forward.1} parent=0
    #allocation2 [shape = 'u8[32768]{0}', space=vmem, size = 0x8000, scoped, tag = 'input window, operand 4, single buffered']
    #allocation3 [shape = 's32[2]{0}', space=sflag, size = 0x8, scoped, tag = 'scoped memory for up_fused_forward.1']
    #allocation4 [shape = 'u8[32768]{0}', space=vmem, size = 0x8000, scoped, tag = 'input window, operand 6, single buffered']
    #allocation5 [shape = 's32[1]{0}', space=sflag, size = 0x4, scoped, tag = 'scoped memory for up_fused_forward.1']
    #allocation6 [shape = 'u8[196608]{0}', space=vmem, size = 0x30000, scoped, tag = 'input window, operand 7, single buffered']
    #allocation7 [shape = 'u8[3014656]{0}', space=vmem, size = 0x2e0000, scoped, tag = 'input window, operand 8, single buffered']
    #allocation8 [shape = 's32[1]{0}', space=sflag, size = 0x4, scoped, tag = 'scoped memory for up_fused_forward.1']
    #allocation9 [shape = 'u8[8192]{0}', space=vmem, size = 0x2000, scoped, tag = 'input window, operand 10, single buffered']
    %16 = vsyncpa [#allocation3], 0
    %17 = vsyncpa [#allocation5], 0
    %18 = vsyncpa [#allocation8], 0
    loop: start=0, step=1, limit=4
    $region2: #{up_fused_forward.1} parent=1 // loop_pre_header
      _
    $region3: #{up_fused_forward.1} parent=1 // loop_header
      %s20 = sphi 0, %s24
      %p21 = scmp.ge.s32.totalorder %s20, 4
      %s30 = sphi 0, %s32
      %s33 = sphi 0, %s30
      %s34 = sphi 0, %s33
      %s50 = sphi 0, %s34
      %s56 = sphi 0, %s58
      %s59 = sphi 0, %s56
      %s60 = sphi 0, %s59
      %s76 = sphi 0, %s60
      %s82 = sphi 0, %s84
      %s85 = sphi 0, %s82
      %s86 = sphi 0, %s85
      %s102 = sphi 0, %s86
      %s106 = sphi 0, %s106
      %s108 = sphi 0, %s106
      %s109 = sphi 0, %s108
      %s123 = sphi 0, %s109
      %s127 = sphi 0, %s127
      %s129 = sphi 0, %s127
      %s130 = sphi 0, %s129
      %s144 = sphi 0, %s130
      %s148 = sphi 0, %s148
      %s150 = sphi 0, %s148
      %s151 = sphi 0, %s150
      %s165 = sphi 0, %s151
      %s169 = sphi 0, %s169
      %s171 = sphi 0, %s169
      %s172 = sphi 0, %s171
      %s186 = sphi 0, %s172
      %s190 = sphi 0, %s190
      %s192 = sphi 0, %s190
      %s193 = sphi 0, %s192
      %s207 = sphi 0, %s193
      %s211 = sphi 0, %s211
      %s213 = sphi 0, %s211
      %s214 = sphi 0, %s213
      %s228 = sphi 0, %s214
      %s232 = sphi 0, %s232
      %s234 = sphi 0, %s232
      %s235 = sphi 0, %s234
      %s249 = sphi 0, %s235
      %s253 = sphi 0, %s253
      %s255 = sphi 0, %s253
      %s256 = sphi 0, %s255
      %s270 = sphi 0, %s256
      %s276 = sphi 0, %s278
      %s279 = sphi 0, %s276
      %s280 = sphi 0, %s279
      %s296 = sphi 0, %s280
    $region4: #{up_fused_forward.1} parent=1 // loop_header_branch
      %23 = sbr.rel (%p21) target = $region8
    $region5: #{up_fused_forward.1} parent=1 // loop_body
      %s25 = ssub.s32 %s20, 1
      %s26 = ssub.s32 %s20, 2
      %s27 = sadd.s32 %s20, 1
      %s28 = ssub.s32 %s20, %s27
      %p29 = scmp.eq.s32.totalorder %s28, 0
      %s31 = sadd.s32 %s30, 1
      %s32 = scalar_select %p29, %s30, %s31
      %p35 = pneg %p29
      %p36 = scmp.eq.s32.totalorder %s20, 1
      %p37 = por %p35, %p36
      %p38 = scmp.ne.s32.totalorder %s30, %s33
      %p39 = scmp.eq.s32.totalorder %s20, 0
      %p40 = por %p38, %p39
      %p41 = scmp.ne.s32.totalorder %s30, %s33
      %p42 = scmp.eq.s32.totalorder %s25, 1
      %p43 = por %p41, %p42
      %p44 = scmp.ne.s32.totalorder %s33, %s34
      %p45 = scmp.eq.s32.totalorder %s25, 0
      %p46 = por %p44, %p45
      %p47 = scmp.ne.s32.totalorder %s33, %s34
      %p48 = scmp.eq.s32.totalorder %s26, 1
      %p49 = por %p47, %p48
      %p51 = scmp.ne.s32.totalorder %s34, %s50
      %p52 = scmp.eq.s32.totalorder %s26, 0
      %p53 = por %p51, %p52
      %s54 = ssub.s32 %s20, %s27
      %p55 = scmp.eq.s32.totalorder %s54, 0
      %s57 = sadd.s32 %s56, 1
      %s58 = scalar_select %p55, %s56, %s57
      %p61 = pneg %p55
      %p62 = scmp.eq.s32.totalorder %s20, 1
      %p63 = por %p61, %p62
      %p64 = scmp.ne.s32.totalorder %s56, %s59
      %p65 = scmp.eq.s32.totalorder %s20, 0
      %p66 = por %p64, %p65
      %p67 = scmp.ne.s32.totalorder %s56, %s59
      %p68 = scmp.eq.s32.totalorder %s25, 1
      %p69 = por %p67, %p68
      %p70 = scmp.ne.s32.totalorder %s59, %s60
      %p71 = scmp.eq.s32.totalorder %s25, 0
      %p72 = por %p70, %p71
      %p73 = scmp.ne.s32.totalorder %s59, %s60
      %p74 = scmp.eq.s32.totalorder %s26, 1
      %p75 = por %p73, %p74
      %p77 = scmp.ne.s32.totalorder %s60, %s76
      %p78 = scmp.eq.s32.totalorder %s26, 0
      %p79 = por %p77, %p78
      %s80 = ssub.s32 %s20, %s27
      %p81 = scmp.eq.s32.totalorder %s80, 0
      %s83 = sadd.s32 %s82, 1
      %s84 = scalar_select %p81, %s82, %s83
      %p87 = pneg %p81
      %p88 = scmp.eq.s32.totalorder %s20, 1
      %p89 = por %p87, %p88
      %p90 = scmp.ne.s32.totalorder %s82, %s85
      %p91 = scmp.eq.s32.totalorder %s20, 0
      %p92 = por %p90, %p91
      %p93 = scmp.ne.s32.totalorder %s82, %s85
      %p94 = scmp.eq.s32.totalorder %s25, 1
      %p95 = por %p93, %p94
      %p96 = scmp.ne.s32.totalorder %s85, %s86
      %p97 = scmp.eq.s32.totalorder %s25, 0
      %p98 = por %p96, %p97
      %p99 = scmp.ne.s32.totalorder %s85, %s86
      %p100 = scmp.eq.s32.totalorder %s26, 1
      %p101 = por %p99, %p100
      %p103 = scmp.ne.s32.totalorder %s86, %s102
      %p104 = scmp.eq.s32.totalorder %s26, 0
      %p105 = por %p103, %p104
      %s107 = sadd.s32 %s106, 1
      %p110 = scmp.eq.s32.totalorder %s20, 1
      %p111 = scmp.ne.s32.totalorder %s106, %s108
      %p112 = scmp.eq.s32.totalorder %s20, 0
      %p113 = por %p111, %p112
      %p114 = scmp.ne.s32.totalorder %s106, %s108
      %p115 = scmp.eq.s32.totalorder %s25, 1
      %p116 = por %p114, %p115
      %p117 = scmp.ne.s32.totalorder %s108, %s109
      %p118 = scmp.eq.s32.totalorder %s25, 0
      %p119 = por %p117, %p118
      %p120 = scmp.ne.s32.totalorder %s108, %s109
      %p121 = scmp.eq.s32.totalorder %s26, 1
      %p122 = por %p120, %p121
      %p124 = scmp.ne.s32.totalorder %s109, %s123
      %p125 = scmp.eq.s32.totalorder %s26, 0
      %p126 = por %p124, %p125
      %s128 = sadd.s32 %s127, 1
      %p131 = scmp.eq.s32.totalorder %s20, 1
      %p132 = scmp.ne.s32.totalorder %s127, %s129
      %p133 = scmp.eq.s32.totalorder %s20, 0
      %p134 = por %p132, %p133
      %p135 = scmp.ne.s32.totalorder %s127, %s129
      %p136 = scmp.eq.s32.totalorder %s25, 1
      %p137 = por %p135, %p136
      %p138 = scmp.ne.s32.totalorder %s129, %s130
      %p139 = scmp.eq.s32.totalorder %s25, 0
      %p140 = por %p138, %p139
      %p141 = scmp.ne.s32.totalorder %s129, %s130
      %p142 = scmp.eq.s32.totalorder %s26, 1
      %p143 = por %p141, %p142
      %p145 = scmp.ne.s32.totalorder %s130, %s144
      %p146 = scmp.eq.s32.totalorder %s26, 0
      %p147 = por %p145, %p146
      %s149 = sadd.s32 %s148, 1
      %p152 = scmp.eq.s32.totalorder %s20, 1
      %p153 = scmp.ne.s32.totalorder %s148, %s150
      %p154 = scmp.eq.s32.totalorder %s20, 0
      %p155 = por %p153, %p154
      %p156 = scmp.ne.s32.totalorder %s148, %s150
      %p157 = scmp.eq.s32.totalorder %s25, 1
      %p158 = por %p156, %p157
      %p159 = scmp.ne.s32.totalorder %s150, %s151
      %p160 = scmp.eq.s32.totalorder %s25, 0
      %p161 = por %p159, %p160
      %p162 = scmp.ne.s32.totalorder %s150, %s151
      %p163 = scmp.eq.s32.totalorder %s26, 1
      %p164 = por %p162, %p163
      %p166 = scmp.ne.s32.totalorder %s151, %s165
      %p167 = scmp.eq.s32.totalorder %s26, 0
      %p168 = por %p166, %p167
      %s170 = sadd.s32 %s169, 1
      %p173 = scmp.eq.s32.totalorder %s20, 1
      %p174 = scmp.ne.s32.totalorder %s169, %s171
      %p175 = scmp.eq.s32.totalorder %s20, 0
      %p176 = por %p174, %p175
      %p177 = scmp.ne.s32.totalorder %s169, %s171
      %p178 = scmp.eq.s32.totalorder %s25, 1
      %p179 = por %p177, %p178
      %p180 = scmp.ne.s32.totalorder %s171, %s172
      %p181 = scmp.eq.s32.totalorder %s25, 0
      %p182 = por %p180, %p181
      %p183 = scmp.ne.s32.totalorder %s171, %s172
      %p184 = scmp.eq.s32.totalorder %s26, 1
      %p185 = por %p183, %p184
      %p187 = scmp.ne.s32.totalorder %s172, %s186
      %p188 = scmp.eq.s32.totalorder %s26, 0
      %p189 = por %p187, %p188
      %s191 = sadd.s32 %s190, 1
      %p194 = scmp.eq.s32.totalorder %s20, 1
      %p195 = scmp.ne.s32.totalorder %s190, %s192
      %p196 = scmp.eq.s32.totalorder %s20, 0
      %p197 = por %p195, %p196
      %p198 = scmp.ne.s32.totalorder %s190, %s192
      %p199 = scmp.eq.s32.totalorder %s25, 1
      %p200 = por %p198, %p199
      %p201 = scmp.ne.s32.totalorder %s192, %s193
      %p202 = scmp.eq.s32.totalorder %s25, 0
      %p203 = por %p201, %p202
      %p204 = scmp.ne.s32.totalorder %s192, %s193
      %p205 = scmp.eq.s32.totalorder %s26, 1
      %p206 = por %p204, %p205
      %p208 = scmp.ne.s32.totalorder %s193, %s207
      %p209 = scmp.eq.s32.totalorder %s26, 0
      %p210 = por %p208, %p209
      %s212 = sadd.s32 %s211, 1
      %p215 = scmp.eq.s32.totalorder %s20, 1
      %p216 = scmp.ne.s32.totalorder %s211, %s213
      %p217 = scmp.eq.s32.totalorder %s20, 0
      %p218 = por %p216, %p217
      %p219 = scmp.ne.s32.totalorder %s211, %s213
      %p220 = scmp.eq.s32.totalorder %s25, 1
      %p221 = por %p219, %p220
      %p222 = scmp.ne.s32.totalorder %s213, %s214
      %p223 = scmp.eq.s32.totalorder %s25, 0
      %p224 = por %p222, %p223
      %p225 = scmp.ne.s32.totalorder %s213, %s214
      %p226 = scmp.eq.s32.totalorder %s26, 1
      %p227 = por %p225, %p226
      %p229 = scmp.ne.s32.totalorder %s214, %s228
      %p230 = scmp.eq.s32.totalorder %s26, 0
      %p231 = por %p229, %p230
      %s233 = sadd.s32 %s232, 1
      %p236 = scmp.eq.s32.totalorder %s20, 1
      %p237 = scmp.ne.s32.totalorder %s232, %s234
      %p238 = scmp.eq.s32.totalorder %s20, 0
      %p239 = por %p237, %p238
      %p240 = scmp.ne.s32.totalorder %s232, %s234
      %p241 = scmp.eq.s32.totalorder %s25, 1
      %p242 = por %p240, %p241
      %p243 = scmp.ne.s32.totalorder %s234, %s235
      %p244 = scmp.eq.s32.totalorder %s25, 0
      %p245 = por %p243, %p244
      %p246 = scmp.ne.s32.totalorder %s234, %s235
      %p247 = scmp.eq.s32.totalorder %s26, 1
      %p248 = por %p246, %p247
      %p250 = scmp.ne.s32.totalorder %s235, %s249
      %p251 = scmp.eq.s32.totalorder %s26, 0
      %p252 = por %p250, %p251
      %s254 = sadd.s32 %s253, 1
      %p257 = scmp.eq.s32.totalorder %s20, 1
      %p258 = scmp.ne.s32.totalorder %s253, %s255
      %p259 = scmp.eq.s32.totalorder %s20, 0
      %p260 = por %p258, %p259
      %p261 = scmp.ne.s32.totalorder %s253, %s255
      %p262 = scmp.eq.s32.totalorder %s25, 1
      %p263 = por %p261, %p262
      %p264 = scmp.ne.s32.totalorder %s255, %s256
      %p265 = scmp.eq.s32.totalorder %s25, 0
      %p266 = por %p264, %p265
      %p267 = scmp.ne.s32.totalorder %s255, %s256
      %p268 = scmp.eq.s32.totalorder %s26, 1
      %p269 = por %p267, %p268
      %p271 = scmp.ne.s32.totalorder %s256, %s270
      %p272 = scmp.eq.s32.totalorder %s26, 0
      %p273 = por %p271, %p272
      %s274 = ssub.s32 %s20, %s27
      %p275 = scmp.eq.s32.totalorder %s274, 0
      %s277 = sadd.s32 %s276, 1
      %s278 = scalar_select %p275, %s276, %s277
      %p281 = pneg %p275
      %p282 = scmp.eq.s32.totalorder %s20, 1
      %p283 = por %p281, %p282
      %p284 = scmp.ne.s32.totalorder %s276, %s279
      %p285 = scmp.eq.s32.totalorder %s20, 0
      %p286 = por %p284, %p285
      %p287 = scmp.ne.s32.totalorder %s276, %s279
      %p288 = scmp.eq.s32.totalorder %s25, 1
      %p289 = por %p287, %p288
      %p290 = scmp.ne.s32.totalorder %s279, %s280
      %p291 = scmp.eq.s32.totalorder %s25, 0
      %p292 = por %p290, %p291
      %p293 = scmp.ne.s32.totalorder %s279, %s280
      %p294 = scmp.eq.s32.totalorder %s26, 1
      %p295 = por %p293, %p294
      %p297 = scmp.ne.s32.totalorder %s280, %s296
      %p298 = scmp.eq.s32.totalorder %s26, 0
      %p299 = por %p297, %p298
      %p300 = scmp.le.s32.totalorder 1, %s20
      %p301 = scmp.lt.s32.totalorder %s20, 3
      %p302 = pnand %p300, %p301
      %p303 = pneg %p302
      // Predicated region
      $region9: #{up_fused_forward.1} parent=5 // pred_check
        _
      $region10: #{up_fused_forward.1} parent=5 // pred_check_branch
        %305 = sbr.rel (%p302) target = $region12
      $region11: #{up_fused_forward.1} parent=5 // pred_region
        %s306 = ssub.s32 %s20, 1
        // Predicated region
        $region13: #{up_fused_forward.1} parent=11 // pred_check
          %p307 = pneg %p119
        $region14: #{up_fused_forward.1} parent=11 // pred_check_branch
          %309 = sbr.rel (%p307) target = $region16
        $region15: #{up_fused_forward.1} parent=11 // pred_region
          _
        $region16: #{up_fused_forward.1} parent=11 // pred_fallthru
          _
        // Predicated region
        $region17: #{up_fused_forward.1} parent=11 // pred_check
          %p310 = pneg %p140
        $region18: #{up_fused_forward.1} parent=11 // pred_check_branch
          %312 = sbr.rel (%p310) target = $region20
        $region19: #{up_fused_forward.1} parent=11 // pred_region
          %314 = vsyncadd [#allocation3], 0
          %s315 = sshll.u32 %s4, 4
          %s316 = int_to_ptr.hbm [resolvable:$true] %s315
          %s317 = sshll.u32 [#allocation2], 4
          %s318 = int_to_ptr.vmem [resolvable:$true] %s317
          %323 = dma.hbm_to_vmem [thread:$0]  %s316, 1024, %s318, [#allocation3], 128, 128, 8
        $region20: #{up_fused_forward.1} parent=11 // pred_fallthru
          _
        // Predicated region
        $region21: #{up_fused_forward.1} parent=11 // pred_check
          %p324 = pneg %p161
        $region22: #{up_fused_forward.1} parent=11 // pred_check_branch
          %326 = sbr.rel (%p324) target = $region24
        $region23: #{up_fused_forward.1} parent=11 // pred_region
          _
        $region24: #{up_fused_forward.1} parent=11 // pred_fallthru
          _
        // Predicated region
        $region25: #{up_fused_forward.1} parent=11 // pred_check
          %p327 = pneg %p182
        $region26: #{up_fused_forward.1} parent=11 // pred_check_branch
          %329 = sbr.rel (%p327) target = $region28
        $region27: #{up_fused_forward.1} parent=11 // pred_region
          %331 = vsyncadd [#allocation5], 0
          %s332 = sshll.u32 %s6, 4
          %s333 = int_to_ptr.hbm [resolvable:$true] %s332
          %s334 = sshll.u32 [#allocation4], 4
          %s335 = int_to_ptr.vmem [resolvable:$true] %s334
          %340 = dma.hbm_to_vmem [thread:$0]  %s333, 1024, %s335, [#allocation5], 128, 128, 8
        $region28: #{up_fused_forward.1} parent=11 // pred_fallthru
          _
        // Predicated region
        $region29: #{up_fused_forward.1} parent=11 // pred_check
          %p341 = pneg %p203
        $region30: #{up_fused_forward.1} parent=11 // pred_check_branch
          %343 = sbr.rel (%p341) target = $region32
        $region31: #{up_fused_forward.1} parent=11 // pred_region
          %345 = vsyncadd [#allocation5], 0
          %s346 = sshll.u32 %s7, 4
          %s347 = int_to_ptr.hbm [resolvable:$true] %s346
          %s348 = sshll.u32 [#allocation6], 4
          %s349 = int_to_ptr.vmem [resolvable:$true] %s348
          %354 = dma.hbm_to_vmem [thread:$0]  %s347, 6144, %s349, [#allocation5], 128, 128, 8
        $region32: #{up_fused_forward.1} parent=11 // pred_fallthru
          _
        // Predicated region
        $region33: #{up_fused_forward.1} parent=11 // pred_check
          %p355 = pneg %p224
        $region34: #{up_fused_forward.1} parent=11 // pred_check_branch
          %357 = sbr.rel (%p355) target = $region36
        $region35: #{up_fused_forward.1} parent=11 // pred_region
          %359 = vsyncadd [#allocation8], 0
          %s360 = sshll.u32 %s8, 4
          %s361 = int_to_ptr.hbm [resolvable:$true] %s360
          %s362 = sshll.u32 [#allocation7], 4
          %s363 = int_to_ptr.vmem [resolvable:$true] %s362
          %368 = dma.hbm_to_vmem [thread:$0]  %s361, 94208, %s363, [#allocation8], 128, 128, 8
        $region36: #{up_fused_forward.1} parent=11 // pred_fallthru
          _
        // Predicated region
        $region37: #{up_fused_forward.1} parent=11 // pred_check
          %p369 = pneg %p245
        $region38: #{up_fused_forward.1} parent=11 // pred_check_branch
          %371 = sbr.rel (%p369) target = $region40
        $region39: #{up_fused_forward.1} parent=11 // pred_region
          _
        $region40: #{up_fused_forward.1} parent=11 // pred_fallthru
          _
        // Predicated region
        $region41: #{up_fused_forward.1} parent=11 // pred_check
          %p372 = pneg %p266
        $region42: #{up_fused_forward.1} parent=11 // pred_check_branch
          %374 = sbr.rel (%p372) target = $region44
        $region43: #{up_fused_forward.1} parent=11 // pred_region
          %376 = vsyncadd [#allocation8], 0
          %s377 = sshll.u32 %s10, 4
          %s378 = int_to_ptr.hbm [resolvable:$true] %s377
          %s379 = sshll.u32 [#allocation9], 4
          %s380 = int_to_ptr.vmem [resolvable:$true] %s379
          %385 = dma.hbm_to_vmem [thread:$0]  %s378, 256, %s380, [#allocation8], 128, 128, 8
        $region44: #{up_fused_forward.1} parent=11 // pred_fallthru
          _
      $region12: #{up_fused_forward.1} parent=5 // pred_fallthru
        _
      %p386 = scmp.lt.s32.totalorder %s20, 2
      // Predicated region
      $region45: #{up_fused_forward.1} parent=5 // pred_check
        %p387 = pneg %p386
      $region46: #{up_fused_forward.1} parent=5 // pred_check_branch
        %389 = sbr.rel (%p387) target = $region48
      $region47: #{up_fused_forward.1} parent=5 // pred_region
        // Predicated region
        $region49: #{up_fused_forward.1} parent=47 // pred_check
          %p390 = pneg %p40
        $region50: #{up_fused_forward.1} parent=47 // pred_check_branch
          %392 = sbr.rel (%p390) target = $region52
        $region51: #{up_fused_forward.1} parent=47 // pred_region
          %p393 = scmp.lt.s32.totalorder %s20, 1
          %s394 = scalar_select %p393, %s20, 1
          %s395 = smul.addr %s394, 8
          %s396 = scalar_lea.vmem %s0, %s395
        $region52: #{up_fused_forward.1} parent=47 // pred_fallthru
          _
        // Predicated region
        $region53: #{up_fused_forward.1} parent=47 // pred_check
          %p397 = pneg %p66
        $region54: #{up_fused_forward.1} parent=47 // pred_check_branch
          %399 = sbr.rel (%p397) target = $region56
        $region55: #{up_fused_forward.1} parent=47 // pred_region
          %p400 = scmp.lt.s32.totalorder %s20, 1
          %s401 = scalar_select %p400, %s20, 1
          %s402 = smul.addr %s401, 8
          %s403 = scalar_lea.vmem %s1, %s402
        $region56: #{up_fused_forward.1} parent=47 // pred_fallthru
          _
        // Predicated region
        $region57: #{up_fused_forward.1} parent=47 // pred_check
          %p404 = pneg %p92
        $region58: #{up_fused_forward.1} parent=47 // pred_check_branch
          %406 = sbr.rel (%p404) target = $region60
        $region59: #{up_fused_forward.1} parent=47 // pred_region
          %p407 = scmp.lt.s32.totalorder %s20, 1
          %s408 = scalar_select %p407, %s20, 1
          %s409 = smul.addr %s408, 2
          %s410 = smul.addr %s409, 8
          %s411 = scalar_lea.vmem %s2, %s410
        $region60: #{up_fused_forward.1} parent=47 // pred_fallthru
          _
      $region48: #{up_fused_forward.1} parent=5 // pred_fallthru
        _
      %p412 = scmp.le.s32.totalorder 1, %s20
      %p413 = scmp.lt.s32.totalorder %s20, 3
      %p414 = pnand %p412, %p413
      %p415 = pneg %p414
      // Predicated region
      $region61: #{up_fused_forward.1} parent=5 // pred_check
        _
      $region62: #{up_fused_forward.1} parent=5 // pred_check_branch
        %417 = sbr.rel (%p414) target = $region64
      $region63: #{up_fused_forward.1} parent=5 // pred_region
        %s418 = ssub.s32 %s20, 1
        // Predicated region
        $region65: #{up_fused_forward.1} parent=63 // pred_check
          %p419 = pneg %p140
        $region66: #{up_fused_forward.1} parent=63 // pred_check_branch
          %421 = sbr.rel (%p419) target = $region68
        $region67: #{up_fused_forward.1} parent=63 // pred_region
          %423 = dma.done [#allocation3], 1024
        $region68: #{up_fused_forward.1} parent=63 // pred_fallthru
          _
        // Predicated region
        $region69: #{up_fused_forward.1} parent=63 // pred_check
          %p424 = pneg %p182
        $region70: #{up_fused_forward.1} parent=63 // pred_check_branch
          %426 = sbr.rel (%p424) target = $region72
        $region71: #{up_fused_forward.1} parent=63 // pred_region
          %428 = dma.done [#allocation5], 1024
        $region72: #{up_fused_forward.1} parent=63 // pred_fallthru
          _
        // Predicated region
        $region73: #{up_fused_forward.1} parent=63 // pred_check
          %p429 = pneg %p203
        $region74: #{up_fused_forward.1} parent=63 // pred_check_branch
          %431 = sbr.rel (%p429) target = $region76
        $region75: #{up_fused_forward.1} parent=63 // pred_region
          %433 = dma.done [#allocation5], 6144
        $region76: #{up_fused_forward.1} parent=63 // pred_fallthru
          _
        // Predicated region
        $region77: #{up_fused_forward.1} parent=63 // pred_check
          %p434 = pneg %p224
        $region78: #{up_fused_forward.1} parent=63 // pred_check_branch
          %436 = sbr.rel (%p434) target = $region80
        $region79: #{up_fused_forward.1} parent=63 // pred_region
          %438 = dma.done [#allocation8], 94208
        $region80: #{up_fused_forward.1} parent=63 // pred_fallthru
          _
        // Predicated region
        $region81: #{up_fused_forward.1} parent=63 // pred_check
          %p439 = pneg %p266
        $region82: #{up_fused_forward.1} parent=63 // pred_check_branch
          %441 = sbr.rel (%p439) target = $region84
        $region83: #{up_fused_forward.1} parent=63 // pred_region
          %443 = dma.done [#allocation8], 256
        $region84: #{up_fused_forward.1} parent=63 // pred_fallthru
          _
        %p444 = scmp.lt.s32.totalorder %s25, 1
        %s445 = scalar_select %p444, %s25, 1
        %s446 = smul.addr %s445, 8
        %s447 = scalar_lea.vmem %s0, %s446
        %p448 = pneg %p46
        %p449 = pneg %p43
        %p450 = scmp.lt.s32.totalorder %s25, 1
        %s451 = scalar_select %p450, %s25, 1
        %s452 = smul.addr %s451, 8
        %s453 = scalar_lea.vmem %s1, %s452
        %p454 = pneg %p72
        %p455 = pneg %p69
        %p456 = scmp.lt.s32.totalorder %s25, 1
        %s457 = scalar_select %p456, %s25, 1
        %s458 = smul.addr %s457, 2
        %s459 = smul.addr %s458, 8
        %s460 = scalar_lea.vmem %s2, %s459
        %p461 = pneg %p98
        %p462 = pneg %p95
        %p463 = pneg %p119
        %p464 = pneg %p116
        %p465 = pneg %p140
        %p466 = pneg %p137
        %p467 = pneg %p161
        %p468 = pneg %p158
        %p469 = pneg %p182
        %p470 = pneg %p179
        %p471 = pneg %p203
        %p472 = pneg %p200
        %p473 = pneg %p224
        %p474 = pneg %p221
        %p475 = pneg %p245
        %p476 = pneg %p242
        %p477 = pneg %p266
        %p478 = pneg %p263
        %p479 = pneg %p292
        %p480 = pneg %p289
        %p481 = scmp.lt.s32.totalorder %s25, 1
        %s482 = scalar_select %p481, %s25, 1
        %s483 = smul.addr %s482, 8
        %s484 = smul.addr %s483, 8
        %s485 = scalar_lea.vmem %s11, %s484
        %p486 = scmp.lt.s32.totalorder %s25, 1
        %s487 = scalar_select %p486, %s25, 1
        %s488 = smul.addr %s487, 8
        %s489 = scalar_lea.vmem %s0, %s488
        %p490 = scmp.lt.s32.totalorder %s25, 1
        %s491 = scalar_select %p490, %s25, 1
        %s492 = smul.addr %s491, 8
        %s493 = scalar_lea.vmem %s1, %s492
        %p494 = scmp.lt.s32.totalorder %s25, 1
        %s495 = scalar_select %p494, %s25, 1
        %s496 = smul.addr %s495, 2
        %s497 = smul.addr %s496, 8
        %s498 = scalar_lea.vmem %s2, %s497
        %p499 = scmp.lt.s32.totalorder %s25, 1
        %s500 = scalar_select %p499, %s25, 1
        %s501 = smul.addr %s500, 8
        %s502 = smul.addr %s501, 8
        %s503 = scalar_lea.vmem %s11, %s502
        %v504 = vld [vmem:[%s3] sm:$0xff]
        %v505 = vld [vmem:[%s3 + $0x8] sm:$0xff]
        %v506 = vld [vmem:[%s489] sm:$0xff]
        %v507 = vld [vmem:[#allocation2] sm:$0xff]
        %v508 = vld [vmem:[#allocation2 + $0x8] sm:$0xff]
        %v509 = vld [vmem:[#allocation2 + $0x10] sm:$0xff]
        %v510 = vld [vmem:[#allocation2 + $0x18] sm:$0xff]
        %v511 = vld [vmem:[#allocation2 + $0x20] sm:$0xff]
        %v512 = vld [vmem:[#allocation2 + $0x28] sm:$0xff]
        %v513 = vld [vmem:[#allocation2 + $0x30] sm:$0xff]
        %v514 = vld [vmem:[#allocation2 + $0x38] sm:$0xff]
        %vm515 = vcmask 523264
        %v517 = vsel %vm515, %v506, 0
        %519 = vmatpush.msra.mxu0 0.0
        %520 = vmatpush.msra.mxu0 0.0
        %521 = vmatpush.msra.mxu0 0.0
        %522 = vmatpush.msra.mxu0 0.0
        %523 = vmatpush.msra.mxu0 0.0
        %524 = vmatpush.msra.mxu0 0.0
        %525 = vmatpush.msra.mxu0 0.0
        %526 = vmatpush.msra.mxu0 0.0
        %527 = vmatpush.msra.mxu0 %v514
        %528 = vmatpush.msra.mxu0 %v513
        %529 = vmatpush.msra.mxu0 %v512
        %530 = vmatpush.msra.mxu0 %v511
        %531 = vmatpush.msra.mxu0 %v510
        %532 = vmatpush.msra.mxu0 %v509
        %533 = vmatpush.msra.mxu0 %v508
        %534 = vmatpush.msra.mxu0 %v507
        %535 = vmatmul.f32.gmra.mxu0 %v517
        %v536 = vpop.f32.mrf.mxu0
        %v537 = vadd.f32 0.0, %v536
        %538 = vdwg.mxu0
        %vm539 = vcmask 64512
        %v541 = vsel %vm539, %v504, 0
        %v544 = vsel %vm539, %v505, 0
        %546 = vmatpush.msra.mxu0 0.0
        %547 = vmatpush.msra.mxu0 0.0
        %548 = vmatpush.msra.mxu0 0.0
        %549 = vmatpush.msra.mxu0 0.0
        %550 = vmatpush.msra.mxu0 0.0
        %551 = vmatpush.msra.mxu0 0.0
        %552 = vmatpush.msra.mxu0 0.0
        %553 = vmatpush.msra.mxu0 0.0
        %554 = vmatpush.msra.mxu0 0.0
        %555 = vmatpush.msra.mxu0 0.0
        %556 = vmatpush.msra.mxu0 0.0
        %557 = vmatpush.msra.mxu0 0.0
        %558 = vmatpush.msra.mxu0 0.0
        %559 = vmatpush.msra.mxu0 0.0
        %560 = vmatpush.msra.mxu0 0.0
        %561 = vmatpush.msra.mxu0 %v537
        %562 = vmatmul.f32.gmra.mxu0 %v541
        %v563 = vpop.f32.mrf.mxu0
        %v564 = vadd.f32 0.0, %v563
        %565 = vmatmul.f32.gmra.mxu0 %v544
        %v566 = vpop.f32.mrf.mxu0
        %v567 = vadd.f32 0.0, %v566
        %568 = vdwg.mxu0
        %v569 = vld [vmem:[%s5] sm:$0xff]
        %v570 = vld [vmem:[%s5 + $0x8] sm:$0xff]
        %v571 = vld [vmem:[%s493] sm:$0xff]
        %v572 = vld [vmem:[#allocation4] sm:$0xff]
        %v573 = vld [vmem:[#allocation4 + $0x8] sm:$0xff]
        %v574 = vld [vmem:[#allocation4 + $0x10] sm:$0xff]
        %v575 = vld [vmem:[#allocation4 + $0x18] sm:$0xff]
        %v576 = vld [vmem:[#allocation4 + $0x20] sm:$0xff]
        %v577 = vld [vmem:[#allocation4 + $0x28] sm:$0xff]
        %v578 = vld [vmem:[#allocation4 + $0x30] sm:$0xff]
        %v579 = vld [vmem:[#allocation4 + $0x38] sm:$0xff]
        %v581 = vsel %vm515, %v571, 0
        %583 = vmatpush.msra.mxu0 0.0
        %584 = vmatpush.msra.mxu0 0.0
        %585 = vmatpush.msra.mxu0 0.0
        %586 = vmatpush.msra.mxu0 0.0
        %587 = vmatpush.msra.mxu0 0.0
        %588 = vmatpush.msra.mxu0 0.0
        %589 = vmatpush.msra.mxu0 0.0
        %590 = vmatpush.msra.mxu0 0.0
        %591 = vmatpush.msra.mxu0 %v579
        %592 = vmatpush.msra.mxu0 %v578
        %593 = vmatpush.msra.mxu0 %v577
        %594 = vmatpush.msra.mxu0 %v576
        %595 = vmatpush.msra.mxu0 %v575
        %596 = vmatpush.msra.mxu0 %v574
        %597 = vmatpush.msra.mxu0 %v573
        %598 = vmatpush.msra.mxu0 %v572
        %599 = vmatmul.f32.gmra.mxu0 %v581
        %v600 = vpop.f32.mrf.mxu0
        %v601 = vadd.f32 0.0, %v600
        %602 = vdwg.mxu0
        %v604 = vsel %vm539, %v569, 0
        %v607 = vsel %vm539, %v570, 0
        %609 = vmatpush.msra.mxu0 0.0
        %610 = vmatpush.msra.mxu0 0.0
        %611 = vmatpush.msra.mxu0 0.0
        %612 = vmatpush.msra.mxu0 0.0
        %613 = vmatpush.msra.mxu0 0.0
        %614 = vmatpush.msra.mxu0 0.0
        %615 = vmatpush.msra.mxu0 0.0
        %616 = vmatpush.msra.mxu0 0.0
        %617 = vmatpush.msra.mxu0 0.0
        %618 = vmatpush.msra.mxu0 0.0
        %619 = vmatpush.msra.mxu0 0.0
        %620 = vmatpush.msra.mxu0 0.0
        %621 = vmatpush.msra.mxu0 0.0
        %622 = vmatpush.msra.mxu0 0.0
        %623 = vmatpush.msra.mxu0 0.0
        %624 = vmatpush.msra.mxu0 %v601
        %625 = vmatmul.f32.gmra.mxu0 %v604
        %v626 = vpop.f32.mrf.mxu0
        %v627 = vadd.f32 0.0, %v626
        %628 = vmatmul.f32.gmra.mxu0 %v607
        %v629 = vpop.f32.mrf.mxu0
        %v630 = vadd.f32 0.0, %v629
        %631 = vdwg.mxu0
        %v632 = vld [vmem:[%s498] sm:$0xff]
        %v633 = vld [vmem:[%s498 + $0x8] sm:$0xff]
        %v634 = vmax.f32 %v564, 0.0
        %v635 = vmax.f32 %v567, 0.0
        %v636 = vld [vmem:[#allocation6] sm:$0xff]
        %v637 = vld [vmem:[#allocation6 + $0x8] sm:$0xff]
        %v638 = vld [vmem:[#allocation6 + $0x10] sm:$0xff]
        %v639 = vld [vmem:[#allocation6 + $0x18] sm:$0xff]
        %v640 = vld [vmem:[#allocation6 + $0x20] sm:$0xff]
        %v641 = vld [vmem:[#allocation6 + $0x28] sm:$0xff]
        %v642 = vld [vmem:[#allocation6 + $0x30] sm:$0xff]
        %v643 = vld [vmem:[#allocation6 + $0x38] sm:$0xff]
        %v644 = vld [vmem:[#allocation6 + $0x40] sm:$0xff]
        %v645 = vld [vmem:[#allocation6 + $0x48] sm:$0xff]
        %v646 = vld [vmem:[#allocation6 + $0x50] sm:$0xff]
        %v647 = vld [vmem:[#allocation6 + $0x58] sm:$0xff]
        %v648 = vld [vmem:[#allocation6 + $0x60] sm:$0xff]
        %v649 = vld [vmem:[#allocation6 + $0x68] sm:$0xff]
        %v650 = vld [vmem:[#allocation6 + $0x70] sm:$0xff]
        %v651 = vld [vmem:[#allocation6 + $0x78] sm:$0xff]
        %v652 = vld [vmem:[#allocation9] sm:$0x1]
        %v653 = vperm.slane %v652, 0
        %654 = vmatpush.msra.mxu0 %v651
        %655 = vmatpush.msra.mxu0 %v650
        %656 = vmatpush.msra.mxu0 %v649
        %657 = vmatpush.msra.mxu0 %v648
        %658 = vmatpush.msra.mxu0 %v647
        %659 = vmatpush.msra.mxu0 %v646
        %660 = vmatpush.msra.mxu0 %v645
        %661 = vmatpush.msra.mxu0 %v644
        %662 = vmatpush.msra.mxu0 %v643
        %663 = vmatpush.msra.mxu0 %v642
        %664 = vmatpush.msra.mxu0 %v641
        %665 = vmatpush.msra.mxu0 %v640
        %666 = vmatpush.msra.mxu0 %v639
        %667 = vmatpush.msra.mxu0 %v638
        %668 = vmatpush.msra.mxu0 %v637
        %669 = vmatpush.msra.mxu0 %v636
        %670 = vmatmul.f32.gmra.mxu0 %v634
        %v671 = vpop.f32.mrf.mxu0
        %v672 = vadd.f32 %v653, %v671
        %673 = vmatmul.f32.gmra.mxu0 %v635
        %v674 = vpop.f32.mrf.mxu0
        %v675 = vadd.f32 %v653, %v674
        %676 = vdwg.mxu0
        %v677 = vmax.f32 %v632, 0.0
        %v678 = vmax.f32 %v633, 0.0
        %v679 = vld [vmem:[#allocation6 + $0x80] sm:$0xff]
        %v680 = vld [vmem:[#allocation6 + $0x88] sm:$0xff]
        %v681 = vld [vmem:[#allocation6 + $0x90] sm:$0xff]
        %v682 = vld [vmem:[#allocation6 + $0x98] sm:$0xff]
        %v683 = vld [vmem:[#allocation6 + $0xa0] sm:$0xff]
        %v684 = vld [vmem:[#allocation6 + $0xa8] sm:$0xff]
        %v685 = vld [vmem:[#allocation6 + $0xb0] sm:$0xff]
        %v686 = vld [vmem:[#allocation6 + $0xb8] sm:$0xff]
        %v687 = vld [vmem:[#allocation6 + $0xc0] sm:$0xff]
        %v688 = vld [vmem:[#allocation6 + $0xc8] sm:$0xff]
        %v689 = vld [vmem:[#allocation6 + $0xd0] sm:$0xff]
        %v690 = vld [vmem:[#allocation6 + $0xd8] sm:$0xff]
        %v691 = vld [vmem:[#allocation6 + $0xe0] sm:$0xff]
        %v692 = vld [vmem:[#allocation6 + $0xe8] sm:$0xff]
        %v693 = vld [vmem:[#allocation6 + $0xf0] sm:$0xff]
        %v694 = vld [vmem:[#allocation6 + $0xf8] sm:$0xff]
        %v695 = vmax.f32 %v627, 0.0
        %v696 = vmax.f32 %v630, 0.0
        %v697 = vld [vmem:[#allocation6 + $0x100] sm:$0xff]
        %v698 = vld [vmem:[#allocation6 + $0x108] sm:$0xff]
        %v699 = vld [vmem:[#allocation6 + $0x110] sm:$0xff]
        %v700 = vld [vmem:[#allocation6 + $0x118] sm:$0xff]
        %v701 = vld [vmem:[#allocation6 + $0x120] sm:$0xff]
        %v702 = vld [vmem:[#allocation6 + $0x128] sm:$0xff]
        %v703 = vld [vmem:[#allocation6 + $0x130] sm:$0xff]
        %v704 = vld [vmem:[#allocation6 + $0x138] sm:$0xff]
        %v705 = vld [vmem:[#allocation6 + $0x140] sm:$0xff]
        %v706 = vld [vmem:[#allocation6 + $0x148] sm:$0xff]
        %v707 = vld [vmem:[#allocation6 + $0x150] sm:$0xff]
        %v708 = vld [vmem:[#allocation6 + $0x158] sm:$0xff]
        %v709 = vld [vmem:[#allocation6 + $0x160] sm:$0xff]
        %v710 = vld [vmem:[#allocation6 + $0x168] sm:$0xff]
        %v711 = vld [vmem:[#allocation6 + $0x170] sm:$0xff]
        %v712 = vld [vmem:[#allocation6 + $0x178] sm:$0xff]
        %713 = vmatpush.msra.mxu0 %v712
        %714 = vmatpush.msra.mxu0 %v711
        %715 = vmatpush.msra.mxu0 %v710
        %716 = vmatpush.msra.mxu0 %v709
        %717 = vmatpush.msra.mxu0 %v708
        %718 = vmatpush.msra.mxu0 %v707
        %719 = vmatpush.msra.mxu0 %v706
        %720 = vmatpush.msra.mxu0 %v705
        %721 = vmatpush.msra.mxu0 %v704
        %722 = vmatpush.msra.mxu0 %v703
        %723 = vmatpush.msra.mxu0 %v702
        %724 = vmatpush.msra.mxu0 %v701
        %725 = vmatpush.msra.mxu0 %v700
        %726 = vmatpush.msra.mxu0 %v699
        %727 = vmatpush.msra.mxu0 %v698
        %728 = vmatpush.msra.mxu0 %v697
        %729 = vmatmul.f32.gmra.mxu0 %v695
        %v730 = vpop.f32.mrf.mxu0
        %v731 = vadd.f32 0.0, %v730
        %732 = vmatmul.f32.gmra.mxu0 %v696
        %v733 = vpop.f32.mrf.mxu0
        %v734 = vadd.f32 0.0, %v733
        %735 = vdwg.mxu0
        %736 = vmatpush.msra.mxu0 %v694
        %737 = vmatpush.msra.mxu0 %v693
        %738 = vmatpush.msra.mxu0 %v692
        %739 = vmatpush.msra.mxu0 %v691
        %740 = vmatpush.msra.mxu0 %v690
        %741 = vmatpush.msra.mxu0 %v689
        %742 = vmatpush.msra.mxu0 %v688
        %743 = vmatpush.msra.mxu0 %v687
        %744 = vmatpush.msra.mxu0 %v686
        %745 = vmatpush.msra.mxu0 %v685
        %746 = vmatpush.msra.mxu0 %v684
        %747 = vmatpush.msra.mxu0 %v683
        %748 = vmatpush.msra.mxu0 %v682
        %749 = vmatpush.msra.mxu0 %v681
        %750 = vmatpush.msra.mxu0 %v680
        %751 = vmatpush.msra.mxu0 %v679
        %752 = vmatmul.f32.gmra.mxu0 %v677
        %v753 = vpop.f32.mrf.mxu0
        %v754 = vadd.f32 %v731, %v753
        %755 = vmatmul.f32.gmra.mxu0 %v678
        %v756 = vpop.f32.mrf.mxu0
        %v757 = vadd.f32 %v734, %v756
        %758 = vdwg.mxu0
        %v759 = vld [vmem:[#allocation9 + $0x1] sm:$0x1]
        %v760 = vperm.slane %v759, 0
        %v761 = vadd.f32 %v754, %v760
        %v762 = vadd.f32 %v757, %v760
        %v763 = vmax.f32 %v761, 0.0
        %v764 = vmax.f32 %v762, 0.0
        %v765 = vld [vmem:[%s9] sm:$0xff]
        %v766 = vld [vmem:[%s9 + $0x8] sm:$0xff]
        %v767 = vld [vmem:[#allocation7] sm:$0xff]
        %v768 = vld [vmem:[#allocation7 + $0x8] sm:$0xff]
        %v769 = vld [vmem:[#allocation7 + $0x10] sm:$0xff]
        %v770 = vld [vmem:[#allocation7 + $0x18] sm:$0xff]
        %v771 = vld [vmem:[#allocation7 + $0x20] sm:$0xff]
        %v772 = vld [vmem:[#allocation7 + $0x28] sm:$0xff]
        %v773 = vld [vmem:[#allocation7 + $0x30] sm:$0xff]
        %v774 = vld [vmem:[#allocation7 + $0x38] sm:$0xff]
        %v775 = vld [vmem:[#allocation7 + $0x40] sm:$0xff]
        %v776 = vld [vmem:[#allocation7 + $0x48] sm:$0xff]
        %v777 = vld [vmem:[#allocation7 + $0x50] sm:$0xff]
        %v778 = vld [vmem:[#allocation7 + $0x58] sm:$0xff]
        %v779 = vld [vmem:[#allocation7 + $0x60] sm:$0xff]
        %v780 = vld [vmem:[#allocation7 + $0x68] sm:$0xff]
        %v781 = vld [vmem:[#allocation7 + $0x70] sm:$0xff]
        %v782 = vld [vmem:[#allocation7 + $0x78] sm:$0xff]
        %vm783 = vcmask 130048
        %v785 = vsel %vm783, %v765, 0
        %v788 = vsel %vm783, %v766, 0
        %790 = vmatpush.msra.mxu0 0.0
        %791 = vmatpush.msra.mxu0 0.0
        %792 = vmatpush.msra.mxu0 0.0
        %793 = vmatpush.msra.mxu0 0.0
        %794 = vmatpush.msra.mxu0 0.0
        %795 = vmatpush.msra.mxu0 0.0
        %796 = vmatpush.msra.mxu0 0.0
        %797 = vmatpush.msra.mxu0 0.0
        %798 = vmatpush.msra.mxu0 0.0
        %799 = vmatpush.msra.mxu0 0.0
        %800 = vmatpush.msra.mxu0 0.0
        %801 = vmatpush.msra.mxu0 0.0
        %802 = vmatpush.msra.mxu0 0.0
        %803 = vmatpush.msra.mxu0 0.0
        %804 = vmatpush.msra.mxu0 %v764
        %805 = vmatpush.msra.mxu0 %v763
        %806 = vmatmul.f32.gmra.mxu0 %v785
        %v807 = vpop.f32.mrf.mxu0
        %v808 = vadd.f32 0.0, %v807
        %809 = vmatmul.f32.gmra.mxu0 %v788
        %v810 = vpop.f32.mrf.mxu0
        %v811 = vadd.f32 0.0, %v810
        %812 = vdwg.mxu0
        %v813 = vld [vmem:[%s9 + $0x10] sm:$0xff]
        %v814 = vld [vmem:[%s9 + $0x18] sm:$0xff]
        %v815 = vld [vmem:[#allocation7 + $0x80] sm:$0xff]
        %v816 = vld [vmem:[#allocation7 + $0x88] sm:$0xff]
        %v817 = vld [vmem:[#allocation7 + $0x90] sm:$0xff]
        %v818 = vld [vmem:[#allocation7 + $0x98] sm:$0xff]
        %v819 = vld [vmem:[#allocation7 + $0xa0] sm:$0xff]
        %v820 = vld [vmem:[#allocation7 + $0xa8] sm:$0xff]
        %v821 = vld [vmem:[#allocation7 + $0xb0] sm:$0xff]
        %v822 = vld [vmem:[#allocation7 + $0xb8] sm:$0xff]
        %v823 = vld [vmem:[#allocation7 + $0xc0] sm:$0xff]
        %v824 = vld [vmem:[#allocation7 + $0xc8] sm:$0xff]
        %v825 = vld [vmem:[#allocation7 + $0xd0] sm:$0xff]
        %v826 = vld [vmem:[#allocation7 + $0xd8] sm:$0xff]
        %v827 = vld [vmem:[#allocation7 + $0xe0] sm:$0xff]
        %v828 = vld [vmem:[#allocation7 + $0xe8] sm:$0xff]
        %v829 = vld [vmem:[#allocation7 + $0xf0] sm:$0xff]
        %v830 = vld [vmem:[#allocation7 + $0xf8] sm:$0xff]
        %v832 = vsel %vm783, %v813, 0
        %v835 = vsel %vm783, %v814, 0
        %837 = vmatpush.msra.mxu0 0.0
        %838 = vmatpush.msra.mxu0 0.0
        %839 = vmatpush.msra.mxu0 0.0
        %840 = vmatpush.msra.mxu0 0.0
        %841 = vmatpush.msra.mxu0 0.0
        %842 = vmatpush.msra.mxu0 0.0
        %843 = vmatpush.msra.mxu0 0.0
        %844 = vmatpush.msra.mxu0 0.0
        %845 = vmatpush.msra.mxu0 0.0
        %846 = vmatpush.msra.mxu0 0.0
        %847 = vmatpush.msra.mxu0 0.0
        %848 = vmatpush.msra.mxu0 0.0
        %849 = vmatpush.msra.mxu0 0.0
        %850 = vmatpush.msra.mxu0 0.0
        %851 = vmatpush.msra.mxu0 %v764
        %852 = vmatpush.msra.mxu0 %v763
        %853 = vmatmul.f32.gmra.mxu0 %v832
        %v854 = vpop.f32.mrf.mxu0
        %v855 = vadd.f32 0.0, %v854
        %856 = vmatmul.f32.gmra.mxu0 %v835
        %v857 = vpop.f32.mrf.mxu0
        %v858 = vadd.f32 0.0, %v857
        %859 = vdwg.mxu0
        %860 = vmatpush.msra.mxu0 %v830
        %861 = vmatpush.msra.mxu0 %v829
        %862 = vmatpush.msra.mxu0 %v828
        %863 = vmatpush.msra.mxu0 %v827
        %864 = vmatpush.msra.mxu0 %v826
        %865 = vmatpush.msra.mxu0 %v825
        %866 = vmatpush.msra.mxu0 %v824
        %867 = vmatpush.msra.mxu0 %v823
        %868 = vmatpush.msra.mxu0 %v822
        %869 = vmatpush.msra.mxu0 %v821
        %870 = vmatpush.msra.mxu0 %v820
        %871 = vmatpush.msra.mxu0 %v819
        %872 = vmatpush.msra.mxu0 %v818
        %873 = vmatpush.msra.mxu0 %v817
        %874 = vmatpush.msra.mxu0 %v816
        %875 = vmatpush.msra.mxu0 %v815
        %876 = vmatmul.f32.gmra.mxu0 %v855
        %v877 = vpop.f32.mrf.mxu0
        %v878 = vadd.f32 0.0, %v877
        %879 = vmatmul.f32.gmra.mxu0 %v858
        %v880 = vpop.f32.mrf.mxu0
        %v881 = vadd.f32 0.0, %v880
        %882 = vdwg.mxu0
        %883 = vmatpush.msra.mxu0 %v782
        %884 = vmatpush.msra.mxu0 %v781
        %885 = vmatpush.msra.mxu0 %v780
        %886 = vmatpush.msra.mxu0 %v779
        %887 = vmatpush.msra.mxu0 %v778
        %888 = vmatpush.msra.mxu0 %v777
        %889 = vmatpush.msra.mxu0 %v776
        %890 = vmatpush.msra.mxu0 %v775
        %891 = vmatpush.msra.mxu0 %v774
        %892 = vmatpush.msra.mxu0 %v773
        %893 = vmatpush.msra.mxu0 %v772
        %894 = vmatpush.msra.mxu0 %v771
        %895 = vmatpush.msra.mxu0 %v770
        %896 = vmatpush.msra.mxu0 %v769
        %897 = vmatpush.msra.mxu0 %v768
        %898 = vmatpush.msra.mxu0 %v767
        %899 = vmatmul.f32.gmra.mxu0 %v808
        %v900 = vpop.f32.mrf.mxu0
        %v901 = vadd.f32 %v878, %v900
        %902 = vmatmul.f32.gmra.mxu0 %v811
        %v903 = vpop.f32.mrf.mxu0
        %v904 = vadd.f32 %v881, %v903
        %905 = vdwg.mxu0
        %v906 = vld [vmem:[%s9 + $0x20] sm:$0xff]
        %v907 = vld [vmem:[%s9 + $0x28] sm:$0xff]
        %v908 = vld [vmem:[#allocation7 + $0x100] sm:$0xff]
        %v909 = vld [vmem:[#allocation7 + $0x108] sm:$0xff]
        %v910 = vld [vmem:[#allocation7 + $0x110] sm:$0xff]
        %v911 = vld [vmem:[#allocation7 + $0x118] sm:$0xff]
        %v912 = vld [vmem:[#allocation7 + $0x120] sm:$0xff]
        %v913 = vld [vmem:[#allocation7 + $0x128] sm:$0xff]
        %v914 = vld [vmem:[#allocation7 + $0x130] sm:$0xff]
        %v915 = vld [vmem:[#allocation7 + $0x138] sm:$0xff]
        %v916 = vld [vmem:[#allocation7 + $0x140] sm:$0xff]
        %v917 = vld [vmem:[#allocation7 + $0x148] sm:$0xff]
        %v918 = vld [vmem:[#allocation7 + $0x150] sm:$0xff]
        %v919 = vld [vmem:[#allocation7 + $0x158] sm:$0xff]
        %v920 = vld [vmem:[#allocation7 + $0x160] sm:$0xff]
        %v921 = vld [vmem:[#allocation7 + $0x168] sm:$0xff]
        %v922 = vld [vmem:[#allocation7 + $0x170] sm:$0xff]
        %v923 = vld [vmem:[#allocation7 + $0x178] sm:$0xff]
        %v925 = vsel %vm783, %v906, 0
        %v928 = vsel %vm783, %v907, 0
        %930 = vmatpush.msra.mxu0 0.0
        %931 = vmatpush.msra.mxu0 0.0
        %932 = vmatpush.msra.mxu0 0.0
        %933 = vmatpush.msra.mxu0 0.0
        %934 = vmatpush.msra.mxu0 0.0
        %935 = vmatpush.msra.mxu0 0.0
        %936 = vmatpush.msra.mxu0 0.0
        %937 = vmatpush.msra.mxu0 0.0
        %938 = vmatpush.msra.mxu0 0.0
        %939 = vmatpush.msra.mxu0 0.0
        %940 = vmatpush.msra.mxu0 0.0
        %941 = vmatpush.msra.mxu0 0.0
        %942 = vmatpush.msra.mxu0 0.0
        %943 = vmatpush.msra.mxu0 0.0
        %944 = vmatpush.msra.mxu0 %v764
        %945 = vmatpush.msra.mxu0 %v763
        %946 = vmatmul.f32.gmra.mxu0 %v925
        %v947 = vpop.f32.mrf.mxu0
        %v948 = vadd.f32 0.0, %v947
        %949 = vmatmul.f32.gmra.mxu0 %v928
        %v950 = vpop.f32.mrf.mxu0
        %v951 = vadd.f32 0.0, %v950
        %952 = vdwg.mxu0
        %953 = vmatpush.msra.mxu0 %v923
        %954 = vmatpush.msra.mxu0 %v922
        %955 = vmatpush.msra.mxu0 %v921
        %956 = vmatpush.msra.mxu0 %v920
        %957 = vmatpush.msra.mxu0 %v919
        %958 = vmatpush.msra.mxu0 %v918
        %959 = vmatpush.msra.mxu0 %v917
        %960 = vmatpush.msra.mxu0 %v916
        %961 = vmatpush.msra.mxu0 %v915
        %962 = vmatpush.msra.mxu0 %v914
        %963 = vmatpush.msra.mxu0 %v913
        %964 = vmatpush.msra.mxu0 %v912
        %965 = vmatpush.msra.mxu0 %v911
        %966 = vmatpush.msra.mxu0 %v910
        %967 = vmatpush.msra.mxu0 %v909
        %968 = vmatpush.msra.mxu0 %v908
        %969 = vmatmul.f32.gmra.mxu0 %v948
        %v970 = vpop.f32.mrf.mxu0
        %v971 = vadd.f32 0.0, %v970
        %972 = vmatmul.f32.gmra.mxu0 %v951
        %v973 = vpop.f32.mrf.mxu0
        %v974 = vadd.f32 0.0, %v973
        %975 = vdwg.mxu0
        %v976 = vadd.f32 %v901, %v971
        %v977 = vadd.f32 %v904, %v974
        %v978 = vld [vmem:[#allocation9 + $0x2] sm:$0x1]
        %v979 = vperm.slane %v978, 0
        %v980 = vadd.f32 %v976, %v979
        %v981 = vadd.f32 %v977, %v979
        %v982 = vmax.f32 %v980, 0.0
        %v983 = vmax.f32 %v981, 0.0
        %v984 = vld [vmem:[%s9 + $0x30] sm:$0xff]
        %v985 = vld [vmem:[%s9 + $0x38] sm:$0xff]
        %v986 = vld [vmem:[#allocation7 + $0x180] sm:$0xff]
        %v987 = vld [vmem:[#allocation7 + $0x188] sm:$0xff]
        %v988 = vld [vmem:[#allocation7 + $0x190] sm:$0xff]
        %v989 = vld [vmem:[#allocation7 + $0x198] sm:$0xff]
        %v990 = vld [vmem:[#allocation7 + $0x1a0] sm:$0xff]
        %v991 = vld [vmem:[#allocation7 + $0x1a8] sm:$0xff]
        %v992 = vld [vmem:[#allocation7 + $0x1b0] sm:$0xff]
        %v993 = vld [vmem:[#allocation7 + $0x1b8] sm:$0xff]
        %v994 = vld [vmem:[#allocation7 + $0x1c0] sm:$0xff]
        %v995 = vld [vmem:[#allocation7 + $0x1c8] sm:$0xff]
        %v996 = vld [vmem:[#allocation7 + $0x1d0] sm:$0xff]
        %v997 = vld [vmem:[#allocation7 + $0x1d8] sm:$0xff]
        %v998 = vld [vmem:[#allocation7 + $0x1e0] sm:$0xff]
        %v999 = vld [vmem:[#allocation7 + $0x1e8] sm:$0xff]
        %v1000 = vld [vmem:[#allocation7 + $0x1f0] sm:$0xff]
        %v1001 = vld [vmem:[#allocation7 + $0x1f8] sm:$0xff]
        %v1003 = vsel %vm783, %v984, 0
        %v1006 = vsel %vm783, %v985, 0
        %1008 = vmatpush.msra.mxu0 0.0
        %1009 = vmatpush.msra.mxu0 0.0
        %1010 = vmatpush.msra.mxu0 0.0
        %1011 = vmatpush.msra.mxu0 0.0
        %1012 = vmatpush.msra.mxu0 0.0
        %1013 = vmatpush.msra.mxu0 0.0
        %1014 = vmatpush.msra.mxu0 0.0
        %1015 = vmatpush.msra.mxu0 0.0
        %1016 = vmatpush.msra.mxu0 0.0
        %1017 = vmatpush.msra.mxu0 0.0
        %1018 = vmatpush.msra.mxu0 0.0
        %1019 = vmatpush.msra.mxu0 0.0
        %1020 = vmatpush.msra.mxu0 0.0
        %1021 = vmatpush.msra.mxu0 0.0
        %1022 = vmatpush.msra.mxu0 %v983
        %1023 = vmatpush.msra.mxu0 %v982
        %1024 = vmatmul.f32.gmra.mxu0 %v1003
        %v1025 = vpop.f32.mrf.mxu0
        %v1026 = vadd.f32 0.0, %v1025
        %1027 = vmatmul.f32.gmra.mxu0 %v1006
        %v1028 = vpop.f32.mrf.mxu0
        %v1029 = vadd.f32 0.0, %v1028
        %1030 = vdwg.mxu0
        %v1031 = vld [vmem:[%s9 + $0x40] sm:$0xff]
        %v1032 = vld [vmem:[%s9 + $0x48] sm:$0xff]
        %v1033 = vld [vmem:[#allocation7 + $0x200] sm:$0xff]
        %v1034 = vld [vmem:[#allocation7 + $0x208] sm:$0xff]
        %v1035 = vld [vmem:[#allocation7 + $0x210] sm:$0xff]
        %v1036 = vld [vmem:[#allocation7 + $0x218] sm:$0xff]
        %v1037 = vld [vmem:[#allocation7 + $0x220] sm:$0xff]
        %v1038 = vld [vmem:[#allocation7 + $0x228] sm:$0xff]
        %v1039 = vld [vmem:[#allocation7 + $0x230] sm:$0xff]
        %v1040 = vld [vmem:[#allocation7 + $0x238] sm:$0xff]
        %v1041 = vld [vmem:[#allocation7 + $0x240] sm:$0xff]
        %v1042 = vld [vmem:[#allocation7 + $0x248] sm:$0xff]
        %v1043 = vld [vmem:[#allocation7 + $0x250] sm:$0xff]
        %v1044 = vld [vmem:[#allocation7 + $0x258] sm:$0xff]
        %v1045 = vld [vmem:[#allocation7 + $0x260] sm:$0xff]
        %v1046 = vld [vmem:[#allocation7 + $0x268] sm:$0xff]
        %v1047 = vld [vmem:[#allocation7 + $0x270] sm:$0xff]
        %v1048 = vld [vmem:[#allocation7 + $0x278] sm:$0xff]
        %v1050 = vsel %vm783, %v1031, 0
        %v1053 = vsel %vm783, %v1032, 0
        %1055 = vmatpush.msra.mxu0 0.0
        %1056 = vmatpush.msra.mxu0 0.0
        %1057 = vmatpush.msra.mxu0 0.0
        %1058 = vmatpush.msra.mxu0 0.0
        %1059 = vmatpush.msra.mxu0 0.0
        %1060 = vmatpush.msra.mxu0 0.0
        %1061 = vmatpush.msra.mxu0 0.0
        %1062 = vmatpush.msra.mxu0 0.0
        %1063 = vmatpush.msra.mxu0 0.0
        %1064 = vmatpush.msra.mxu0 0.0
        %1065 = vmatpush.msra.mxu0 0.0
        %1066 = vmatpush.msra.mxu0 0.0
        %1067 = vmatpush.msra.mxu0 0.0
        %1068 = vmatpush.msra.mxu0 0.0
        %1069 = vmatpush.msra.mxu0 %v983
        %1070 = vmatpush.msra.mxu0 %v982
        %1071 = vmatmul.f32.gmra.mxu0 %v1050
        %v1072 = vpop.f32.mrf.mxu0
        %v1073 = vadd.f32 0.0, %v1072
        %1074 = vmatmul.f32.gmra.mxu0 %v1053
        %v1075 = vpop.f32.mrf.mxu0
        %v1076 = vadd.f32 0.0, %v1075
        %1077 = vdwg.mxu0
        %1078 = vmatpush.msra.mxu0 %v1048
        %1079 = vmatpush.msra.mxu0 %v1047
        %1080 = vmatpush.msra.mxu0 %v1046
        %1081 = vmatpush.msra.mxu0 %v1045
        %1082 = vmatpush.msra.mxu0 %v1044
        %1083 = vmatpush.msra.mxu0 %v1043
        %1084 = vmatpush.msra.mxu0 %v1042
        %1085 = vmatpush.msra.mxu0 %v1041
        %1086 = vmatpush.msra.mxu0 %v1040
        %1087 = vmatpush.msra.mxu0 %v1039
        %1088 = vmatpush.msra.mxu0 %v1038
        %1089 = vmatpush.msra.mxu0 %v1037
        %1090 = vmatpush.msra.mxu0 %v1036
        %1091 = vmatpush.msra.mxu0 %v1035
        %1092 = vmatpush.msra.mxu0 %v1034
        %1093 = vmatpush.msra.mxu0 %v1033
        %1094 = vmatmul.f32.gmra.mxu0 %v1073
        %v1095 = vpop.f32.mrf.mxu0
        %v1096 = vadd.f32 0.0, %v1095
        %1097 = vmatmul.f32.gmra.mxu0 %v1076
        %v1098 = vpop.f32.mrf.mxu0
        %v1099 = vadd.f32 0.0, %v1098
        %1100 = vdwg.mxu0
        %1101 = vmatpush.msra.mxu0 %v1001
        %1102 = vmatpush.msra.mxu0 %v1000
        %1103 = vmatpush.msra.mxu0 %v999
        %1104 = vmatpush.msra.mxu0 %v998
        %1105 = vmatpush.msra.mxu0 %v997
        %1106 = vmatpush.msra.mxu0 %v996
        %1107 = vmatpush.msra.mxu0 %v995
        %1108 = vmatpush.msra.mxu0 %v994
        %1109 = vmatpush.msra.mxu0 %v993
        %1110 = vmatpush.msra.mxu0 %v992
        %1111 = vmatpush.msra.mxu0 %v991
        %1112 = vmatpush.msra.mxu0 %v990
        %1113 = vmatpush.msra.mxu0 %v989
        %1114 = vmatpush.msra.mxu0 %v988
        %1115 = vmatpush.msra.mxu0 %v987
        %1116 = vmatpush.msra.mxu0 %v986
        %1117 = vmatmul.f32.gmra.mxu0 %v1026
        %v1118 = vpop.f32.mrf.mxu0
        %v1119 = vadd.f32 %v1096, %v1118
        %1120 = vmatmul.f32.gmra.mxu0 %v1029
        %v1121 = vpop.f32.mrf.mxu0
        %v1122 = vadd.f32 %v1099, %v1121
        %1123 = vdwg.mxu0
        %v1124 = vld [vmem:[%s9 + $0x50] sm:$0xff]
        %v1125 = vld [vmem:[%s9 + $0x58] sm:$0xff]
        %v1126 = vld [vmem:[#allocation7 + $0x280] sm:$0xff]
        %v1127 = vld [vmem:[#allocation7 + $0x288] sm:$0xff]
        %v1128 = vld [vmem:[#allocation7 + $0x290] sm:$0xff]
        %v1129 = vld [vmem:[#allocation7 + $0x298] sm:$0xff]
        %v1130 = vld [vmem:[#allocation7 + $0x2a0] sm:$0xff]
        %v1131 = vld [vmem:[#allocation7 + $0x2a8] sm:$0xff]
        %v1132 = vld [vmem:[#allocation7 + $0x2b0] sm:$0xff]
        %v1133 = vld [vmem:[#allocation7 + $0x2b8] sm:$0xff]
        %v1134 = vld [vmem:[#allocation7 + $0x2c0] sm:$0xff]
        %v1135 = vld [vmem:[#allocation7 + $0x2c8] sm:$0xff]
        %v1136 = vld [vmem:[#allocation7 + $0x2d0] sm:$0xff]
        %v1137 = vld [vmem:[#allocation7 + $0x2d8] sm:$0xff]
        %v1138 = vld [vmem:[#allocation7 + $0x2e0] sm:$0xff]
        %v1139 = vld [vmem:[#allocation7 + $0x2e8] sm:$0xff]
        %v1140 = vld [vmem:[#allocation7 + $0x2f0] sm:$0xff]
        %v1141 = vld [vmem:[#allocation7 + $0x2f8] sm:$0xff]
        %v1143 = vsel %vm783, %v1124, 0
        %v1146 = vsel %vm783, %v1125, 0
        %1148 = vmatpush.msra.mxu0 0.0
        %1149 = vmatpush.msra.mxu0 0.0
        %1150 = vmatpush.msra.mxu0 0.0
        %1151 = vmatpush.msra.mxu0 0.0
        %1152 = vmatpush.msra.mxu0 0.0
        %1153 = vmatpush.msra.mxu0 0.0
        %1154 = vmatpush.msra.mxu0 0.0
        %1155 = vmatpush.msra.mxu0 0.0
        %1156 = vmatpush.msra.mxu0 0.0
        %1157 = vmatpush.msra.mxu0 0.0
        %1158 = vmatpush.msra.mxu0 0.0
        %1159 = vmatpush.msra.mxu0 0.0
        %1160 = vmatpush.msra.mxu0 0.0
        %1161 = vmatpush.msra.mxu0 0.0
        %1162 = vmatpush.msra.mxu0 %v983
        %1163 = vmatpush.msra.mxu0 %v982
        %1164 = vmatmul.f32.gmra.mxu0 %v1143
        %v1165 = vpop.f32.mrf.mxu0
        %v1166 = vadd.f32 0.0, %v1165
        %1167 = vmatmul.f32.gmra.mxu0 %v1146
        %v1168 = vpop.f32.mrf.mxu0
        %v1169 = vadd.f32 0.0, %v1168
        %1170 = vdwg.mxu0
        %1171 = vmatpush.msra.mxu0 %v1141
        %1172 = vmatpush.msra.mxu0 %v1140
        %1173 = vmatpush.msra.mxu0 %v1139
        %1174 = vmatpush.msra.mxu0 %v1138
        %1175 = vmatpush.msra.mxu0 %v1137
        %1176 = vmatpush.msra.mxu0 %v1136
        %1177 = vmatpush.msra.mxu0 %v1135
        %1178 = vmatpush.msra.mxu0 %v1134
        %1179 = vmatpush.msra.mxu0 %v1133
        %1180 = vmatpush.msra.mxu0 %v1132
        %1181 = vmatpush.msra.mxu0 %v1131
        %1182 = vmatpush.msra.mxu0 %v1130
        %1183 = vmatpush.msra.mxu0 %v1129
        %1184 = vmatpush.msra.mxu0 %v1128
        %1185 = vmatpush.msra.mxu0 %v1127
        %1186 = vmatpush.msra.mxu0 %v1126
        %1187 = vmatmul.f32.gmra.mxu0 %v1166
        %v1188 = vpop.f32.mrf.mxu0
        %v1189 = vadd.f32 0.0, %v1188
        %1190 = vmatmul.f32.gmra.mxu0 %v1169
        %v1191 = vpop.f32.mrf.mxu0
        %v1192 = vadd.f32 0.0, %v1191
        %1193 = vdwg.mxu0
        %v1194 = vadd.f32 %v1119, %v1189
        %v1195 = vadd.f32 %v1122, %v1192
        %v1196 = vld [vmem:[#allocation9 + $0x3] sm:$0x1]
        %v1197 = vperm.slane %v1196, 0
        %v1198 = vadd.f32 %v1194, %v1197
        %v1199 = vadd.f32 %v1195, %v1197
        %v1200 = vmax.f32 %v672, 0.0
        %v1201 = vmax.f32 %v675, 0.0
        %v1202 = vld [vmem:[%s9 + $0x60] sm:$0xff]
        %v1203 = vld [vmem:[%s9 + $0x68] sm:$0xff]
        %v1204 = vld [vmem:[#allocation7 + $0x300] sm:$0xff]
        %v1205 = vld [vmem:[#allocation7 + $0x308] sm:$0xff]
        %v1206 = vld [vmem:[#allocation7 + $0x310] sm:$0xff]
        %v1207 = vld [vmem:[#allocation7 + $0x318] sm:$0xff]
        %v1208 = vld [vmem:[#allocation7 + $0x320] sm:$0xff]
        %v1209 = vld [vmem:[#allocation7 + $0x328] sm:$0xff]
        %v1210 = vld [vmem:[#allocation7 + $0x330] sm:$0xff]
        %v1211 = vld [vmem:[#allocation7 + $0x338] sm:$0xff]
        %v1212 = vld [vmem:[#allocation7 + $0x340] sm:$0xff]
        %v1213 = vld [vmem:[#allocation7 + $0x348] sm:$0xff]
        %v1214 = vld [vmem:[#allocation7 + $0x350] sm:$0xff]
        %v1215 = vld [vmem:[#allocation7 + $0x358] sm:$0xff]
        %v1216 = vld [vmem:[#allocation7 + $0x360] sm:$0xff]
        %v1217 = vld [vmem:[#allocation7 + $0x368] sm:$0xff]
        %v1218 = vld [vmem:[#allocation7 + $0x370] sm:$0xff]
        %v1219 = vld [vmem:[#allocation7 + $0x378] sm:$0xff]
        %v1221 = vsel %vm783, %v1202, 0
        %v1224 = vsel %vm783, %v1203, 0
        %1226 = vmatpush.msra.mxu0 0.0
        %1227 = vmatpush.msra.mxu0 0.0
        %1228 = vmatpush.msra.mxu0 0.0
        %1229 = vmatpush.msra.mxu0 0.0
        %1230 = vmatpush.msra.mxu0 0.0
        %1231 = vmatpush.msra.mxu0 0.0
        %1232 = vmatpush.msra.mxu0 0.0
        %1233 = vmatpush.msra.mxu0 0.0
        %1234 = vmatpush.msra.mxu0 0.0
        %1235 = vmatpush.msra.mxu0 0.0
        %1236 = vmatpush.msra.mxu0 0.0
        %1237 = vmatpush.msra.mxu0 0.0
        %1238 = vmatpush.msra.mxu0 0.0
        %1239 = vmatpush.msra.mxu0 0.0
        %1240 = vmatpush.msra.mxu0 %v1201
        %1241 = vmatpush.msra.mxu0 %v1200
        %1242 = vmatmul.f32.gmra.mxu0 %v1221
        %v1243 = vpop.f32.mrf.mxu0
        %v1244 = vadd.f32 0.0, %v1243
        %1245 = vmatmul.f32.gmra.mxu0 %v1224
        %v1246 = vpop.f32.mrf.mxu0
        %v1247 = vadd.f32 0.0, %v1246
        %1248 = vdwg.mxu0
        %v1249 = vld [vmem:[%s9 + $0x70] sm:$0xff]
        %v1250 = vld [vmem:[%s9 + $0x78] sm:$0xff]
        %v1251 = vld [vmem:[#allocation7 + $0x380] sm:$0xff]
        %v1252 = vld [vmem:[#allocation7 + $0x388] sm:$0xff]
        %v1253 = vld [vmem:[#allocation7 + $0x390] sm:$0xff]
        %v1254 = vld [vmem:[#allocation7 + $0x398] sm:$0xff]
        %v1255 = vld [vmem:[#allocation7 + $0x3a0] sm:$0xff]
        %v1256 = vld [vmem:[#allocation7 + $0x3a8] sm:$0xff]
        %v1257 = vld [vmem:[#allocation7 + $0x3b0] sm:$0xff]
        %v1258 = vld [vmem:[#allocation7 + $0x3b8] sm:$0xff]
        %v1259 = vld [vmem:[#allocation7 + $0x3c0] sm:$0xff]
        %v1260 = vld [vmem:[#allocation7 + $0x3c8] sm:$0xff]
        %v1261 = vld [vmem:[#allocation7 + $0x3d0] sm:$0xff]
        %v1262 = vld [vmem:[#allocation7 + $0x3d8] sm:$0xff]
        %v1263 = vld [vmem:[#allocation7 + $0x3e0] sm:$0xff]
        %v1264 = vld [vmem:[#allocation7 + $0x3e8] sm:$0xff]
        %v1265 = vld [vmem:[#allocation7 + $0x3f0] sm:$0xff]
        %v1266 = vld [vmem:[#allocation7 + $0x3f8] sm:$0xff]
        %v1268 = vsel %vm783, %v1249, 0
        %v1271 = vsel %vm783, %v1250, 0
        %1273 = vmatpush.msra.mxu0 0.0
        %1274 = vmatpush.msra.mxu0 0.0
        %1275 = vmatpush.msra.mxu0 0.0
        %1276 = vmatpush.msra.mxu0 0.0
        %1277 = vmatpush.msra.mxu0 0.0
        %1278 = vmatpush.msra.mxu0 0.0
        %1279 = vmatpush.msra.mxu0 0.0
        %1280 = vmatpush.msra.mxu0 0.0
        %1281 = vmatpush.msra.mxu0 0.0
        %1282 = vmatpush.msra.mxu0 0.0
        %1283 = vmatpush.msra.mxu0 0.0
        %1284 = vmatpush.msra.mxu0 0.0
        %1285 = vmatpush.msra.mxu0 0.0
        %1286 = vmatpush.msra.mxu0 0.0
        %1287 = vmatpush.msra.mxu0 %v1201
        %1288 = vmatpush.msra.mxu0 %v1200
        %1289 = vmatmul.f32.gmra.mxu0 %v1268
        %v1290 = vpop.f32.mrf.mxu0
        %v1291 = vadd.f32 0.0, %v1290
        %1292 = vmatmul.f32.gmra.mxu0 %v1271
        %v1293 = vpop.f32.mrf.mxu0
        %v1294 = vadd.f32 0.0, %v1293
        %1295 = vdwg.mxu0
        %1296 = vmatpush.msra.mxu0 %v1266
        %1297 = vmatpush.msra.mxu0 %v1265
        %1298 = vmatpush.msra.mxu0 %v1264
        %1299 = vmatpush.msra.mxu0 %v1263
        %1300 = vmatpush.msra.mxu0 %v1262
        %1301 = vmatpush.msra.mxu0 %v1261
        %1302 = vmatpush.msra.mxu0 %v1260
        %1303 = vmatpush.msra.mxu0 %v1259
        %1304 = vmatpush.msra.mxu0 %v1258
        %1305 = vmatpush.msra.mxu0 %v1257
        %1306 = vmatpush.msra.mxu0 %v1256
        %1307 = vmatpush.msra.mxu0 %v1255
        %1308 = vmatpush.msra.mxu0 %v1254
        %1309 = vmatpush.msra.mxu0 %v1253
        %1310 = vmatpush.msra.mxu0 %v1252
        %1311 = vmatpush.msra.mxu0 %v1251
        %1312 = vmatmul.f32.gmra.mxu0 %v1291
        %v1313 = vpop.f32.mrf.mxu0
        %v1314 = vadd.f32 0.0, %v1313
        %1315 = vmatmul.f32.gmra.mxu0 %v1294
        %v1316 = vpop.f32.mrf.mxu0
        %v1317 = vadd.f32 0.0, %v1316
        %1318 = vdwg.mxu0
        %1319 = vmatpush.msra.mxu0 %v1219
        %1320 = vmatpush.msra.mxu0 %v1218
        %1321 = vmatpush.msra.mxu0 %v1217
        %1322 = vmatpush.msra.mxu0 %v1216
        %1323 = vmatpush.msra.mxu0 %v1215
        %1324 = vmatpush.msra.mxu0 %v1214
        %1325 = vmatpush.msra.mxu0 %v1213
        %1326 = vmatpush.msra.mxu0 %v1212
        %1327 = vmatpush.msra.mxu0 %v1211
        %1328 = vmatpush.msra.mxu0 %v1210
        %1329 = vmatpush.msra.mxu0 %v1209
        %1330 = vmatpush.msra.mxu0 %v1208
        %1331 = vmatpush.msra.mxu0 %v1207
        %1332 = vmatpush.msra.mxu0 %v1206
        %1333 = vmatpush.msra.mxu0 %v1205
        %1334 = vmatpush.msra.mxu0 %v1204
        %1335 = vmatmul.f32.gmra.mxu0 %v1244
        %v1336 = vpop.f32.mrf.mxu0
        %v1337 = vadd.f32 %v1314, %v1336
        %1338 = vmatmul.f32.gmra.mxu0 %v1247
        %v1339 = vpop.f32.mrf.mxu0
        %v1340 = vadd.f32 %v1317, %v1339
        %1341 = vdwg.mxu0
        %v1342 = vld [vmem:[%s9 + $0x80] sm:$0xff]
        %v1343 = vld [vmem:[%s9 + $0x88] sm:$0xff]
        %v1344 = vld [vmem:[#allocation7 + $0x400] sm:$0xff]
        %v1345 = vld [vmem:[#allocation7 + $0x408] sm:$0xff]
        %v1346 = vld [vmem:[#allocation7 + $0x410] sm:$0xff]
        %v1347 = vld [vmem:[#allocation7 + $0x418] sm:$0xff]
        %v1348 = vld [vmem:[#allocation7 + $0x420] sm:$0xff]
        %v1349 = vld [vmem:[#allocation7 + $0x428] sm:$0xff]
        %v1350 = vld [vmem:[#allocation7 + $0x430] sm:$0xff]
        %v1351 = vld [vmem:[#allocation7 + $0x438] sm:$0xff]
        %v1352 = vld [vmem:[#allocation7 + $0x440] sm:$0xff]
        %v1353 = vld [vmem:[#allocation7 + $0x448] sm:$0xff]
        %v1354 = vld [vmem:[#allocation7 + $0x450] sm:$0xff]
        %v1355 = vld [vmem:[#allocation7 + $0x458] sm:$0xff]
        %v1356 = vld [vmem:[#allocation7 + $0x460] sm:$0xff]
        %v1357 = vld [vmem:[#allocation7 + $0x468] sm:$0xff]
        %v1358 = vld [vmem:[#allocation7 + $0x470] sm:$0xff]
        %v1359 = vld [vmem:[#allocation7 + $0x478] sm:$0xff]
        %v1361 = vsel %vm783, %v1342, 0
        %v1364 = vsel %vm783, %v1343, 0
        %1366 = vmatpush.msra.mxu0 0.0
        %1367 = vmatpush.msra.mxu0 0.0
        %1368 = vmatpush.msra.mxu0 0.0
        %1369 = vmatpush.msra.mxu0 0.0
        %1370 = vmatpush.msra.mxu0 0.0
        %1371 = vmatpush.msra.mxu0 0.0
        %1372 = vmatpush.msra.mxu0 0.0
        %1373 = vmatpush.msra.mxu0 0.0
        %1374 = vmatpush.msra.mxu0 0.0
        %1375 = vmatpush.msra.mxu0 0.0
        %1376 = vmatpush.msra.mxu0 0.0
        %1377 = vmatpush.msra.mxu0 0.0
        %1378 = vmatpush.msra.mxu0 0.0
        %1379 = vmatpush.msra.mxu0 0.0
        %1380 = vmatpush.msra.mxu0 %v1201
        %1381 = vmatpush.msra.mxu0 %v1200
        %1382 = vmatmul.f32.gmra.mxu0 %v1361
        %v1383 = vpop.f32.mrf.mxu0
        %v1384 = vadd.f32 0.0, %v1383
        %1385 = vmatmul.f32.gmra.mxu0 %v1364
        %v1386 = vpop.f32.mrf.mxu0
        %v1387 = vadd.f32 0.0, %v1386
        %1388 = vdwg.mxu0
        %1389 = vmatpush.msra.mxu0 %v1359
        %1390 = vmatpush.msra.mxu0 %v1358
        %1391 = vmatpush.msra.mxu0 %v1357
        %1392 = vmatpush.msra.mxu0 %v1356
        %1393 = vmatpush.msra.mxu0 %v1355
        %1394 = vmatpush.msra.mxu0 %v1354
        %1395 = vmatpush.msra.mxu0 %v1353
        %1396 = vmatpush.msra.mxu0 %v1352
        %1397 = vmatpush.msra.mxu0 %v1351
        %1398 = vmatpush.msra.mxu0 %v1350
        %1399 = vmatpush.msra.mxu0 %v1349
        %1400 = vmatpush.msra.mxu0 %v1348
        %1401 = vmatpush.msra.mxu0 %v1347
        %1402 = vmatpush.msra.mxu0 %v1346
        %1403 = vmatpush.msra.mxu0 %v1345
        %1404 = vmatpush.msra.mxu0 %v1344
        %1405 = vmatmul.f32.gmra.mxu0 %v1384
        %v1406 = vpop.f32.mrf.mxu0
        %v1407 = vadd.f32 0.0, %v1406
        %1408 = vmatmul.f32.gmra.mxu0 %v1387
        %v1409 = vpop.f32.mrf.mxu0
        %v1410 = vadd.f32 0.0, %v1409
        %1411 = vdwg.mxu0
        %v1412 = vadd.f32 %v1337, %v1407
        %v1413 = vadd.f32 %v1340, %v1410
        %v1414 = vld [vmem:[%s9 + $0x90] sm:$0xff]
        %v1415 = vld [vmem:[%s9 + $0x98] sm:$0xff]
        %v1416 = vld [vmem:[#allocation7 + $0x480] sm:$0xff]
        %v1417 = vld [vmem:[#allocation7 + $0x488] sm:$0xff]
        %v1418 = vld [vmem:[#allocation7 + $0x490] sm:$0xff]
        %v1419 = vld [vmem:[#allocation7 + $0x498] sm:$0xff]
        %v1420 = vld [vmem:[#allocation7 + $0x4a0] sm:$0xff]
        %v1421 = vld [vmem:[#allocation7 + $0x4a8] sm:$0xff]
        %v1422 = vld [vmem:[#allocation7 + $0x4b0] sm:$0xff]
        %v1423 = vld [vmem:[#allocation7 + $0x4b8] sm:$0xff]
        %v1424 = vld [vmem:[#allocation7 + $0x4c0] sm:$0xff]
        %v1425 = vld [vmem:[#allocation7 + $0x4c8] sm:$0xff]
        %v1426 = vld [vmem:[#allocation7 + $0x4d0] sm:$0xff]
        %v1427 = vld [vmem:[#allocation7 + $0x4d8] sm:$0xff]
        %v1428 = vld [vmem:[#allocation7 + $0x4e0] sm:$0xff]
        %v1429 = vld [vmem:[#allocation7 + $0x4e8] sm:$0xff]
        %v1430 = vld [vmem:[#allocation7 + $0x4f0] sm:$0xff]
        %v1431 = vld [vmem:[#allocation7 + $0x4f8] sm:$0xff]
        %v1433 = vsel %vm783, %v1414, 0
        %v1436 = vsel %vm783, %v1415, 0
        %1438 = vmatpush.msra.mxu0 0.0
        %1439 = vmatpush.msra.mxu0 0.0
        %1440 = vmatpush.msra.mxu0 0.0
        %1441 = vmatpush.msra.mxu0 0.0
        %1442 = vmatpush.msra.mxu0 0.0
        %1443 = vmatpush.msra.mxu0 0.0
        %1444 = vmatpush.msra.mxu0 0.0
        %1445 = vmatpush.msra.mxu0 0.0
        %1446 = vmatpush.msra.mxu0 0.0
        %1447 = vmatpush.msra.mxu0 0.0
        %1448 = vmatpush.msra.mxu0 0.0
        %1449 = vmatpush.msra.mxu0 0.0
        %1450 = vmatpush.msra.mxu0 0.0
        %1451 = vmatpush.msra.mxu0 0.0
        %1452 = vmatpush.msra.mxu0 %v1201
        %1453 = vmatpush.msra.mxu0 %v1200
        %1454 = vmatmul.f32.gmra.mxu0 %v1433
        %v1455 = vpop.f32.mrf.mxu0
        %v1456 = vadd.f32 0.0, %v1455
        %1457 = vmatmul.f32.gmra.mxu0 %v1436
        %v1458 = vpop.f32.mrf.mxu0
        %v1459 = vadd.f32 0.0, %v1458
        %1460 = vdwg.mxu0
        %1461 = vmatpush.msra.mxu0 %v1431
        %1462 = vmatpush.msra.mxu0 %v1430
        %1463 = vmatpush.msra.mxu0 %v1429
        %1464 = vmatpush.msra.mxu0 %v1428
        %1465 = vmatpush.msra.mxu0 %v1427
        %1466 = vmatpush.msra.mxu0 %v1426
        %1467 = vmatpush.msra.mxu0 %v1425
        %1468 = vmatpush.msra.mxu0 %v1424
        %1469 = vmatpush.msra.mxu0 %v1423
        %1470 = vmatpush.msra.mxu0 %v1422
        %1471 = vmatpush.msra.mxu0 %v1421
        %1472 = vmatpush.msra.mxu0 %v1420
        %1473 = vmatpush.msra.mxu0 %v1419
        %1474 = vmatpush.msra.mxu0 %v1418
        %1475 = vmatpush.msra.mxu0 %v1417
        %1476 = vmatpush.msra.mxu0 %v1416
        %1477 = vmatmul.f32.gmra.mxu0 %v1456
        %v1478 = vpop.f32.mrf.mxu0
        %v1479 = vadd.f32 0.0, %v1478
        %1480 = vmatmul.f32.gmra.mxu0 %v1459
        %v1481 = vpop.f32.mrf.mxu0
        %v1482 = vadd.f32 0.0, %v1481
        %1483 = vdwg.mxu0
        %v1484 = vadd.f32 %v1412, %v1479
        %v1485 = vadd.f32 %v1413, %v1482
        %v1486 = vld [vmem:[%s9 + $0xa0] sm:$0xff]
        %v1487 = vld [vmem:[%s9 + $0xa8] sm:$0xff]
        %v1488 = vld [vmem:[#allocation7 + $0x500] sm:$0xff]
        %v1489 = vld [vmem:[#allocation7 + $0x508] sm:$0xff]
        %v1490 = vld [vmem:[#allocation7 + $0x510] sm:$0xff]
        %v1491 = vld [vmem:[#allocation7 + $0x518] sm:$0xff]
        %v1492 = vld [vmem:[#allocation7 + $0x520] sm:$0xff]
        %v1493 = vld [vmem:[#allocation7 + $0x528] sm:$0xff]
        %v1494 = vld [vmem:[#allocation7 + $0x530] sm:$0xff]
        %v1495 = vld [vmem:[#allocation7 + $0x538] sm:$0xff]
        %v1496 = vld [vmem:[#allocation7 + $0x540] sm:$0xff]
        %v1497 = vld [vmem:[#allocation7 + $0x548] sm:$0xff]
        %v1498 = vld [vmem:[#allocation7 + $0x550] sm:$0xff]
        %v1499 = vld [vmem:[#allocation7 + $0x558] sm:$0xff]
        %v1500 = vld [vmem:[#allocation7 + $0x560] sm:$0xff]
        %v1501 = vld [vmem:[#allocation7 + $0x568] sm:$0xff]
        %v1502 = vld [vmem:[#allocation7 + $0x570] sm:$0xff]
        %v1503 = vld [vmem:[#allocation7 + $0x578] sm:$0xff]
        %v1505 = vsel %vm783, %v1486, 0
        %v1508 = vsel %vm783, %v1487, 0
        %1510 = vmatpush.msra.mxu0 0.0
        %1511 = vmatpush.msra.mxu0 0.0
        %1512 = vmatpush.msra.mxu0 0.0
        %1513 = vmatpush.msra.mxu0 0.0
        %1514 = vmatpush.msra.mxu0 0.0
        %1515 = vmatpush.msra.mxu0 0.0
        %1516 = vmatpush.msra.mxu0 0.0
        %1517 = vmatpush.msra.mxu0 0.0
        %1518 = vmatpush.msra.mxu0 0.0
        %1519 = vmatpush.msra.mxu0 0.0
        %1520 = vmatpush.msra.mxu0 0.0
        %1521 = vmatpush.msra.mxu0 0.0
        %1522 = vmatpush.msra.mxu0 0.0
        %1523 = vmatpush.msra.mxu0 0.0
        %1524 = vmatpush.msra.mxu0 %v1201
        %1525 = vmatpush.msra.mxu0 %v1200
        %1526 = vmatmul.f32.gmra.mxu0 %v1505
        %v1527 = vpop.f32.mrf.mxu0
        %v1528 = vadd.f32 0.0, %v1527
        %1529 = vmatmul.f32.gmra.mxu0 %v1508
        %v1530 = vpop.f32.mrf.mxu0
        %v1531 = vadd.f32 0.0, %v1530
        %1532 = vdwg.mxu0
        %1533 = vmatpush.msra.mxu0 %v1503
        %1534 = vmatpush.msra.mxu0 %v1502
        %1535 = vmatpush.msra.mxu0 %v1501
        %1536 = vmatpush.msra.mxu0 %v1500
        %1537 = vmatpush.msra.mxu0 %v1499
        %1538 = vmatpush.msra.mxu0 %v1498
        %1539 = vmatpush.msra.mxu0 %v1497
        %1540 = vmatpush.msra.mxu0 %v1496
        %1541 = vmatpush.msra.mxu0 %v1495
        %1542 = vmatpush.msra.mxu0 %v1494
        %1543 = vmatpush.msra.mxu0 %v1493
        %1544 = vmatpush.msra.mxu0 %v1492
        %1545 = vmatpush.msra.mxu0 %v1491
        %1546 = vmatpush.msra.mxu0 %v1490
        %1547 = vmatpush.msra.mxu0 %v1489
        %1548 = vmatpush.msra.mxu0 %v1488
        %1549 = vmatmul.f32.gmra.mxu0 %v1528
        %v1550 = vpop.f32.mrf.mxu0
        %v1551 = vadd.f32 0.0, %v1550
        %1552 = vmatmul.f32.gmra.mxu0 %v1531
        %v1553 = vpop.f32.mrf.mxu0
        %v1554 = vadd.f32 0.0, %v1553
        %1555 = vdwg.mxu0
        %v1556 = vadd.f32 %v1484, %v1551
        %v1557 = vadd.f32 %v1485, %v1554
        %v1558 = vld [vmem:[#allocation9 + $0x4] sm:$0x1]
        %v1559 = vperm.slane %v1558, 0
        %v1560 = vadd.f32 %v1556, %v1559
        %v1561 = vadd.f32 %v1557, %v1559
        %v1562 = vmax.f32 %v1560, 0.0
        %v1563 = vmax.f32 %v1561, 0.0
        %v1564 = vld [vmem:[%s9 + $0xb0] sm:$0xff]
        %v1565 = vld [vmem:[%s9 + $0xb8] sm:$0xff]
        %v1566 = vld [vmem:[#allocation7 + $0x580] sm:$0xff]
        %v1567 = vld [vmem:[#allocation7 + $0x588] sm:$0xff]
        %v1568 = vld [vmem:[#allocation7 + $0x590] sm:$0xff]
        %v1569 = vld [vmem:[#allocation7 + $0x598] sm:$0xff]
        %v1570 = vld [vmem:[#allocation7 + $0x5a0] sm:$0xff]
        %v1571 = vld [vmem:[#allocation7 + $0x5a8] sm:$0xff]
        %v1572 = vld [vmem:[#allocation7 + $0x5b0] sm:$0xff]
        %v1573 = vld [vmem:[#allocation7 + $0x5b8] sm:$0xff]
        %v1574 = vld [vmem:[#allocation7 + $0x5c0] sm:$0xff]
        %v1575 = vld [vmem:[#allocation7 + $0x5c8] sm:$0xff]
        %v1576 = vld [vmem:[#allocation7 + $0x5d0] sm:$0xff]
        %v1577 = vld [vmem:[#allocation7 + $0x5d8] sm:$0xff]
        %v1578 = vld [vmem:[#allocation7 + $0x5e0] sm:$0xff]
        %v1579 = vld [vmem:[#allocation7 + $0x5e8] sm:$0xff]
        %v1580 = vld [vmem:[#allocation7 + $0x5f0] sm:$0xff]
        %v1581 = vld [vmem:[#allocation7 + $0x5f8] sm:$0xff]
        %v1583 = vsel %vm783, %v1564, 0
        %v1586 = vsel %vm783, %v1565, 0
        %1588 = vmatpush.msra.mxu0 0.0
        %1589 = vmatpush.msra.mxu0 0.0
        %1590 = vmatpush.msra.mxu0 0.0
        %1591 = vmatpush.msra.mxu0 0.0
        %1592 = vmatpush.msra.mxu0 0.0
        %1593 = vmatpush.msra.mxu0 0.0
        %1594 = vmatpush.msra.mxu0 0.0
        %1595 = vmatpush.msra.mxu0 0.0
        %1596 = vmatpush.msra.mxu0 0.0
        %1597 = vmatpush.msra.mxu0 0.0
        %1598 = vmatpush.msra.mxu0 0.0
        %1599 = vmatpush.msra.mxu0 0.0
        %1600 = vmatpush.msra.mxu0 0.0
        %1601 = vmatpush.msra.mxu0 0.0
        %1602 = vmatpush.msra.mxu0 %v1563
        %1603 = vmatpush.msra.mxu0 %v1562
        %1604 = vmatmul.f32.gmra.mxu0 %v1583
        %v1605 = vpop.f32.mrf.mxu0
        %v1606 = vadd.f32 0.0, %v1605
        %1607 = vmatmul.f32.gmra.mxu0 %v1586
        %v1608 = vpop.f32.mrf.mxu0
        %v1609 = vadd.f32 0.0, %v1608
        %1610 = vdwg.mxu0
        %v1611 = vld [vmem:[%s9 + $0xc0] sm:$0xff]
        %v1612 = vld [vmem:[%s9 + $0xc8] sm:$0xff]
        %v1613 = vld [vmem:[#allocation7 + $0x600] sm:$0xff]
        %v1614 = vld [vmem:[#allocation7 + $0x608] sm:$0xff]
        %v1615 = vld [vmem:[#allocation7 + $0x610] sm:$0xff]
        %v1616 = vld [vmem:[#allocation7 + $0x618] sm:$0xff]
        %v1617 = vld [vmem:[#allocation7 + $0x620] sm:$0xff]
        %v1618 = vld [vmem:[#allocation7 + $0x628] sm:$0xff]
        %v1619 = vld [vmem:[#allocation7 + $0x630] sm:$0xff]
        %v1620 = vld [vmem:[#allocation7 + $0x638] sm:$0xff]
        %v1621 = vld [vmem:[#allocation7 + $0x640] sm:$0xff]
        %v1622 = vld [vmem:[#allocation7 + $0x648] sm:$0xff]
        %v1623 = vld [vmem:[#allocation7 + $0x650] sm:$0xff]
        %v1624 = vld [vmem:[#allocation7 + $0x658] sm:$0xff]
        %v1625 = vld [vmem:[#allocation7 + $0x660] sm:$0xff]
        %v1626 = vld [vmem:[#allocation7 + $0x668] sm:$0xff]
        %v1627 = vld [vmem:[#allocation7 + $0x670] sm:$0xff]
        %v1628 = vld [vmem:[#allocation7 + $0x678] sm:$0xff]
        %v1630 = vsel %vm783, %v1611, 0
        %v1633 = vsel %vm783, %v1612, 0
        %1635 = vmatpush.msra.mxu0 0.0
        %1636 = vmatpush.msra.mxu0 0.0
        %1637 = vmatpush.msra.mxu0 0.0
        %1638 = vmatpush.msra.mxu0 0.0
        %1639 = vmatpush.msra.mxu0 0.0
        %1640 = vmatpush.msra.mxu0 0.0
        %1641 = vmatpush.msra.mxu0 0.0
        %1642 = vmatpush.msra.mxu0 0.0
        %1643 = vmatpush.msra.mxu0 0.0
        %1644 = vmatpush.msra.mxu0 0.0
        %1645 = vmatpush.msra.mxu0 0.0
        %1646 = vmatpush.msra.mxu0 0.0
        %1647 = vmatpush.msra.mxu0 0.0
        %1648 = vmatpush.msra.mxu0 0.0
        %1649 = vmatpush.msra.mxu0 %v1563
        %1650 = vmatpush.msra.mxu0 %v1562
        %1651 = vmatmul.f32.gmra.mxu0 %v1630
        %v1652 = vpop.f32.mrf.mxu0
        %v1653 = vadd.f32 0.0, %v1652
        %1654 = vmatmul.f32.gmra.mxu0 %v1633
        %v1655 = vpop.f32.mrf.mxu0
        %v1656 = vadd.f32 0.0, %v1655
        %1657 = vdwg.mxu0
        %1658 = vmatpush.msra.mxu0 %v1628
        %1659 = vmatpush.msra.mxu0 %v1627
        %1660 = vmatpush.msra.mxu0 %v1626
        %1661 = vmatpush.msra.mxu0 %v1625
        %1662 = vmatpush.msra.mxu0 %v1624
        %1663 = vmatpush.msra.mxu0 %v1623
        %1664 = vmatpush.msra.mxu0 %v1622
        %1665 = vmatpush.msra.mxu0 %v1621
        %1666 = vmatpush.msra.mxu0 %v1620
        %1667 = vmatpush.msra.mxu0 %v1619
        %1668 = vmatpush.msra.mxu0 %v1618
        %1669 = vmatpush.msra.mxu0 %v1617
        %1670 = vmatpush.msra.mxu0 %v1616
        %1671 = vmatpush.msra.mxu0 %v1615
        %1672 = vmatpush.msra.mxu0 %v1614
        %1673 = vmatpush.msra.mxu0 %v1613
        %1674 = vmatmul.f32.gmra.mxu0 %v1653
        %v1675 = vpop.f32.mrf.mxu0
        %v1676 = vadd.f32 0.0, %v1675
        %1677 = vmatmul.f32.gmra.mxu0 %v1656
        %v1678 = vpop.f32.mrf.mxu0
        %v1679 = vadd.f32 0.0, %v1678
        %1680 = vdwg.mxu0
        %1681 = vmatpush.msra.mxu0 %v1581
        %1682 = vmatpush.msra.mxu0 %v1580
        %1683 = vmatpush.msra.mxu0 %v1579
        %1684 = vmatpush.msra.mxu0 %v1578
        %1685 = vmatpush.msra.mxu0 %v1577
        %1686 = vmatpush.msra.mxu0 %v1576
        %1687 = vmatpush.msra.mxu0 %v1575
        %1688 = vmatpush.msra.mxu0 %v1574
        %1689 = vmatpush.msra.mxu0 %v1573
        %1690 = vmatpush.msra.mxu0 %v1572
        %1691 = vmatpush.msra.mxu0 %v1571
        %1692 = vmatpush.msra.mxu0 %v1570
        %1693 = vmatpush.msra.mxu0 %v1569
        %1694 = vmatpush.msra.mxu0 %v1568
        %1695 = vmatpush.msra.mxu0 %v1567
        %1696 = vmatpush.msra.mxu0 %v1566
        %1697 = vmatmul.f32.gmra.mxu0 %v1606
        %v1698 = vpop.f32.mrf.mxu0
        %v1699 = vadd.f32 %v1676, %v1698
        %1700 = vmatmul.f32.gmra.mxu0 %v1609
        %v1701 = vpop.f32.mrf.mxu0
        %v1702 = vadd.f32 %v1679, %v1701
        %1703 = vdwg.mxu0
        %v1704 = vld [vmem:[%s9 + $0xd0] sm:$0xff]
        %v1705 = vld [vmem:[%s9 + $0xd8] sm:$0xff]
        %v1706 = vld [vmem:[#allocation7 + $0x680] sm:$0xff]
        %v1707 = vld [vmem:[#allocation7 + $0x688] sm:$0xff]
        %v1708 = vld [vmem:[#allocation7 + $0x690] sm:$0xff]
        %v1709 = vld [vmem:[#allocation7 + $0x698] sm:$0xff]
        %v1710 = vld [vmem:[#allocation7 + $0x6a0] sm:$0xff]
        %v1711 = vld [vmem:[#allocation7 + $0x6a8] sm:$0xff]
        %v1712 = vld [vmem:[#allocation7 + $0x6b0] sm:$0xff]
        %v1713 = vld [vmem:[#allocation7 + $0x6b8] sm:$0xff]
        %v1714 = vld [vmem:[#allocation7 + $0x6c0] sm:$0xff]
        %v1715 = vld [vmem:[#allocation7 + $0x6c8] sm:$0xff]
        %v1716 = vld [vmem:[#allocation7 + $0x6d0] sm:$0xff]
        %v1717 = vld [vmem:[#allocation7 + $0x6d8] sm:$0xff]
        %v1718 = vld [vmem:[#allocation7 + $0x6e0] sm:$0xff]
        %v1719 = vld [vmem:[#allocation7 + $0x6e8] sm:$0xff]
        %v1720 = vld [vmem:[#allocation7 + $0x6f0] sm:$0xff]
        %v1721 = vld [vmem:[#allocation7 + $0x6f8] sm:$0xff]
        %v1723 = vsel %vm783, %v1704, 0
        %v1726 = vsel %vm783, %v1705, 0
        %1728 = vmatpush.msra.mxu0 0.0
        %1729 = vmatpush.msra.mxu0 0.0
        %1730 = vmatpush.msra.mxu0 0.0
        %1731 = vmatpush.msra.mxu0 0.0
        %1732 = vmatpush.msra.mxu0 0.0
        %1733 = vmatpush.msra.mxu0 0.0
        %1734 = vmatpush.msra.mxu0 0.0
        %1735 = vmatpush.msra.mxu0 0.0
        %1736 = vmatpush.msra.mxu0 0.0
        %1737 = vmatpush.msra.mxu0 0.0
        %1738 = vmatpush.msra.mxu0 0.0
        %1739 = vmatpush.msra.mxu0 0.0
        %1740 = vmatpush.msra.mxu0 0.0
        %1741 = vmatpush.msra.mxu0 0.0
        %1742 = vmatpush.msra.mxu0 %v1563
        %1743 = vmatpush.msra.mxu0 %v1562
        %1744 = vmatmul.f32.gmra.mxu0 %v1723
        %v1745 = vpop.f32.mrf.mxu0
        %v1746 = vadd.f32 0.0, %v1745
        %1747 = vmatmul.f32.gmra.mxu0 %v1726
        %v1748 = vpop.f32.mrf.mxu0
        %v1749 = vadd.f32 0.0, %v1748
        %1750 = vdwg.mxu0
        %1751 = vmatpush.msra.mxu0 %v1721
        %1752 = vmatpush.msra.mxu0 %v1720
        %1753 = vmatpush.msra.mxu0 %v1719
        %1754 = vmatpush.msra.mxu0 %v1718
        %1755 = vmatpush.msra.mxu0 %v1717
        %1756 = vmatpush.msra.mxu0 %v1716
        %1757 = vmatpush.msra.mxu0 %v1715
        %1758 = vmatpush.msra.mxu0 %v1714
        %1759 = vmatpush.msra.mxu0 %v1713
        %1760 = vmatpush.msra.mxu0 %v1712
        %1761 = vmatpush.msra.mxu0 %v1711
        %1762 = vmatpush.msra.mxu0 %v1710
        %1763 = vmatpush.msra.mxu0 %v1709
        %1764 = vmatpush.msra.mxu0 %v1708
        %1765 = vmatpush.msra.mxu0 %v1707
        %1766 = vmatpush.msra.mxu0 %v1706
        %1767 = vmatmul.f32.gmra.mxu0 %v1746
        %v1768 = vpop.f32.mrf.mxu0
        %v1769 = vadd.f32 0.0, %v1768
        %1770 = vmatmul.f32.gmra.mxu0 %v1749
        %v1771 = vpop.f32.mrf.mxu0
        %v1772 = vadd.f32 0.0, %v1771
        %1773 = vdwg.mxu0
        %v1774 = vadd.f32 %v1699, %v1769
        %v1775 = vadd.f32 %v1702, %v1772
        %v1776 = vld [vmem:[%s9 + $0xe0] sm:$0xff]
        %v1777 = vld [vmem:[%s9 + $0xe8] sm:$0xff]
        %v1778 = vld [vmem:[#allocation7 + $0x700] sm:$0xff]
        %v1779 = vld [vmem:[#allocation7 + $0x708] sm:$0xff]
        %v1780 = vld [vmem:[#allocation7 + $0x710] sm:$0xff]
        %v1781 = vld [vmem:[#allocation7 + $0x718] sm:$0xff]
        %v1782 = vld [vmem:[#allocation7 + $0x720] sm:$0xff]
        %v1783 = vld [vmem:[#allocation7 + $0x728] sm:$0xff]
        %v1784 = vld [vmem:[#allocation7 + $0x730] sm:$0xff]
        %v1785 = vld [vmem:[#allocation7 + $0x738] sm:$0xff]
        %v1786 = vld [vmem:[#allocation7 + $0x740] sm:$0xff]
        %v1787 = vld [vmem:[#allocation7 + $0x748] sm:$0xff]
        %v1788 = vld [vmem:[#allocation7 + $0x750] sm:$0xff]
        %v1789 = vld [vmem:[#allocation7 + $0x758] sm:$0xff]
        %v1790 = vld [vmem:[#allocation7 + $0x760] sm:$0xff]
        %v1791 = vld [vmem:[#allocation7 + $0x768] sm:$0xff]
        %v1792 = vld [vmem:[#allocation7 + $0x770] sm:$0xff]
        %v1793 = vld [vmem:[#allocation7 + $0x778] sm:$0xff]
        %v1795 = vsel %vm783, %v1776, 0
        %v1798 = vsel %vm783, %v1777, 0
        %1800 = vmatpush.msra.mxu0 0.0
        %1801 = vmatpush.msra.mxu0 0.0
        %1802 = vmatpush.msra.mxu0 0.0
        %1803 = vmatpush.msra.mxu0 0.0
        %1804 = vmatpush.msra.mxu0 0.0
        %1805 = vmatpush.msra.mxu0 0.0
        %1806 = vmatpush.msra.mxu0 0.0
        %1807 = vmatpush.msra.mxu0 0.0
        %1808 = vmatpush.msra.mxu0 0.0
        %1809 = vmatpush.msra.mxu0 0.0
        %1810 = vmatpush.msra.mxu0 0.0
        %1811 = vmatpush.msra.mxu0 0.0
        %1812 = vmatpush.msra.mxu0 0.0
        %1813 = vmatpush.msra.mxu0 0.0
        %1814 = vmatpush.msra.mxu0 %v1563
        %1815 = vmatpush.msra.mxu0 %v1562
        %1816 = vmatmul.f32.gmra.mxu0 %v1795
        %v1817 = vpop.f32.mrf.mxu0
        %v1818 = vadd.f32 0.0, %v1817
        %1819 = vmatmul.f32.gmra.mxu0 %v1798
        %v1820 = vpop.f32.mrf.mxu0
        %v1821 = vadd.f32 0.0, %v1820
        %1822 = vdwg.mxu0
        %1823 = vmatpush.msra.mxu0 %v1793
        %1824 = vmatpush.msra.mxu0 %v1792
        %1825 = vmatpush.msra.mxu0 %v1791
        %1826 = vmatpush.msra.mxu0 %v1790
        %1827 = vmatpush.msra.mxu0 %v1789
        %1828 = vmatpush.msra.mxu0 %v1788
        %1829 = vmatpush.msra.mxu0 %v1787
        %1830 = vmatpush.msra.mxu0 %v1786
        %1831 = vmatpush.msra.mxu0 %v1785
        %1832 = vmatpush.msra.mxu0 %v1784
        %1833 = vmatpush.msra.mxu0 %v1783
        %1834 = vmatpush.msra.mxu0 %v1782
        %1835 = vmatpush.msra.mxu0 %v1781
        %1836 = vmatpush.msra.mxu0 %v1780
        %1837 = vmatpush.msra.mxu0 %v1779
        %1838 = vmatpush.msra.mxu0 %v1778
        %1839 = vmatmul.f32.gmra.mxu0 %v1818
        %v1840 = vpop.f32.mrf.mxu0
        %v1841 = vadd.f32 0.0, %v1840
        %1842 = vmatmul.f32.gmra.mxu0 %v1821
        %v1843 = vpop.f32.mrf.mxu0
        %v1844 = vadd.f32 0.0, %v1843
        %1845 = vdwg.mxu0
        %v1846 = vadd.f32 %v1774, %v1841
        %v1847 = vadd.f32 %v1775, %v1844
        %v1848 = vld [vmem:[%s9 + $0xf0] sm:$0xff]
        %v1849 = vld [vmem:[%s9 + $0xf8] sm:$0xff]
        %v1850 = vld [vmem:[#allocation7 + $0x780] sm:$0xff]
        %v1851 = vld [vmem:[#allocation7 + $0x788] sm:$0xff]
        %v1852 = vld [vmem:[#allocation7 + $0x790] sm:$0xff]
        %v1853 = vld [vmem:[#allocation7 + $0x798] sm:$0xff]
        %v1854 = vld [vmem:[#allocation7 + $0x7a0] sm:$0xff]
        %v1855 = vld [vmem:[#allocation7 + $0x7a8] sm:$0xff]
        %v1856 = vld [vmem:[#allocation7 + $0x7b0] sm:$0xff]
        %v1857 = vld [vmem:[#allocation7 + $0x7b8] sm:$0xff]
        %v1858 = vld [vmem:[#allocation7 + $0x7c0] sm:$0xff]
        %v1859 = vld [vmem:[#allocation7 + $0x7c8] sm:$0xff]
        %v1860 = vld [vmem:[#allocation7 + $0x7d0] sm:$0xff]
        %v1861 = vld [vmem:[#allocation7 + $0x7d8] sm:$0xff]
        %v1862 = vld [vmem:[#allocation7 + $0x7e0] sm:$0xff]
        %v1863 = vld [vmem:[#allocation7 + $0x7e8] sm:$0xff]
        %v1864 = vld [vmem:[#allocation7 + $0x7f0] sm:$0xff]
        %v1865 = vld [vmem:[#allocation7 + $0x7f8] sm:$0xff]
        %v1867 = vsel %vm783, %v1848, 0
        %v1870 = vsel %vm783, %v1849, 0
        %1872 = vmatpush.msra.mxu0 0.0
        %1873 = vmatpush.msra.mxu0 0.0
        %1874 = vmatpush.msra.mxu0 0.0
        %1875 = vmatpush.msra.mxu0 0.0
        %1876 = vmatpush.msra.mxu0 0.0
        %1877 = vmatpush.msra.mxu0 0.0
        %1878 = vmatpush.msra.mxu0 0.0
        %1879 = vmatpush.msra.mxu0 0.0
        %1880 = vmatpush.msra.mxu0 0.0
        %1881 = vmatpush.msra.mxu0 0.0
        %1882 = vmatpush.msra.mxu0 0.0
        %1883 = vmatpush.msra.mxu0 0.0
        %1884 = vmatpush.msra.mxu0 0.0
        %1885 = vmatpush.msra.mxu0 0.0
        %1886 = vmatpush.msra.mxu0 %v1563
        %1887 = vmatpush.msra.mxu0 %v1562
        %1888 = vmatmul.f32.gmra.mxu0 %v1867
        %v1889 = vpop.f32.mrf.mxu0
        %v1890 = vadd.f32 0.0, %v1889
        %1891 = vmatmul.f32.gmra.mxu0 %v1870
        %v1892 = vpop.f32.mrf.mxu0
        %v1893 = vadd.f32 0.0, %v1892
        %1894 = vdwg.mxu0
        %1895 = vmatpush.msra.mxu0 %v1865
        %1896 = vmatpush.msra.mxu0 %v1864
        %1897 = vmatpush.msra.mxu0 %v1863
        %1898 = vmatpush.msra.mxu0 %v1862
        %1899 = vmatpush.msra.mxu0 %v1861
        %1900 = vmatpush.msra.mxu0 %v1860
        %1901 = vmatpush.msra.mxu0 %v1859
        %1902 = vmatpush.msra.mxu0 %v1858
        %1903 = vmatpush.msra.mxu0 %v1857
        %1904 = vmatpush.msra.mxu0 %v1856
        %1905 = vmatpush.msra.mxu0 %v1855
        %1906 = vmatpush.msra.mxu0 %v1854
        %1907 = vmatpush.msra.mxu0 %v1853
        %1908 = vmatpush.msra.mxu0 %v1852
        %1909 = vmatpush.msra.mxu0 %v1851
        %1910 = vmatpush.msra.mxu0 %v1850
        %1911 = vmatmul.f32.gmra.mxu0 %v1890
        %v1912 = vpop.f32.mrf.mxu0
        %v1913 = vadd.f32 0.0, %v1912
        %1914 = vmatmul.f32.gmra.mxu0 %v1893
        %v1915 = vpop.f32.mrf.mxu0
        %v1916 = vadd.f32 0.0, %v1915
        %1917 = vdwg.mxu0
        %v1918 = vadd.f32 %v1846, %v1913
        %v1919 = vadd.f32 %v1847, %v1916
        %v1920 = vld [vmem:[#allocation9 + $0x5] sm:$0x1]
        %v1921 = vperm.slane %v1920, 0
        %v1922 = vadd.f32 %v1918, %v1921
        %v1923 = vadd.f32 %v1919, %v1921
        %v1924 = vadd.f32 %v1198, %v1922
        %v1925 = vadd.f32 %v1199, %v1923
        %v1926 = vld [vmem:[%s9 + $0x100] sm:$0xff]
        %v1927 = vld [vmem:[%s9 + $0x108] sm:$0xff]
        %v1928 = vld [vmem:[#allocation7 + $0x800] sm:$0xff]
        %v1929 = vld [vmem:[#allocation7 + $0x808] sm:$0xff]
        %v1930 = vld [vmem:[#allocation7 + $0x810] sm:$0xff]
        %v1931 = vld [vmem:[#allocation7 + $0x818] sm:$0xff]
        %v1932 = vld [vmem:[#allocation7 + $0x820] sm:$0xff]
        %v1933 = vld [vmem:[#allocation7 + $0x828] sm:$0xff]
        %v1934 = vld [vmem:[#allocation7 + $0x830] sm:$0xff]
        %v1935 = vld [vmem:[#allocation7 + $0x838] sm:$0xff]
        %v1936 = vld [vmem:[#allocation7 + $0x840] sm:$0xff]
        %v1937 = vld [vmem:[#allocation7 + $0x848] sm:$0xff]
        %v1938 = vld [vmem:[#allocation7 + $0x850] sm:$0xff]
        %v1939 = vld [vmem:[#allocation7 + $0x858] sm:$0xff]
        %v1940 = vld [vmem:[#allocation7 + $0x860] sm:$0xff]
        %v1941 = vld [vmem:[#allocation7 + $0x868] sm:$0xff]
        %v1942 = vld [vmem:[#allocation7 + $0x870] sm:$0xff]
        %v1943 = vld [vmem:[#allocation7 + $0x878] sm:$0xff]
        %v1945 = vsel %vm783, %v1926, 0
        %v1948 = vsel %vm783, %v1927, 0
        %1950 = vmatpush.msra.mxu0 0.0
        %1951 = vmatpush.msra.mxu0 0.0
        %1952 = vmatpush.msra.mxu0 0.0
        %1953 = vmatpush.msra.mxu0 0.0
        %1954 = vmatpush.msra.mxu0 0.0
        %1955 = vmatpush.msra.mxu0 0.0
        %1956 = vmatpush.msra.mxu0 0.0
        %1957 = vmatpush.msra.mxu0 0.0
        %1958 = vmatpush.msra.mxu0 0.0
        %1959 = vmatpush.msra.mxu0 0.0
        %1960 = vmatpush.msra.mxu0 0.0
        %1961 = vmatpush.msra.mxu0 0.0
        %1962 = vmatpush.msra.mxu0 0.0
        %1963 = vmatpush.msra.mxu0 0.0
        %1964 = vmatpush.msra.mxu0 %v1201
        %1965 = vmatpush.msra.mxu0 %v1200
        %1966 = vmatmul.f32.gmra.mxu0 %v1945
        %v1967 = vpop.f32.mrf.mxu0
        %v1968 = vadd.f32 0.0, %v1967
        %1969 = vmatmul.f32.gmra.mxu0 %v1948
        %v1970 = vpop.f32.mrf.mxu0
        %v1971 = vadd.f32 0.0, %v1970
        %1972 = vdwg.mxu0
        %v1973 = vld [vmem:[%s9 + $0x110] sm:$0xff]
        %v1974 = vld [vmem:[%s9 + $0x118] sm:$0xff]
        %v1975 = vld [vmem:[#allocation7 + $0x880] sm:$0xff]
        %v1976 = vld [vmem:[#allocation7 + $0x888] sm:$0xff]
        %v1977 = vld [vmem:[#allocation7 + $0x890] sm:$0xff]
        %v1978 = vld [vmem:[#allocation7 + $0x898] sm:$0xff]
        %v1979 = vld [vmem:[#allocation7 + $0x8a0] sm:$0xff]
        %v1980 = vld [vmem:[#allocation7 + $0x8a8] sm:$0xff]
        %v1981 = vld [vmem:[#allocation7 + $0x8b0] sm:$0xff]
        %v1982 = vld [vmem:[#allocation7 + $0x8b8] sm:$0xff]
        %v1983 = vld [vmem:[#allocation7 + $0x8c0] sm:$0xff]
        %v1984 = vld [vmem:[#allocation7 + $0x8c8] sm:$0xff]
        %v1985 = vld [vmem:[#allocation7 + $0x8d0] sm:$0xff]
        %v1986 = vld [vmem:[#allocation7 + $0x8d8] sm:$0xff]
        %v1987 = vld [vmem:[#allocation7 + $0x8e0] sm:$0xff]
        %v1988 = vld [vmem:[#allocation7 + $0x8e8] sm:$0xff]
        %v1989 = vld [vmem:[#allocation7 + $0x8f0] sm:$0xff]
        %v1990 = vld [vmem:[#allocation7 + $0x8f8] sm:$0xff]
        %v1992 = vsel %vm783, %v1973, 0
        %v1995 = vsel %vm783, %v1974, 0
        %1997 = vmatpush.msra.mxu0 0.0
        %1998 = vmatpush.msra.mxu0 0.0
        %1999 = vmatpush.msra.mxu0 0.0
        %2000 = vmatpush.msra.mxu0 0.0
        %2001 = vmatpush.msra.mxu0 0.0
        %2002 = vmatpush.msra.mxu0 0.0
        %2003 = vmatpush.msra.mxu0 0.0
        %2004 = vmatpush.msra.mxu0 0.0
        %2005 = vmatpush.msra.mxu0 0.0
        %2006 = vmatpush.msra.mxu0 0.0
        %2007 = vmatpush.msra.mxu0 0.0
        %2008 = vmatpush.msra.mxu0 0.0
        %2009 = vmatpush.msra.mxu0 0.0
        %2010 = vmatpush.msra.mxu0 0.0
        %2011 = vmatpush.msra.mxu0 %v1201
        %2012 = vmatpush.msra.mxu0 %v1200
        %2013 = vmatmul.f32.gmra.mxu0 %v1992
        %v2014 = vpop.f32.mrf.mxu0
        %v2015 = vadd.f32 0.0, %v2014
        %2016 = vmatmul.f32.gmra.mxu0 %v1995
        %v2017 = vpop.f32.mrf.mxu0
        %v2018 = vadd.f32 0.0, %v2017
        %2019 = vdwg.mxu0
        %2020 = vmatpush.msra.mxu0 %v1990
        %2021 = vmatpush.msra.mxu0 %v1989
        %2022 = vmatpush.msra.mxu0 %v1988
        %2023 = vmatpush.msra.mxu0 %v1987
        %2024 = vmatpush.msra.mxu0 %v1986
        %2025 = vmatpush.msra.mxu0 %v1985
        %2026 = vmatpush.msra.mxu0 %v1984
        %2027 = vmatpush.msra.mxu0 %v1983
        %2028 = vmatpush.msra.mxu0 %v1982
        %2029 = vmatpush.msra.mxu0 %v1981
        %2030 = vmatpush.msra.mxu0 %v1980
        %2031 = vmatpush.msra.mxu0 %v1979
        %2032 = vmatpush.msra.mxu0 %v1978
        %2033 = vmatpush.msra.mxu0 %v1977
        %2034 = vmatpush.msra.mxu0 %v1976
        %2035 = vmatpush.msra.mxu0 %v1975
        %2036 = vmatmul.f32.gmra.mxu0 %v2015
        %v2037 = vpop.f32.mrf.mxu0
        %v2038 = vadd.f32 0.0, %v2037
        %2039 = vmatmul.f32.gmra.mxu0 %v2018
        %v2040 = vpop.f32.mrf.mxu0
        %v2041 = vadd.f32 0.0, %v2040
        %2042 = vdwg.mxu0
        %2043 = vmatpush.msra.mxu0 %v1943
        %2044 = vmatpush.msra.mxu0 %v1942
        %2045 = vmatpush.msra.mxu0 %v1941
        %2046 = vmatpush.msra.mxu0 %v1940
        %2047 = vmatpush.msra.mxu0 %v1939
        %2048 = vmatpush.msra.mxu0 %v1938
        %2049 = vmatpush.msra.mxu0 %v1937
        %2050 = vmatpush.msra.mxu0 %v1936
        %2051 = vmatpush.msra.mxu0 %v1935
        %2052 = vmatpush.msra.mxu0 %v1934
        %2053 = vmatpush.msra.mxu0 %v1933
        %2054 = vmatpush.msra.mxu0 %v1932
        %2055 = vmatpush.msra.mxu0 %v1931
        %2056 = vmatpush.msra.mxu0 %v1930
        %2057 = vmatpush.msra.mxu0 %v1929
        %2058 = vmatpush.msra.mxu0 %v1928
        %2059 = vmatmul.f32.gmra.mxu0 %v1968
        %v2060 = vpop.f32.mrf.mxu0
        %v2061 = vadd.f32 %v2038, %v2060
        %2062 = vmatmul.f32.gmra.mxu0 %v1971
        %v2063 = vpop.f32.mrf.mxu0
        %v2064 = vadd.f32 %v2041, %v2063
        %2065 = vdwg.mxu0
        %v2066 = vld [vmem:[%s9 + $0x120] sm:$0xff]
        %v2067 = vld [vmem:[%s9 + $0x128] sm:$0xff]
        %v2068 = vld [vmem:[#allocation7 + $0x900] sm:$0xff]
        %v2069 = vld [vmem:[#allocation7 + $0x908] sm:$0xff]
        %v2070 = vld [vmem:[#allocation7 + $0x910] sm:$0xff]
        %v2071 = vld [vmem:[#allocation7 + $0x918] sm:$0xff]
        %v2072 = vld [vmem:[#allocation7 + $0x920] sm:$0xff]
        %v2073 = vld [vmem:[#allocation7 + $0x928] sm:$0xff]
        %v2074 = vld [vmem:[#allocation7 + $0x930] sm:$0xff]
        %v2075 = vld [vmem:[#allocation7 + $0x938] sm:$0xff]
        %v2076 = vld [vmem:[#allocation7 + $0x940] sm:$0xff]
        %v2077 = vld [vmem:[#allocation7 + $0x948] sm:$0xff]
        %v2078 = vld [vmem:[#allocation7 + $0x950] sm:$0xff]
        %v2079 = vld [vmem:[#allocation7 + $0x958] sm:$0xff]
        %v2080 = vld [vmem:[#allocation7 + $0x960] sm:$0xff]
        %v2081 = vld [vmem:[#allocation7 + $0x968] sm:$0xff]
        %v2082 = vld [vmem:[#allocation7 + $0x970] sm:$0xff]
        %v2083 = vld [vmem:[#allocation7 + $0x978] sm:$0xff]
        %v2085 = vsel %vm783, %v2066, 0
        %v2088 = vsel %vm783, %v2067, 0
        %2090 = vmatpush.msra.mxu0 0.0
        %2091 = vmatpush.msra.mxu0 0.0
        %2092 = vmatpush.msra.mxu0 0.0
        %2093 = vmatpush.msra.mxu0 0.0
        %2094 = vmatpush.msra.mxu0 0.0
        %2095 = vmatpush.msra.mxu0 0.0
        %2096 = vmatpush.msra.mxu0 0.0
        %2097 = vmatpush.msra.mxu0 0.0
        %2098 = vmatpush.msra.mxu0 0.0
        %2099 = vmatpush.msra.mxu0 0.0
        %2100 = vmatpush.msra.mxu0 0.0
        %2101 = vmatpush.msra.mxu0 0.0
        %2102 = vmatpush.msra.mxu0 0.0
        %2103 = vmatpush.msra.mxu0 0.0
        %2104 = vmatpush.msra.mxu0 %v1201
        %2105 = vmatpush.msra.mxu0 %v1200
        %2106 = vmatmul.f32.gmra.mxu0 %v2085
        %v2107 = vpop.f32.mrf.mxu0
        %v2108 = vadd.f32 0.0, %v2107
        %2109 = vmatmul.f32.gmra.mxu0 %v2088
        %v2110 = vpop.f32.mrf.mxu0
        %v2111 = vadd.f32 0.0, %v2110
        %2112 = vdwg.mxu0
        %2113 = vmatpush.msra.mxu0 %v2083
        %2114 = vmatpush.msra.mxu0 %v2082
        %2115 = vmatpush.msra.mxu0 %v2081
        %2116 = vmatpush.msra.mxu0 %v2080
        %2117 = vmatpush.msra.mxu0 %v2079
        %2118 = vmatpush.msra.mxu0 %v2078
        %2119 = vmatpush.msra.mxu0 %v2077
        %2120 = vmatpush.msra.mxu0 %v2076
        %2121 = vmatpush.msra.mxu0 %v2075
        %2122 = vmatpush.msra.mxu0 %v2074
        %2123 = vmatpush.msra.mxu0 %v2073
        %2124 = vmatpush.msra.mxu0 %v2072
        %2125 = vmatpush.msra.mxu0 %v2071
        %2126 = vmatpush.msra.mxu0 %v2070
        %2127 = vmatpush.msra.mxu0 %v2069
        %2128 = vmatpush.msra.mxu0 %v2068
        %2129 = vmatmul.f32.gmra.mxu0 %v2108
        %v2130 = vpop.f32.mrf.mxu0
        %v2131 = vadd.f32 0.0, %v2130
        %2132 = vmatmul.f32.gmra.mxu0 %v2111
        %v2133 = vpop.f32.mrf.mxu0
        %v2134 = vadd.f32 0.0, %v2133
        %2135 = vdwg.mxu0
        %v2136 = vadd.f32 %v2061, %v2131
        %v2137 = vadd.f32 %v2064, %v2134
        %v2138 = vld [vmem:[#allocation9 + $0x6] sm:$0x1]
        %v2139 = vperm.slane %v2138, 0
        %v2140 = vadd.f32 %v2136, %v2139
        %v2141 = vadd.f32 %v2137, %v2139
        %v2142 = vmax.f32 %v2140, 0.0
        %v2143 = vmax.f32 %v2141, 0.0
        %v2144 = vld [vmem:[%s9 + $0x130] sm:$0xff]
        %v2145 = vld [vmem:[%s9 + $0x138] sm:$0xff]
        %v2146 = vld [vmem:[#allocation7 + $0x980] sm:$0xff]
        %v2147 = vld [vmem:[#allocation7 + $0x988] sm:$0xff]
        %v2148 = vld [vmem:[#allocation7 + $0x990] sm:$0xff]
        %v2149 = vld [vmem:[#allocation7 + $0x998] sm:$0xff]
        %v2150 = vld [vmem:[#allocation7 + $0x9a0] sm:$0xff]
        %v2151 = vld [vmem:[#allocation7 + $0x9a8] sm:$0xff]
        %v2152 = vld [vmem:[#allocation7 + $0x9b0] sm:$0xff]
        %v2153 = vld [vmem:[#allocation7 + $0x9b8] sm:$0xff]
        %v2154 = vld [vmem:[#allocation7 + $0x9c0] sm:$0xff]
        %v2155 = vld [vmem:[#allocation7 + $0x9c8] sm:$0xff]
        %v2156 = vld [vmem:[#allocation7 + $0x9d0] sm:$0xff]
        %v2157 = vld [vmem:[#allocation7 + $0x9d8] sm:$0xff]
        %v2158 = vld [vmem:[#allocation7 + $0x9e0] sm:$0xff]
        %v2159 = vld [vmem:[#allocation7 + $0x9e8] sm:$0xff]
        %v2160 = vld [vmem:[#allocation7 + $0x9f0] sm:$0xff]
        %v2161 = vld [vmem:[#allocation7 + $0x9f8] sm:$0xff]
        %v2163 = vsel %vm783, %v2144, 0
        %v2166 = vsel %vm783, %v2145, 0
        %2168 = vmatpush.msra.mxu0 0.0
        %2169 = vmatpush.msra.mxu0 0.0
        %2170 = vmatpush.msra.mxu0 0.0
        %2171 = vmatpush.msra.mxu0 0.0
        %2172 = vmatpush.msra.mxu0 0.0
        %2173 = vmatpush.msra.mxu0 0.0
        %2174 = vmatpush.msra.mxu0 0.0
        %2175 = vmatpush.msra.mxu0 0.0
        %2176 = vmatpush.msra.mxu0 0.0
        %2177 = vmatpush.msra.mxu0 0.0
        %2178 = vmatpush.msra.mxu0 0.0
        %2179 = vmatpush.msra.mxu0 0.0
        %2180 = vmatpush.msra.mxu0 0.0
        %2181 = vmatpush.msra.mxu0 0.0
        %2182 = vmatpush.msra.mxu0 %v2143
        %2183 = vmatpush.msra.mxu0 %v2142
        %2184 = vmatmul.f32.gmra.mxu0 %v2163
        %v2185 = vpop.f32.mrf.mxu0
        %v2186 = vadd.f32 0.0, %v2185
        %2187 = vmatmul.f32.gmra.mxu0 %v2166
        %v2188 = vpop.f32.mrf.mxu0
        %v2189 = vadd.f32 0.0, %v2188
        %2190 = vdwg.mxu0
        %v2191 = vld [vmem:[%s9 + $0x140] sm:$0xff]
        %v2192 = vld [vmem:[%s9 + $0x148] sm:$0xff]
        %v2193 = vld [vmem:[#allocation7 + $0xa00] sm:$0xff]
        %v2194 = vld [vmem:[#allocation7 + $0xa08] sm:$0xff]
        %v2195 = vld [vmem:[#allocation7 + $0xa10] sm:$0xff]
        %v2196 = vld [vmem:[#allocation7 + $0xa18] sm:$0xff]
        %v2197 = vld [vmem:[#allocation7 + $0xa20] sm:$0xff]
        %v2198 = vld [vmem:[#allocation7 + $0xa28] sm:$0xff]
        %v2199 = vld [vmem:[#allocation7 + $0xa30] sm:$0xff]
        %v2200 = vld [vmem:[#allocation7 + $0xa38] sm:$0xff]
        %v2201 = vld [vmem:[#allocation7 + $0xa40] sm:$0xff]
        %v2202 = vld [vmem:[#allocation7 + $0xa48] sm:$0xff]
        %v2203 = vld [vmem:[#allocation7 + $0xa50] sm:$0xff]
        %v2204 = vld [vmem:[#allocation7 + $0xa58] sm:$0xff]
        %v2205 = vld [vmem:[#allocation7 + $0xa60] sm:$0xff]
        %v2206 = vld [vmem:[#allocation7 + $0xa68] sm:$0xff]
        %v2207 = vld [vmem:[#allocation7 + $0xa70] sm:$0xff]
        %v2208 = vld [vmem:[#allocation7 + $0xa78] sm:$0xff]
        %v2210 = vsel %vm783, %v2191, 0
        %v2213 = vsel %vm783, %v2192, 0
        %2215 = vmatpush.msra.mxu0 0.0
        %2216 = vmatpush.msra.mxu0 0.0
        %2217 = vmatpush.msra.mxu0 0.0
        %2218 = vmatpush.msra.mxu0 0.0
        %2219 = vmatpush.msra.mxu0 0.0
        %2220 = vmatpush.msra.mxu0 0.0
        %2221 = vmatpush.msra.mxu0 0.0
        %2222 = vmatpush.msra.mxu0 0.0
        %2223 = vmatpush.msra.mxu0 0.0
        %2224 = vmatpush.msra.mxu0 0.0
        %2225 = vmatpush.msra.mxu0 0.0
        %2226 = vmatpush.msra.mxu0 0.0
        %2227 = vmatpush.msra.mxu0 0.0
        %2228 = vmatpush.msra.mxu0 0.0
        %2229 = vmatpush.msra.mxu0 %v2143
        %2230 = vmatpush.msra.mxu0 %v2142
        %2231 = vmatmul.f32.gmra.mxu0 %v2210
        %v2232 = vpop.f32.mrf.mxu0
        %v2233 = vadd.f32 0.0, %v2232
        %2234 = vmatmul.f32.gmra.mxu0 %v2213
        %v2235 = vpop.f32.mrf.mxu0
        %v2236 = vadd.f32 0.0, %v2235
        %2237 = vdwg.mxu0
        %2238 = vmatpush.msra.mxu0 %v2208
        %2239 = vmatpush.msra.mxu0 %v2207
        %2240 = vmatpush.msra.mxu0 %v2206
        %2241 = vmatpush.msra.mxu0 %v2205
        %2242 = vmatpush.msra.mxu0 %v2204
        %2243 = vmatpush.msra.mxu0 %v2203
        %2244 = vmatpush.msra.mxu0 %v2202
        %2245 = vmatpush.msra.mxu0 %v2201
        %2246 = vmatpush.msra.mxu0 %v2200
        %2247 = vmatpush.msra.mxu0 %v2199
        %2248 = vmatpush.msra.mxu0 %v2198
        %2249 = vmatpush.msra.mxu0 %v2197
        %2250 = vmatpush.msra.mxu0 %v2196
        %2251 = vmatpush.msra.mxu0 %v2195
        %2252 = vmatpush.msra.mxu0 %v2194
        %2253 = vmatpush.msra.mxu0 %v2193
        %2254 = vmatmul.f32.gmra.mxu0 %v2233
        %v2255 = vpop.f32.mrf.mxu0
        %v2256 = vadd.f32 0.0, %v2255
        %2257 = vmatmul.f32.gmra.mxu0 %v2236
        %v2258 = vpop.f32.mrf.mxu0
        %v2259 = vadd.f32 0.0, %v2258
        %2260 = vdwg.mxu0
        %2261 = vmatpush.msra.mxu0 %v2161
        %2262 = vmatpush.msra.mxu0 %v2160
        %2263 = vmatpush.msra.mxu0 %v2159
        %2264 = vmatpush.msra.mxu0 %v2158
        %2265 = vmatpush.msra.mxu0 %v2157
        %2266 = vmatpush.msra.mxu0 %v2156
        %2267 = vmatpush.msra.mxu0 %v2155
        %2268 = vmatpush.msra.mxu0 %v2154
        %2269 = vmatpush.msra.mxu0 %v2153
        %2270 = vmatpush.msra.mxu0 %v2152
        %2271 = vmatpush.msra.mxu0 %v2151
        %2272 = vmatpush.msra.mxu0 %v2150
        %2273 = vmatpush.msra.mxu0 %v2149
        %2274 = vmatpush.msra.mxu0 %v2148
        %2275 = vmatpush.msra.mxu0 %v2147
        %2276 = vmatpush.msra.mxu0 %v2146
        %2277 = vmatmul.f32.gmra.mxu0 %v2186
        %v2278 = vpop.f32.mrf.mxu0
        %v2279 = vadd.f32 %v2256, %v2278
        %2280 = vmatmul.f32.gmra.mxu0 %v2189
        %v2281 = vpop.f32.mrf.mxu0
        %v2282 = vadd.f32 %v2259, %v2281
        %2283 = vdwg.mxu0
        %v2284 = vld [vmem:[%s9 + $0x150] sm:$0xff]
        %v2285 = vld [vmem:[%s9 + $0x158] sm:$0xff]
        %v2286 = vld [vmem:[#allocation7 + $0xa80] sm:$0xff]
        %v2287 = vld [vmem:[#allocation7 + $0xa88] sm:$0xff]
        %v2288 = vld [vmem:[#allocation7 + $0xa90] sm:$0xff]
        %v2289 = vld [vmem:[#allocation7 + $0xa98] sm:$0xff]
        %v2290 = vld [vmem:[#allocation7 + $0xaa0] sm:$0xff]
        %v2291 = vld [vmem:[#allocation7 + $0xaa8] sm:$0xff]
        %v2292 = vld [vmem:[#allocation7 + $0xab0] sm:$0xff]
        %v2293 = vld [vmem:[#allocation7 + $0xab8] sm:$0xff]
        %v2294 = vld [vmem:[#allocation7 + $0xac0] sm:$0xff]
        %v2295 = vld [vmem:[#allocation7 + $0xac8] sm:$0xff]
        %v2296 = vld [vmem:[#allocation7 + $0xad0] sm:$0xff]
        %v2297 = vld [vmem:[#allocation7 + $0xad8] sm:$0xff]
        %v2298 = vld [vmem:[#allocation7 + $0xae0] sm:$0xff]
        %v2299 = vld [vmem:[#allocation7 + $0xae8] sm:$0xff]
        %v2300 = vld [vmem:[#allocation7 + $0xaf0] sm:$0xff]
        %v2301 = vld [vmem:[#allocation7 + $0xaf8] sm:$0xff]
        %v2303 = vsel %vm783, %v2284, 0
        %v2306 = vsel %vm783, %v2285, 0
        %2308 = vmatpush.msra.mxu0 0.0
        %2309 = vmatpush.msra.mxu0 0.0
        %2310 = vmatpush.msra.mxu0 0.0
        %2311 = vmatpush.msra.mxu0 0.0
        %2312 = vmatpush.msra.mxu0 0.0
        %2313 = vmatpush.msra.mxu0 0.0
        %2314 = vmatpush.msra.mxu0 0.0
        %2315 = vmatpush.msra.mxu0 0.0
        %2316 = vmatpush.msra.mxu0 0.0
        %2317 = vmatpush.msra.mxu0 0.0
        %2318 = vmatpush.msra.mxu0 0.0
        %2319 = vmatpush.msra.mxu0 0.0
        %2320 = vmatpush.msra.mxu0 0.0
        %2321 = vmatpush.msra.mxu0 0.0
        %2322 = vmatpush.msra.mxu0 %v2143
        %2323 = vmatpush.msra.mxu0 %v2142
        %2324 = vmatmul.f32.gmra.mxu0 %v2303
        %v2325 = vpop.f32.mrf.mxu0
        %v2326 = vadd.f32 0.0, %v2325
        %2327 = vmatmul.f32.gmra.mxu0 %v2306
        %v2328 = vpop.f32.mrf.mxu0
        %v2329 = vadd.f32 0.0, %v2328
        %2330 = vdwg.mxu0
        %2331 = vmatpush.msra.mxu0 %v2301
        %2332 = vmatpush.msra.mxu0 %v2300
        %2333 = vmatpush.msra.mxu0 %v2299
        %2334 = vmatpush.msra.mxu0 %v2298
        %2335 = vmatpush.msra.mxu0 %v2297
        %2336 = vmatpush.msra.mxu0 %v2296
        %2337 = vmatpush.msra.mxu0 %v2295
        %2338 = vmatpush.msra.mxu0 %v2294
        %2339 = vmatpush.msra.mxu0 %v2293
        %2340 = vmatpush.msra.mxu0 %v2292
        %2341 = vmatpush.msra.mxu0 %v2291
        %2342 = vmatpush.msra.mxu0 %v2290
        %2343 = vmatpush.msra.mxu0 %v2289
        %2344 = vmatpush.msra.mxu0 %v2288
        %2345 = vmatpush.msra.mxu0 %v2287
        %2346 = vmatpush.msra.mxu0 %v2286
        %2347 = vmatmul.f32.gmra.mxu0 %v2326
        %v2348 = vpop.f32.mrf.mxu0
        %v2349 = vadd.f32 0.0, %v2348
        %2350 = vmatmul.f32.gmra.mxu0 %v2329
        %v2351 = vpop.f32.mrf.mxu0
        %v2352 = vadd.f32 0.0, %v2351
        %2353 = vdwg.mxu0
        %v2354 = vadd.f32 %v2279, %v2349
        %v2355 = vadd.f32 %v2282, %v2352
        %v2356 = vld [vmem:[#allocation9 + $0x7] sm:$0x1]
        %v2357 = vperm.slane %v2356, 0
        %v2358 = vadd.f32 %v2354, %v2357
        %v2359 = vadd.f32 %v2355, %v2357
        %v2360 = vmax.f32 %v1924, 0.0
        %v2361 = vmax.f32 %v1925, 0.0
        %v2362 = vld [vmem:[%s9 + $0x160] sm:$0xff]
        %v2363 = vld [vmem:[%s9 + $0x168] sm:$0xff]
        %v2364 = vld [vmem:[#allocation7 + $0xb00] sm:$0xff]
        %v2365 = vld [vmem:[#allocation7 + $0xb08] sm:$0xff]
        %v2366 = vld [vmem:[#allocation7 + $0xb10] sm:$0xff]
        %v2367 = vld [vmem:[#allocation7 + $0xb18] sm:$0xff]
        %v2368 = vld [vmem:[#allocation7 + $0xb20] sm:$0xff]
        %v2369 = vld [vmem:[#allocation7 + $0xb28] sm:$0xff]
        %v2370 = vld [vmem:[#allocation7 + $0xb30] sm:$0xff]
        %v2371 = vld [vmem:[#allocation7 + $0xb38] sm:$0xff]
        %v2372 = vld [vmem:[#allocation7 + $0xb40] sm:$0xff]
        %v2373 = vld [vmem:[#allocation7 + $0xb48] sm:$0xff]
        %v2374 = vld [vmem:[#allocation7 + $0xb50] sm:$0xff]
        %v2375 = vld [vmem:[#allocation7 + $0xb58] sm:$0xff]
        %v2376 = vld [vmem:[#allocation7 + $0xb60] sm:$0xff]
        %v2377 = vld [vmem:[#allocation7 + $0xb68] sm:$0xff]
        %v2378 = vld [vmem:[#allocation7 + $0xb70] sm:$0xff]
        %v2379 = vld [vmem:[#allocation7 + $0xb78] sm:$0xff]
        %v2381 = vsel %vm783, %v2362, 0
        %v2384 = vsel %vm783, %v2363, 0
        %2386 = vmatpush.msra.mxu0 0.0
        %2387 = vmatpush.msra.mxu0 0.0
        %2388 = vmatpush.msra.mxu0 0.0
        %2389 = vmatpush.msra.mxu0 0.0
        %2390 = vmatpush.msra.mxu0 0.0
        %2391 = vmatpush.msra.mxu0 0.0
        %2392 = vmatpush.msra.mxu0 0.0
        %2393 = vmatpush.msra.mxu0 0.0
        %2394 = vmatpush.msra.mxu0 0.0
        %2395 = vmatpush.msra.mxu0 0.0
        %2396 = vmatpush.msra.mxu0 0.0
        %2397 = vmatpush.msra.mxu0 0.0
        %2398 = vmatpush.msra.mxu0 0.0
        %2399 = vmatpush.msra.mxu0 0.0
        %2400 = vmatpush.msra.mxu0 %v2361
        %2401 = vmatpush.msra.mxu0 %v2360
        %2402 = vmatmul.f32.gmra.mxu0 %v2381
        %v2403 = vpop.f32.mrf.mxu0
        %v2404 = vadd.f32 0.0, %v2403
        %2405 = vmatmul.f32.gmra.mxu0 %v2384
        %v2406 = vpop.f32.mrf.mxu0
        %v2407 = vadd.f32 0.0, %v2406
        %2408 = vdwg.mxu0
        %v2409 = vld [vmem:[%s9 + $0x170] sm:$0xff]
        %v2410 = vld [vmem:[%s9 + $0x178] sm:$0xff]
        %v2411 = vld [vmem:[#allocation7 + $0xb80] sm:$0xff]
        %v2412 = vld [vmem:[#allocation7 + $0xb88] sm:$0xff]
        %v2413 = vld [vmem:[#allocation7 + $0xb90] sm:$0xff]
        %v2414 = vld [vmem:[#allocation7 + $0xb98] sm:$0xff]
        %v2415 = vld [vmem:[#allocation7 + $0xba0] sm:$0xff]
        %v2416 = vld [vmem:[#allocation7 + $0xba8] sm:$0xff]
        %v2417 = vld [vmem:[#allocation7 + $0xbb0] sm:$0xff]
        %v2418 = vld [vmem:[#allocation7 + $0xbb8] sm:$0xff]
        %v2419 = vld [vmem:[#allocation7 + $0xbc0] sm:$0xff]
        %v2420 = vld [vmem:[#allocation7 + $0xbc8] sm:$0xff]
        %v2421 = vld [vmem:[#allocation7 + $0xbd0] sm:$0xff]
        %v2422 = vld [vmem:[#allocation7 + $0xbd8] sm:$0xff]
        %v2423 = vld [vmem:[#allocation7 + $0xbe0] sm:$0xff]
        %v2424 = vld [vmem:[#allocation7 + $0xbe8] sm:$0xff]
        %v2425 = vld [vmem:[#allocation7 + $0xbf0] sm:$0xff]
        %v2426 = vld [vmem:[#allocation7 + $0xbf8] sm:$0xff]
        %v2428 = vsel %vm783, %v2409, 0
        %v2431 = vsel %vm783, %v2410, 0
        %2433 = vmatpush.msra.mxu0 0.0
        %2434 = vmatpush.msra.mxu0 0.0
        %2435 = vmatpush.msra.mxu0 0.0
        %2436 = vmatpush.msra.mxu0 0.0
        %2437 = vmatpush.msra.mxu0 0.0
        %2438 = vmatpush.msra.mxu0 0.0
        %2439 = vmatpush.msra.mxu0 0.0
        %2440 = vmatpush.msra.mxu0 0.0
        %2441 = vmatpush.msra.mxu0 0.0
        %2442 = vmatpush.msra.mxu0 0.0
        %2443 = vmatpush.msra.mxu0 0.0
        %2444 = vmatpush.msra.mxu0 0.0
        %2445 = vmatpush.msra.mxu0 0.0
        %2446 = vmatpush.msra.mxu0 0.0
        %2447 = vmatpush.msra.mxu0 %v2361
        %2448 = vmatpush.msra.mxu0 %v2360
        %2449 = vmatmul.f32.gmra.mxu0 %v2428
        %v2450 = vpop.f32.mrf.mxu0
        %v2451 = vadd.f32 0.0, %v2450
        %2452 = vmatmul.f32.gmra.mxu0 %v2431
        %v2453 = vpop.f32.mrf.mxu0
        %v2454 = vadd.f32 0.0, %v2453
        %2455 = vdwg.mxu0
        %2456 = vmatpush.msra.mxu0 %v2426
        %2457 = vmatpush.msra.mxu0 %v2425
        %2458 = vmatpush.msra.mxu0 %v2424
        %2459 = vmatpush.msra.mxu0 %v2423
        %2460 = vmatpush.msra.mxu0 %v2422
        %2461 = vmatpush.msra.mxu0 %v2421
        %2462 = vmatpush.msra.mxu0 %v2420
        %2463 = vmatpush.msra.mxu0 %v2419
        %2464 = vmatpush.msra.mxu0 %v2418
        %2465 = vmatpush.msra.mxu0 %v2417
        %2466 = vmatpush.msra.mxu0 %v2416
        %2467 = vmatpush.msra.mxu0 %v2415
        %2468 = vmatpush.msra.mxu0 %v2414
        %2469 = vmatpush.msra.mxu0 %v2413
        %2470 = vmatpush.msra.mxu0 %v2412
        %2471 = vmatpush.msra.mxu0 %v2411
        %2472 = vmatmul.f32.gmra.mxu0 %v2451
        %v2473 = vpop.f32.mrf.mxu0
        %v2474 = vadd.f32 0.0, %v2473
        %2475 = vmatmul.f32.gmra.mxu0 %v2454
        %v2476 = vpop.f32.mrf.mxu0
        %v2477 = vadd.f32 0.0, %v2476
        %2478 = vdwg.mxu0
        %2479 = vmatpush.msra.mxu0 %v2379
        %2480 = vmatpush.msra.mxu0 %v2378
        %2481 = vmatpush.msra.mxu0 %v2377
        %2482 = vmatpush.msra.mxu0 %v2376
        %2483 = vmatpush.msra.mxu0 %v2375
        %2484 = vmatpush.msra.mxu0 %v2374
        %2485 = vmatpush.msra.mxu0 %v2373
        %2486 = vmatpush.msra.mxu0 %v2372
        %2487 = vmatpush.msra.mxu0 %v2371
        %2488 = vmatpush.msra.mxu0 %v2370
        %2489 = vmatpush.msra.mxu0 %v2369
        %2490 = vmatpush.msra.mxu0 %v2368
        %2491 = vmatpush.msra.mxu0 %v2367
        %2492 = vmatpush.msra.mxu0 %v2366
        %2493 = vmatpush.msra.mxu0 %v2365
        %2494 = vmatpush.msra.mxu0 %v2364
        %2495 = vmatmul.f32.gmra.mxu0 %v2404
        %v2496 = vpop.f32.mrf.mxu0
        %v2497 = vadd.f32 %v2474, %v2496
        %2498 = vmatmul.f32.gmra.mxu0 %v2407
        %v2499 = vpop.f32.mrf.mxu0
        %v2500 = vadd.f32 %v2477, %v2499
        %2501 = vdwg.mxu0
        %v2502 = vld [vmem:[%s9 + $0x180] sm:$0xff]
        %v2503 = vld [vmem:[%s9 + $0x188] sm:$0xff]
        %v2504 = vld [vmem:[#allocation7 + $0xc00] sm:$0xff]
        %v2505 = vld [vmem:[#allocation7 + $0xc08] sm:$0xff]
        %v2506 = vld [vmem:[#allocation7 + $0xc10] sm:$0xff]
        %v2507 = vld [vmem:[#allocation7 + $0xc18] sm:$0xff]
        %v2508 = vld [vmem:[#allocation7 + $0xc20] sm:$0xff]
        %v2509 = vld [vmem:[#allocation7 + $0xc28] sm:$0xff]
        %v2510 = vld [vmem:[#allocation7 + $0xc30] sm:$0xff]
        %v2511 = vld [vmem:[#allocation7 + $0xc38] sm:$0xff]
        %v2512 = vld [vmem:[#allocation7 + $0xc40] sm:$0xff]
        %v2513 = vld [vmem:[#allocation7 + $0xc48] sm:$0xff]
        %v2514 = vld [vmem:[#allocation7 + $0xc50] sm:$0xff]
        %v2515 = vld [vmem:[#allocation7 + $0xc58] sm:$0xff]
        %v2516 = vld [vmem:[#allocation7 + $0xc60] sm:$0xff]
        %v2517 = vld [vmem:[#allocation7 + $0xc68] sm:$0xff]
        %v2518 = vld [vmem:[#allocation7 + $0xc70] sm:$0xff]
        %v2519 = vld [vmem:[#allocation7 + $0xc78] sm:$0xff]
        %v2521 = vsel %vm783, %v2502, 0
        %v2524 = vsel %vm783, %v2503, 0
        %2526 = vmatpush.msra.mxu0 0.0
        %2527 = vmatpush.msra.mxu0 0.0
        %2528 = vmatpush.msra.mxu0 0.0
        %2529 = vmatpush.msra.mxu0 0.0
        %2530 = vmatpush.msra.mxu0 0.0
        %2531 = vmatpush.msra.mxu0 0.0
        %2532 = vmatpush.msra.mxu0 0.0
        %2533 = vmatpush.msra.mxu0 0.0
        %2534 = vmatpush.msra.mxu0 0.0
        %2535 = vmatpush.msra.mxu0 0.0
        %2536 = vmatpush.msra.mxu0 0.0
        %2537 = vmatpush.msra.mxu0 0.0
        %2538 = vmatpush.msra.mxu0 0.0
        %2539 = vmatpush.msra.mxu0 0.0
        %2540 = vmatpush.msra.mxu0 %v2361
        %2541 = vmatpush.msra.mxu0 %v2360
        %2542 = vmatmul.f32.gmra.mxu0 %v2521
        %v2543 = vpop.f32.mrf.mxu0
        %v2544 = vadd.f32 0.0, %v2543
        %2545 = vmatmul.f32.gmra.mxu0 %v2524
        %v2546 = vpop.f32.mrf.mxu0
        %v2547 = vadd.f32 0.0, %v2546
        %2548 = vdwg.mxu0
        %2549 = vmatpush.msra.mxu0 %v2519
        %2550 = vmatpush.msra.mxu0 %v2518
        %2551 = vmatpush.msra.mxu0 %v2517
        %2552 = vmatpush.msra.mxu0 %v2516
        %2553 = vmatpush.msra.mxu0 %v2515
        %2554 = vmatpush.msra.mxu0 %v2514
        %2555 = vmatpush.msra.mxu0 %v2513
        %2556 = vmatpush.msra.mxu0 %v2512
        %2557 = vmatpush.msra.mxu0 %v2511
        %2558 = vmatpush.msra.mxu0 %v2510
        %2559 = vmatpush.msra.mxu0 %v2509
        %2560 = vmatpush.msra.mxu0 %v2508
        %2561 = vmatpush.msra.mxu0 %v2507
        %2562 = vmatpush.msra.mxu0 %v2506
        %2563 = vmatpush.msra.mxu0 %v2505
        %2564 = vmatpush.msra.mxu0 %v2504
        %2565 = vmatmul.f32.gmra.mxu0 %v2544
        %v2566 = vpop.f32.mrf.mxu0
        %v2567 = vadd.f32 0.0, %v2566
        %2568 = vmatmul.f32.gmra.mxu0 %v2547
        %v2569 = vpop.f32.mrf.mxu0
        %v2570 = vadd.f32 0.0, %v2569
        %2571 = vdwg.mxu0
        %v2572 = vadd.f32 %v2497, %v2567
        %v2573 = vadd.f32 %v2500, %v2570
        %v2574 = vld [vmem:[#allocation9 + $0x8] sm:$0x1]
        %v2575 = vperm.slane %v2574, 0
        %v2576 = vadd.f32 %v2572, %v2575
        %v2577 = vadd.f32 %v2573, %v2575
        %v2578 = vmax.f32 %v2576, 0.0
        %v2579 = vmax.f32 %v2577, 0.0
        %v2580 = vld [vmem:[%s9 + $0x190] sm:$0xff]
        %v2581 = vld [vmem:[%s9 + $0x198] sm:$0xff]
        %v2582 = vld [vmem:[#allocation7 + $0xc80] sm:$0xff]
        %v2583 = vld [vmem:[#allocation7 + $0xc88] sm:$0xff]
        %v2584 = vld [vmem:[#allocation7 + $0xc90] sm:$0xff]
        %v2585 = vld [vmem:[#allocation7 + $0xc98] sm:$0xff]
        %v2586 = vld [vmem:[#allocation7 + $0xca0] sm:$0xff]
        %v2587 = vld [vmem:[#allocation7 + $0xca8] sm:$0xff]
        %v2588 = vld [vmem:[#allocation7 + $0xcb0] sm:$0xff]
        %v2589 = vld [vmem:[#allocation7 + $0xcb8] sm:$0xff]
        %v2590 = vld [vmem:[#allocation7 + $0xcc0] sm:$0xff]
        %v2591 = vld [vmem:[#allocation7 + $0xcc8] sm:$0xff]
        %v2592 = vld [vmem:[#allocation7 + $0xcd0] sm:$0xff]
        %v2593 = vld [vmem:[#allocation7 + $0xcd8] sm:$0xff]
        %v2594 = vld [vmem:[#allocation7 + $0xce0] sm:$0xff]
        %v2595 = vld [vmem:[#allocation7 + $0xce8] sm:$0xff]
        %v2596 = vld [vmem:[#allocation7 + $0xcf0] sm:$0xff]
        %v2597 = vld [vmem:[#allocation7 + $0xcf8] sm:$0xff]
        %v2599 = vsel %vm783, %v2580, 0
        %v2602 = vsel %vm783, %v2581, 0
        %2604 = vmatpush.msra.mxu0 0.0
        %2605 = vmatpush.msra.mxu0 0.0
        %2606 = vmatpush.msra.mxu0 0.0
        %2607 = vmatpush.msra.mxu0 0.0
        %2608 = vmatpush.msra.mxu0 0.0
        %2609 = vmatpush.msra.mxu0 0.0
        %2610 = vmatpush.msra.mxu0 0.0
        %2611 = vmatpush.msra.mxu0 0.0
        %2612 = vmatpush.msra.mxu0 0.0
        %2613 = vmatpush.msra.mxu0 0.0
        %2614 = vmatpush.msra.mxu0 0.0
        %2615 = vmatpush.msra.mxu0 0.0
        %2616 = vmatpush.msra.mxu0 0.0
        %2617 = vmatpush.msra.mxu0 0.0
        %2618 = vmatpush.msra.mxu0 %v2579
        %2619 = vmatpush.msra.mxu0 %v2578
        %2620 = vmatmul.f32.gmra.mxu0 %v2599
        %v2621 = vpop.f32.mrf.mxu0
        %v2622 = vadd.f32 0.0, %v2621
        %2623 = vmatmul.f32.gmra.mxu0 %v2602
        %v2624 = vpop.f32.mrf.mxu0
        %v2625 = vadd.f32 0.0, %v2624
        %2626 = vdwg.mxu0
        %v2627 = vld [vmem:[%s9 + $0x1a0] sm:$0xff]
        %v2628 = vld [vmem:[%s9 + $0x1a8] sm:$0xff]
        %v2629 = vld [vmem:[#allocation7 + $0xd00] sm:$0xff]
        %v2630 = vld [vmem:[#allocation7 + $0xd08] sm:$0xff]
        %v2631 = vld [vmem:[#allocation7 + $0xd10] sm:$0xff]
        %v2632 = vld [vmem:[#allocation7 + $0xd18] sm:$0xff]
        %v2633 = vld [vmem:[#allocation7 + $0xd20] sm:$0xff]
        %v2634 = vld [vmem:[#allocation7 + $0xd28] sm:$0xff]
        %v2635 = vld [vmem:[#allocation7 + $0xd30] sm:$0xff]
        %v2636 = vld [vmem:[#allocation7 + $0xd38] sm:$0xff]
        %v2637 = vld [vmem:[#allocation7 + $0xd40] sm:$0xff]
        %v2638 = vld [vmem:[#allocation7 + $0xd48] sm:$0xff]
        %v2639 = vld [vmem:[#allocation7 + $0xd50] sm:$0xff]
        %v2640 = vld [vmem:[#allocation7 + $0xd58] sm:$0xff]
        %v2641 = vld [vmem:[#allocation7 + $0xd60] sm:$0xff]
        %v2642 = vld [vmem:[#allocation7 + $0xd68] sm:$0xff]
        %v2643 = vld [vmem:[#allocation7 + $0xd70] sm:$0xff]
        %v2644 = vld [vmem:[#allocation7 + $0xd78] sm:$0xff]
        %v2646 = vsel %vm783, %v2627, 0
        %v2649 = vsel %vm783, %v2628, 0
        %2651 = vmatpush.msra.mxu0 0.0
        %2652 = vmatpush.msra.mxu0 0.0
        %2653 = vmatpush.msra.mxu0 0.0
        %2654 = vmatpush.msra.mxu0 0.0
        %2655 = vmatpush.msra.mxu0 0.0
        %2656 = vmatpush.msra.mxu0 0.0
        %2657 = vmatpush.msra.mxu0 0.0
        %2658 = vmatpush.msra.mxu0 0.0
        %2659 = vmatpush.msra.mxu0 0.0
        %2660 = vmatpush.msra.mxu0 0.0
        %2661 = vmatpush.msra.mxu0 0.0
        %2662 = vmatpush.msra.mxu0 0.0
        %2663 = vmatpush.msra.mxu0 0.0
        %2664 = vmatpush.msra.mxu0 0.0
        %2665 = vmatpush.msra.mxu0 %v2579
        %2666 = vmatpush.msra.mxu0 %v2578
        %2667 = vmatmul.f32.gmra.mxu0 %v2646
        %v2668 = vpop.f32.mrf.mxu0
        %v2669 = vadd.f32 0.0, %v2668
        %2670 = vmatmul.f32.gmra.mxu0 %v2649
        %v2671 = vpop.f32.mrf.mxu0
        %v2672 = vadd.f32 0.0, %v2671
        %2673 = vdwg.mxu0
        %2674 = vmatpush.msra.mxu0 %v2644
        %2675 = vmatpush.msra.mxu0 %v2643
        %2676 = vmatpush.msra.mxu0 %v2642
        %2677 = vmatpush.msra.mxu0 %v2641
        %2678 = vmatpush.msra.mxu0 %v2640
        %2679 = vmatpush.msra.mxu0 %v2639
        %2680 = vmatpush.msra.mxu0 %v2638
        %2681 = vmatpush.msra.mxu0 %v2637
        %2682 = vmatpush.msra.mxu0 %v2636
        %2683 = vmatpush.msra.mxu0 %v2635
        %2684 = vmatpush.msra.mxu0 %v2634
        %2685 = vmatpush.msra.mxu0 %v2633
        %2686 = vmatpush.msra.mxu0 %v2632
        %2687 = vmatpush.msra.mxu0 %v2631
        %2688 = vmatpush.msra.mxu0 %v2630
        %2689 = vmatpush.msra.mxu0 %v2629
        %2690 = vmatmul.f32.gmra.mxu0 %v2669
        %v2691 = vpop.f32.mrf.mxu0
        %v2692 = vadd.f32 0.0, %v2691
        %2693 = vmatmul.f32.gmra.mxu0 %v2672
        %v2694 = vpop.f32.mrf.mxu0
        %v2695 = vadd.f32 0.0, %v2694
        %2696 = vdwg.mxu0
        %2697 = vmatpush.msra.mxu0 %v2597
        %2698 = vmatpush.msra.mxu0 %v2596
        %2699 = vmatpush.msra.mxu0 %v2595
        %2700 = vmatpush.msra.mxu0 %v2594
        %2701 = vmatpush.msra.mxu0 %v2593
        %2702 = vmatpush.msra.mxu0 %v2592
        %2703 = vmatpush.msra.mxu0 %v2591
        %2704 = vmatpush.msra.mxu0 %v2590
        %2705 = vmatpush.msra.mxu0 %v2589
        %2706 = vmatpush.msra.mxu0 %v2588
        %2707 = vmatpush.msra.mxu0 %v2587
        %2708 = vmatpush.msra.mxu0 %v2586
        %2709 = vmatpush.msra.mxu0 %v2585
        %2710 = vmatpush.msra.mxu0 %v2584
        %2711 = vmatpush.msra.mxu0 %v2583
        %2712 = vmatpush.msra.mxu0 %v2582
        %2713 = vmatmul.f32.gmra.mxu0 %v2622
        %v2714 = vpop.f32.mrf.mxu0
        %v2715 = vadd.f32 %v2692, %v2714
        %2716 = vmatmul.f32.gmra.mxu0 %v2625
        %v2717 = vpop.f32.mrf.mxu0
        %v2718 = vadd.f32 %v2695, %v2717
        %2719 = vdwg.mxu0
        %v2720 = vld [vmem:[%s9 + $0x1b0] sm:$0xff]
        %v2721 = vld [vmem:[%s9 + $0x1b8] sm:$0xff]
        %v2722 = vld [vmem:[#allocation7 + $0xd80] sm:$0xff]
        %v2723 = vld [vmem:[#allocation7 + $0xd88] sm:$0xff]
        %v2724 = vld [vmem:[#allocation7 + $0xd90] sm:$0xff]
        %v2725 = vld [vmem:[#allocation7 + $0xd98] sm:$0xff]
        %v2726 = vld [vmem:[#allocation7 + $0xda0] sm:$0xff]
        %v2727 = vld [vmem:[#allocation7 + $0xda8] sm:$0xff]
        %v2728 = vld [vmem:[#allocation7 + $0xdb0] sm:$0xff]
        %v2729 = vld [vmem:[#allocation7 + $0xdb8] sm:$0xff]
        %v2730 = vld [vmem:[#allocation7 + $0xdc0] sm:$0xff]
        %v2731 = vld [vmem:[#allocation7 + $0xdc8] sm:$0xff]
        %v2732 = vld [vmem:[#allocation7 + $0xdd0] sm:$0xff]
        %v2733 = vld [vmem:[#allocation7 + $0xdd8] sm:$0xff]
        %v2734 = vld [vmem:[#allocation7 + $0xde0] sm:$0xff]
        %v2735 = vld [vmem:[#allocation7 + $0xde8] sm:$0xff]
        %v2736 = vld [vmem:[#allocation7 + $0xdf0] sm:$0xff]
        %v2737 = vld [vmem:[#allocation7 + $0xdf8] sm:$0xff]
        %v2739 = vsel %vm783, %v2720, 0
        %v2742 = vsel %vm783, %v2721, 0
        %2744 = vmatpush.msra.mxu0 0.0
        %2745 = vmatpush.msra.mxu0 0.0
        %2746 = vmatpush.msra.mxu0 0.0
        %2747 = vmatpush.msra.mxu0 0.0
        %2748 = vmatpush.msra.mxu0 0.0
        %2749 = vmatpush.msra.mxu0 0.0
        %2750 = vmatpush.msra.mxu0 0.0
        %2751 = vmatpush.msra.mxu0 0.0
        %2752 = vmatpush.msra.mxu0 0.0
        %2753 = vmatpush.msra.mxu0 0.0
        %2754 = vmatpush.msra.mxu0 0.0
        %2755 = vmatpush.msra.mxu0 0.0
        %2756 = vmatpush.msra.mxu0 0.0
        %2757 = vmatpush.msra.mxu0 0.0
        %2758 = vmatpush.msra.mxu0 %v2579
        %2759 = vmatpush.msra.mxu0 %v2578
        %2760 = vmatmul.f32.gmra.mxu0 %v2739
        %v2761 = vpop.f32.mrf.mxu0
        %v2762 = vadd.f32 0.0, %v2761
        %2763 = vmatmul.f32.gmra.mxu0 %v2742
        %v2764 = vpop.f32.mrf.mxu0
        %v2765 = vadd.f32 0.0, %v2764
        %2766 = vdwg.mxu0
        %2767 = vmatpush.msra.mxu0 %v2737
        %2768 = vmatpush.msra.mxu0 %v2736
        %2769 = vmatpush.msra.mxu0 %v2735
        %2770 = vmatpush.msra.mxu0 %v2734
        %2771 = vmatpush.msra.mxu0 %v2733
        %2772 = vmatpush.msra.mxu0 %v2732
        %2773 = vmatpush.msra.mxu0 %v2731
        %2774 = vmatpush.msra.mxu0 %v2730
        %2775 = vmatpush.msra.mxu0 %v2729
        %2776 = vmatpush.msra.mxu0 %v2728
        %2777 = vmatpush.msra.mxu0 %v2727
        %2778 = vmatpush.msra.mxu0 %v2726
        %2779 = vmatpush.msra.mxu0 %v2725
        %2780 = vmatpush.msra.mxu0 %v2724
        %2781 = vmatpush.msra.mxu0 %v2723
        %2782 = vmatpush.msra.mxu0 %v2722
        %2783 = vmatmul.f32.gmra.mxu0 %v2762
        %v2784 = vpop.f32.mrf.mxu0
        %v2785 = vadd.f32 0.0, %v2784
        %2786 = vmatmul.f32.gmra.mxu0 %v2765
        %v2787 = vpop.f32.mrf.mxu0
        %v2788 = vadd.f32 0.0, %v2787
        %2789 = vdwg.mxu0
        %v2790 = vadd.f32 %v2715, %v2785
        %v2791 = vadd.f32 %v2718, %v2788
        %v2792 = vld [vmem:[#allocation9 + $0x9] sm:$0x1]
        %v2793 = vperm.slane %v2792, 0
        %v2794 = vadd.f32 %v2790, %v2793
        %v2795 = vadd.f32 %v2791, %v2793
        %v2796 = vadd.f32 %v2358, %v2794
        %v2797 = vadd.f32 %v2359, %v2795
        %v2798 = vmax.f32 %v2796, 0.0
        %v2799 = vmax.f32 %v2797, 0.0
        %v2800 = vld [vmem:[%s9 + $0x1c0] sm:$0xff]
        %v2801 = vld [vmem:[%s9 + $0x1c8] sm:$0xff]
        %v2802 = vld [vmem:[#allocation7 + $0xe00] sm:$0xff]
        %v2803 = vld [vmem:[#allocation7 + $0xe08] sm:$0xff]
        %v2804 = vld [vmem:[#allocation7 + $0xe10] sm:$0xff]
        %v2805 = vld [vmem:[#allocation7 + $0xe18] sm:$0xff]
        %v2806 = vld [vmem:[#allocation7 + $0xe20] sm:$0xff]
        %v2807 = vld [vmem:[#allocation7 + $0xe28] sm:$0xff]
        %v2808 = vld [vmem:[#allocation7 + $0xe30] sm:$0xff]
        %v2809 = vld [vmem:[#allocation7 + $0xe38] sm:$0xff]
        %v2810 = vld [vmem:[#allocation7 + $0xe40] sm:$0xff]
        %v2811 = vld [vmem:[#allocation7 + $0xe48] sm:$0xff]
        %v2812 = vld [vmem:[#allocation7 + $0xe50] sm:$0xff]
        %v2813 = vld [vmem:[#allocation7 + $0xe58] sm:$0xff]
        %v2814 = vld [vmem:[#allocation7 + $0xe60] sm:$0xff]
        %v2815 = vld [vmem:[#allocation7 + $0xe68] sm:$0xff]
        %v2816 = vld [vmem:[#allocation7 + $0xe70] sm:$0xff]
        %v2817 = vld [vmem:[#allocation7 + $0xe78] sm:$0xff]
        %v2819 = vsel %vm783, %v2800, 0
        %v2822 = vsel %vm783, %v2801, 0
        %2824 = vmatpush.msra.mxu0 0.0
        %2825 = vmatpush.msra.mxu0 0.0
        %2826 = vmatpush.msra.mxu0 0.0
        %2827 = vmatpush.msra.mxu0 0.0
        %2828 = vmatpush.msra.mxu0 0.0
        %2829 = vmatpush.msra.mxu0 0.0
        %2830 = vmatpush.msra.mxu0 0.0
        %2831 = vmatpush.msra.mxu0 0.0
        %2832 = vmatpush.msra.mxu0 0.0
        %2833 = vmatpush.msra.mxu0 0.0
        %2834 = vmatpush.msra.mxu0 0.0
        %2835 = vmatpush.msra.mxu0 0.0
        %2836 = vmatpush.msra.mxu0 0.0
        %2837 = vmatpush.msra.mxu0 0.0
        %2838 = vmatpush.msra.mxu0 %v2799
        %2839 = vmatpush.msra.mxu0 %v2798
        %2840 = vmatmul.f32.gmra.mxu0 %v2819
        %v2841 = vpop.f32.mrf.mxu0
        %v2842 = vadd.f32 0.0, %v2841
        %2843 = vmatmul.f32.gmra.mxu0 %v2822
        %v2844 = vpop.f32.mrf.mxu0
        %v2845 = vadd.f32 0.0, %v2844
        %2846 = vdwg.mxu0
        %v2847 = vld [vmem:[%s9 + $0x1d0] sm:$0xff]
        %v2848 = vld [vmem:[%s9 + $0x1d8] sm:$0xff]
        %v2849 = vld [vmem:[#allocation7 + $0xe80] sm:$0xff]
        %v2850 = vld [vmem:[#allocation7 + $0xe88] sm:$0xff]
        %v2851 = vld [vmem:[#allocation7 + $0xe90] sm:$0xff]
        %v2852 = vld [vmem:[#allocation7 + $0xe98] sm:$0xff]
        %v2853 = vld [vmem:[#allocation7 + $0xea0] sm:$0xff]
        %v2854 = vld [vmem:[#allocation7 + $0xea8] sm:$0xff]
        %v2855 = vld [vmem:[#allocation7 + $0xeb0] sm:$0xff]
        %v2856 = vld [vmem:[#allocation7 + $0xeb8] sm:$0xff]
        %v2857 = vld [vmem:[#allocation7 + $0xec0] sm:$0xff]
        %v2858 = vld [vmem:[#allocation7 + $0xec8] sm:$0xff]
        %v2859 = vld [vmem:[#allocation7 + $0xed0] sm:$0xff]
        %v2860 = vld [vmem:[#allocation7 + $0xed8] sm:$0xff]
        %v2861 = vld [vmem:[#allocation7 + $0xee0] sm:$0xff]
        %v2862 = vld [vmem:[#allocation7 + $0xee8] sm:$0xff]
        %v2863 = vld [vmem:[#allocation7 + $0xef0] sm:$0xff]
        %v2864 = vld [vmem:[#allocation7 + $0xef8] sm:$0xff]
        %v2866 = vsel %vm783, %v2847, 0
        %v2869 = vsel %vm783, %v2848, 0
        %2871 = vmatpush.msra.mxu0 0.0
        %2872 = vmatpush.msra.mxu0 0.0
        %2873 = vmatpush.msra.mxu0 0.0
        %2874 = vmatpush.msra.mxu0 0.0
        %2875 = vmatpush.msra.mxu0 0.0
        %2876 = vmatpush.msra.mxu0 0.0
        %2877 = vmatpush.msra.mxu0 0.0
        %2878 = vmatpush.msra.mxu0 0.0
        %2879 = vmatpush.msra.mxu0 0.0
        %2880 = vmatpush.msra.mxu0 0.0
        %2881 = vmatpush.msra.mxu0 0.0
        %2882 = vmatpush.msra.mxu0 0.0
        %2883 = vmatpush.msra.mxu0 0.0
        %2884 = vmatpush.msra.mxu0 0.0
        %2885 = vmatpush.msra.mxu0 %v2799
        %2886 = vmatpush.msra.mxu0 %v2798
        %2887 = vmatmul.f32.gmra.mxu0 %v2866
        %v2888 = vpop.f32.mrf.mxu0
        %v2889 = vadd.f32 0.0, %v2888
        %2890 = vmatmul.f32.gmra.mxu0 %v2869
        %v2891 = vpop.f32.mrf.mxu0
        %v2892 = vadd.f32 0.0, %v2891
        %2893 = vdwg.mxu0
        %2894 = vmatpush.msra.mxu0 %v2864
        %2895 = vmatpush.msra.mxu0 %v2863
        %2896 = vmatpush.msra.mxu0 %v2862
        %2897 = vmatpush.msra.mxu0 %v2861
        %2898 = vmatpush.msra.mxu0 %v2860
        %2899 = vmatpush.msra.mxu0 %v2859
        %2900 = vmatpush.msra.mxu0 %v2858
        %2901 = vmatpush.msra.mxu0 %v2857
        %2902 = vmatpush.msra.mxu0 %v2856
        %2903 = vmatpush.msra.mxu0 %v2855
        %2904 = vmatpush.msra.mxu0 %v2854
        %2905 = vmatpush.msra.mxu0 %v2853
        %2906 = vmatpush.msra.mxu0 %v2852
        %2907 = vmatpush.msra.mxu0 %v2851
        %2908 = vmatpush.msra.mxu0 %v2850
        %2909 = vmatpush.msra.mxu0 %v2849
        %2910 = vmatmul.f32.gmra.mxu0 %v2889
        %v2911 = vpop.f32.mrf.mxu0
        %v2912 = vadd.f32 0.0, %v2911
        %2913 = vmatmul.f32.gmra.mxu0 %v2892
        %v2914 = vpop.f32.mrf.mxu0
        %v2915 = vadd.f32 0.0, %v2914
        %2916 = vdwg.mxu0
        %2917 = vmatpush.msra.mxu0 %v2817
        %2918 = vmatpush.msra.mxu0 %v2816
        %2919 = vmatpush.msra.mxu0 %v2815
        %2920 = vmatpush.msra.mxu0 %v2814
        %2921 = vmatpush.msra.mxu0 %v2813
        %2922 = vmatpush.msra.mxu0 %v2812
        %2923 = vmatpush.msra.mxu0 %v2811
        %2924 = vmatpush.msra.mxu0 %v2810
        %2925 = vmatpush.msra.mxu0 %v2809
        %2926 = vmatpush.msra.mxu0 %v2808
        %2927 = vmatpush.msra.mxu0 %v2807
        %2928 = vmatpush.msra.mxu0 %v2806
        %2929 = vmatpush.msra.mxu0 %v2805
        %2930 = vmatpush.msra.mxu0 %v2804
        %2931 = vmatpush.msra.mxu0 %v2803
        %2932 = vmatpush.msra.mxu0 %v2802
        %2933 = vmatmul.f32.gmra.mxu0 %v2842
        %v2934 = vpop.f32.mrf.mxu0
        %v2935 = vadd.f32 %v2912, %v2934
        %2936 = vmatmul.f32.gmra.mxu0 %v2845
        %v2937 = vpop.f32.mrf.mxu0
        %v2938 = vadd.f32 %v2915, %v2937
        %2939 = vdwg.mxu0
        %v2940 = vld [vmem:[%s9 + $0x1e0] sm:$0xff]
        %v2941 = vld [vmem:[%s9 + $0x1e8] sm:$0xff]
        %v2942 = vld [vmem:[#allocation7 + $0xf00] sm:$0xff]
        %v2943 = vld [vmem:[#allocation7 + $0xf08] sm:$0xff]
        %v2944 = vld [vmem:[#allocation7 + $0xf10] sm:$0xff]
        %v2945 = vld [vmem:[#allocation7 + $0xf18] sm:$0xff]
        %v2946 = vld [vmem:[#allocation7 + $0xf20] sm:$0xff]
        %v2947 = vld [vmem:[#allocation7 + $0xf28] sm:$0xff]
        %v2948 = vld [vmem:[#allocation7 + $0xf30] sm:$0xff]
        %v2949 = vld [vmem:[#allocation7 + $0xf38] sm:$0xff]
        %v2950 = vld [vmem:[#allocation7 + $0xf40] sm:$0xff]
        %v2951 = vld [vmem:[#allocation7 + $0xf48] sm:$0xff]
        %v2952 = vld [vmem:[#allocation7 + $0xf50] sm:$0xff]
        %v2953 = vld [vmem:[#allocation7 + $0xf58] sm:$0xff]
        %v2954 = vld [vmem:[#allocation7 + $0xf60] sm:$0xff]
        %v2955 = vld [vmem:[#allocation7 + $0xf68] sm:$0xff]
        %v2956 = vld [vmem:[#allocation7 + $0xf70] sm:$0xff]
        %v2957 = vld [vmem:[#allocation7 + $0xf78] sm:$0xff]
        %v2959 = vsel %vm783, %v2940, 0
        %v2962 = vsel %vm783, %v2941, 0
        %2964 = vmatpush.msra.mxu0 0.0
        %2965 = vmatpush.msra.mxu0 0.0
        %2966 = vmatpush.msra.mxu0 0.0
        %2967 = vmatpush.msra.mxu0 0.0
        %2968 = vmatpush.msra.mxu0 0.0
        %2969 = vmatpush.msra.mxu0 0.0
        %2970 = vmatpush.msra.mxu0 0.0
        %2971 = vmatpush.msra.mxu0 0.0
        %2972 = vmatpush.msra.mxu0 0.0
        %2973 = vmatpush.msra.mxu0 0.0
        %2974 = vmatpush.msra.mxu0 0.0
        %2975 = vmatpush.msra.mxu0 0.0
        %2976 = vmatpush.msra.mxu0 0.0
        %2977 = vmatpush.msra.mxu0 0.0
        %2978 = vmatpush.msra.mxu0 %v2799
        %2979 = vmatpush.msra.mxu0 %v2798
        %2980 = vmatmul.f32.gmra.mxu0 %v2959
        %v2981 = vpop.f32.mrf.mxu0
        %v2982 = vadd.f32 0.0, %v2981
        %2983 = vmatmul.f32.gmra.mxu0 %v2962
        %v2984 = vpop.f32.mrf.mxu0
        %v2985 = vadd.f32 0.0, %v2984
        %2986 = vdwg.mxu0
        %2987 = vmatpush.msra.mxu0 %v2957
        %2988 = vmatpush.msra.mxu0 %v2956
        %2989 = vmatpush.msra.mxu0 %v2955
        %2990 = vmatpush.msra.mxu0 %v2954
        %2991 = vmatpush.msra.mxu0 %v2953
        %2992 = vmatpush.msra.mxu0 %v2952
        %2993 = vmatpush.msra.mxu0 %v2951
        %2994 = vmatpush.msra.mxu0 %v2950
        %2995 = vmatpush.msra.mxu0 %v2949
        %2996 = vmatpush.msra.mxu0 %v2948
        %2997 = vmatpush.msra.mxu0 %v2947
        %2998 = vmatpush.msra.mxu0 %v2946
        %2999 = vmatpush.msra.mxu0 %v2945
        %3000 = vmatpush.msra.mxu0 %v2944
        %3001 = vmatpush.msra.mxu0 %v2943
        %3002 = vmatpush.msra.mxu0 %v2942
        %3003 = vmatmul.f32.gmra.mxu0 %v2982
        %v3004 = vpop.f32.mrf.mxu0
        %v3005 = vadd.f32 0.0, %v3004
        %3006 = vmatmul.f32.gmra.mxu0 %v2985
        %v3007 = vpop.f32.mrf.mxu0
        %v3008 = vadd.f32 0.0, %v3007
        %3009 = vdwg.mxu0
        %v3010 = vadd.f32 %v2935, %v3005
        %v3011 = vadd.f32 %v2938, %v3008
        %v3012 = vld [vmem:[#allocation9 + $0xa] sm:$0x1]
        %v3013 = vperm.slane %v3012, 0
        %v3014 = vadd.f32 %v3010, %v3013
        %v3015 = vadd.f32 %v3011, %v3013
        %v3016 = vmax.f32 %v3014, 0.0
        %v3017 = vmax.f32 %v3015, 0.0
        %v3018 = vld [vmem:[%s9 + $0x1f0] sm:$0xff]
        %v3019 = vld [vmem:[%s9 + $0x1f8] sm:$0xff]
        %v3020 = vld [vmem:[#allocation7 + $0xf80] sm:$0xff]
        %v3021 = vld [vmem:[#allocation7 + $0xf88] sm:$0xff]
        %v3022 = vld [vmem:[#allocation7 + $0xf90] sm:$0xff]
        %v3023 = vld [vmem:[#allocation7 + $0xf98] sm:$0xff]
        %v3024 = vld [vmem:[#allocation7 + $0xfa0] sm:$0xff]
        %v3025 = vld [vmem:[#allocation7 + $0xfa8] sm:$0xff]
        %v3026 = vld [vmem:[#allocation7 + $0xfb0] sm:$0xff]
        %v3027 = vld [vmem:[#allocation7 + $0xfb8] sm:$0xff]
        %v3028 = vld [vmem:[#allocation7 + $0xfc0] sm:$0xff]
        %v3029 = vld [vmem:[#allocation7 + $0xfc8] sm:$0xff]
        %v3030 = vld [vmem:[#allocation7 + $0xfd0] sm:$0xff]
        %v3031 = vld [vmem:[#allocation7 + $0xfd8] sm:$0xff]
        %v3032 = vld [vmem:[#allocation7 + $0xfe0] sm:$0xff]
        %v3033 = vld [vmem:[#allocation7 + $0xfe8] sm:$0xff]
        %v3034 = vld [vmem:[#allocation7 + $0xff0] sm:$0xff]
        %v3035 = vld [vmem:[#allocation7 + $0xff8] sm:$0xff]
        %v3037 = vsel %vm783, %v3018, 0
        %v3040 = vsel %vm783, %v3019, 0
        %3042 = vmatpush.msra.mxu0 0.0
        %3043 = vmatpush.msra.mxu0 0.0
        %3044 = vmatpush.msra.mxu0 0.0
        %3045 = vmatpush.msra.mxu0 0.0
        %3046 = vmatpush.msra.mxu0 0.0
        %3047 = vmatpush.msra.mxu0 0.0
        %3048 = vmatpush.msra.mxu0 0.0
        %3049 = vmatpush.msra.mxu0 0.0
        %3050 = vmatpush.msra.mxu0 0.0
        %3051 = vmatpush.msra.mxu0 0.0
        %3052 = vmatpush.msra.mxu0 0.0
        %3053 = vmatpush.msra.mxu0 0.0
        %3054 = vmatpush.msra.mxu0 0.0
        %3055 = vmatpush.msra.mxu0 0.0
        %3056 = vmatpush.msra.mxu0 %v3017
        %3057 = vmatpush.msra.mxu0 %v3016
        %3058 = vmatmul.f32.gmra.mxu0 %v3037
        %v3059 = vpop.f32.mrf.mxu0
        %v3060 = vadd.f32 0.0, %v3059
        %3061 = vmatmul.f32.gmra.mxu0 %v3040
        %v3062 = vpop.f32.mrf.mxu0
        %v3063 = vadd.f32 0.0, %v3062
        %3064 = vdwg.mxu0
        %v3065 = vld [vmem:[%s9 + $0x200] sm:$0xff]
        %v3066 = vld [vmem:[%s9 + $0x208] sm:$0xff]
        %v3067 = vld [vmem:[#allocation7 + $0x1000] sm:$0xff]
        %v3068 = vld [vmem:[#allocation7 + $0x1008] sm:$0xff]
        %v3069 = vld [vmem:[#allocation7 + $0x1010] sm:$0xff]
        %v3070 = vld [vmem:[#allocation7 + $0x1018] sm:$0xff]
        %v3071 = vld [vmem:[#allocation7 + $0x1020] sm:$0xff]
        %v3072 = vld [vmem:[#allocation7 + $0x1028] sm:$0xff]
        %v3073 = vld [vmem:[#allocation7 + $0x1030] sm:$0xff]
        %v3074 = vld [vmem:[#allocation7 + $0x1038] sm:$0xff]
        %v3075 = vld [vmem:[#allocation7 + $0x1040] sm:$0xff]
        %v3076 = vld [vmem:[#allocation7 + $0x1048] sm:$0xff]
        %v3077 = vld [vmem:[#allocation7 + $0x1050] sm:$0xff]
        %v3078 = vld [vmem:[#allocation7 + $0x1058] sm:$0xff]
        %v3079 = vld [vmem:[#allocation7 + $0x1060] sm:$0xff]
        %v3080 = vld [vmem:[#allocation7 + $0x1068] sm:$0xff]
        %v3081 = vld [vmem:[#allocation7 + $0x1070] sm:$0xff]
        %v3082 = vld [vmem:[#allocation7 + $0x1078] sm:$0xff]
        %v3084 = vsel %vm783, %v3065, 0
        %v3087 = vsel %vm783, %v3066, 0
        %3089 = vmatpush.msra.mxu0 0.0
        %3090 = vmatpush.msra.mxu0 0.0
        %3091 = vmatpush.msra.mxu0 0.0
        %3092 = vmatpush.msra.mxu0 0.0
        %3093 = vmatpush.msra.mxu0 0.0
        %3094 = vmatpush.msra.mxu0 0.0
        %3095 = vmatpush.msra.mxu0 0.0
        %3096 = vmatpush.msra.mxu0 0.0
        %3097 = vmatpush.msra.mxu0 0.0
        %3098 = vmatpush.msra.mxu0 0.0
        %3099 = vmatpush.msra.mxu0 0.0
        %3100 = vmatpush.msra.mxu0 0.0
        %3101 = vmatpush.msra.mxu0 0.0
        %3102 = vmatpush.msra.mxu0 0.0
        %3103 = vmatpush.msra.mxu0 %v3017
        %3104 = vmatpush.msra.mxu0 %v3016
        %3105 = vmatmul.f32.gmra.mxu0 %v3084
        %v3106 = vpop.f32.mrf.mxu0
        %v3107 = vadd.f32 0.0, %v3106
        %3108 = vmatmul.f32.gmra.mxu0 %v3087
        %v3109 = vpop.f32.mrf.mxu0
        %v3110 = vadd.f32 0.0, %v3109
        %3111 = vdwg.mxu0
        %3112 = vmatpush.msra.mxu0 %v3082
        %3113 = vmatpush.msra.mxu0 %v3081
        %3114 = vmatpush.msra.mxu0 %v3080
        %3115 = vmatpush.msra.mxu0 %v3079
        %3116 = vmatpush.msra.mxu0 %v3078
        %3117 = vmatpush.msra.mxu0 %v3077
        %3118 = vmatpush.msra.mxu0 %v3076
        %3119 = vmatpush.msra.mxu0 %v3075
        %3120 = vmatpush.msra.mxu0 %v3074
        %3121 = vmatpush.msra.mxu0 %v3073
        %3122 = vmatpush.msra.mxu0 %v3072
        %3123 = vmatpush.msra.mxu0 %v3071
        %3124 = vmatpush.msra.mxu0 %v3070
        %3125 = vmatpush.msra.mxu0 %v3069
        %3126 = vmatpush.msra.mxu0 %v3068
        %3127 = vmatpush.msra.mxu0 %v3067
        %3128 = vmatmul.f32.gmra.mxu0 %v3107
        %v3129 = vpop.f32.mrf.mxu0
        %v3130 = vadd.f32 0.0, %v3129
        %3131 = vmatmul.f32.gmra.mxu0 %v3110
        %v3132 = vpop.f32.mrf.mxu0
        %v3133 = vadd.f32 0.0, %v3132
        %3134 = vdwg.mxu0
        %3135 = vmatpush.msra.mxu0 %v3035
        %3136 = vmatpush.msra.mxu0 %v3034
        %3137 = vmatpush.msra.mxu0 %v3033
        %3138 = vmatpush.msra.mxu0 %v3032
        %3139 = vmatpush.msra.mxu0 %v3031
        %3140 = vmatpush.msra.mxu0 %v3030
        %3141 = vmatpush.msra.mxu0 %v3029
        %3142 = vmatpush.msra.mxu0 %v3028
        %3143 = vmatpush.msra.mxu0 %v3027
        %3144 = vmatpush.msra.mxu0 %v3026
        %3145 = vmatpush.msra.mxu0 %v3025
        %3146 = vmatpush.msra.mxu0 %v3024
        %3147 = vmatpush.msra.mxu0 %v3023
        %3148 = vmatpush.msra.mxu0 %v3022
        %3149 = vmatpush.msra.mxu0 %v3021
        %3150 = vmatpush.msra.mxu0 %v3020
        %3151 = vmatmul.f32.gmra.mxu0 %v3060
        %v3152 = vpop.f32.mrf.mxu0
        %v3153 = vadd.f32 %v3130, %v3152
        %3154 = vmatmul.f32.gmra.mxu0 %v3063
        %v3155 = vpop.f32.mrf.mxu0
        %v3156 = vadd.f32 %v3133, %v3155
        %3157 = vdwg.mxu0
        %v3158 = vld [vmem:[%s9 + $0x210] sm:$0xff]
        %v3159 = vld [vmem:[%s9 + $0x218] sm:$0xff]
        %v3160 = vld [vmem:[#allocation7 + $0x1080] sm:$0xff]
        %v3161 = vld [vmem:[#allocation7 + $0x1088] sm:$0xff]
        %v3162 = vld [vmem:[#allocation7 + $0x1090] sm:$0xff]
        %v3163 = vld [vmem:[#allocation7 + $0x1098] sm:$0xff]
        %v3164 = vld [vmem:[#allocation7 + $0x10a0] sm:$0xff]
        %v3165 = vld [vmem:[#allocation7 + $0x10a8] sm:$0xff]
        %v3166 = vld [vmem:[#allocation7 + $0x10b0] sm:$0xff]
        %v3167 = vld [vmem:[#allocation7 + $0x10b8] sm:$0xff]
        %v3168 = vld [vmem:[#allocation7 + $0x10c0] sm:$0xff]
        %v3169 = vld [vmem:[#allocation7 + $0x10c8] sm:$0xff]
        %v3170 = vld [vmem:[#allocation7 + $0x10d0] sm:$0xff]
        %v3171 = vld [vmem:[#allocation7 + $0x10d8] sm:$0xff]
        %v3172 = vld [vmem:[#allocation7 + $0x10e0] sm:$0xff]
        %v3173 = vld [vmem:[#allocation7 + $0x10e8] sm:$0xff]
        %v3174 = vld [vmem:[#allocation7 + $0x10f0] sm:$0xff]
        %v3175 = vld [vmem:[#allocation7 + $0x10f8] sm:$0xff]
        %v3177 = vsel %vm783, %v3158, 0
        %v3180 = vsel %vm783, %v3159, 0
        %3182 = vmatpush.msra.mxu0 0.0
        %3183 = vmatpush.msra.mxu0 0.0
        %3184 = vmatpush.msra.mxu0 0.0
        %3185 = vmatpush.msra.mxu0 0.0
        %3186 = vmatpush.msra.mxu0 0.0
        %3187 = vmatpush.msra.mxu0 0.0
        %3188 = vmatpush.msra.mxu0 0.0
        %3189 = vmatpush.msra.mxu0 0.0
        %3190 = vmatpush.msra.mxu0 0.0
        %3191 = vmatpush.msra.mxu0 0.0
        %3192 = vmatpush.msra.mxu0 0.0
        %3193 = vmatpush.msra.mxu0 0.0
        %3194 = vmatpush.msra.mxu0 0.0
        %3195 = vmatpush.msra.mxu0 0.0
        %3196 = vmatpush.msra.mxu0 %v3017
        %3197 = vmatpush.msra.mxu0 %v3016
        %3198 = vmatmul.f32.gmra.mxu0 %v3177
        %v3199 = vpop.f32.mrf.mxu0
        %v3200 = vadd.f32 0.0, %v3199
        %3201 = vmatmul.f32.gmra.mxu0 %v3180
        %v3202 = vpop.f32.mrf.mxu0
        %v3203 = vadd.f32 0.0, %v3202
        %3204 = vdwg.mxu0
        %3205 = vmatpush.msra.mxu0 %v3175
        %3206 = vmatpush.msra.mxu0 %v3174
        %3207 = vmatpush.msra.mxu0 %v3173
        %3208 = vmatpush.msra.mxu0 %v3172
        %3209 = vmatpush.msra.mxu0 %v3171
        %3210 = vmatpush.msra.mxu0 %v3170
        %3211 = vmatpush.msra.mxu0 %v3169
        %3212 = vmatpush.msra.mxu0 %v3168
        %3213 = vmatpush.msra.mxu0 %v3167
        %3214 = vmatpush.msra.mxu0 %v3166
        %3215 = vmatpush.msra.mxu0 %v3165
        %3216 = vmatpush.msra.mxu0 %v3164
        %3217 = vmatpush.msra.mxu0 %v3163
        %3218 = vmatpush.msra.mxu0 %v3162
        %3219 = vmatpush.msra.mxu0 %v3161
        %3220 = vmatpush.msra.mxu0 %v3160
        %3221 = vmatmul.f32.gmra.mxu0 %v3200
        %v3222 = vpop.f32.mrf.mxu0
        %v3223 = vadd.f32 0.0, %v3222
        %3224 = vmatmul.f32.gmra.mxu0 %v3203
        %v3225 = vpop.f32.mrf.mxu0
        %v3226 = vadd.f32 0.0, %v3225
        %3227 = vdwg.mxu0
        %v3228 = vadd.f32 %v3153, %v3223
        %v3229 = vadd.f32 %v3156, %v3226
        %v3230 = vld [vmem:[#allocation9 + $0xb] sm:$0x1]
        %v3231 = vperm.slane %v3230, 0
        %v3232 = vadd.f32 %v3228, %v3231
        %v3233 = vadd.f32 %v3229, %v3231
        %v3234 = vld [vmem:[%s9 + $0x220] sm:$0xff]
        %v3235 = vld [vmem:[%s9 + $0x228] sm:$0xff]
        %v3236 = vld [vmem:[#allocation7 + $0x1100] sm:$0xff]
        %v3237 = vld [vmem:[#allocation7 + $0x1108] sm:$0xff]
        %v3238 = vld [vmem:[#allocation7 + $0x1110] sm:$0xff]
        %v3239 = vld [vmem:[#allocation7 + $0x1118] sm:$0xff]
        %v3240 = vld [vmem:[#allocation7 + $0x1120] sm:$0xff]
        %v3241 = vld [vmem:[#allocation7 + $0x1128] sm:$0xff]
        %v3242 = vld [vmem:[#allocation7 + $0x1130] sm:$0xff]
        %v3243 = vld [vmem:[#allocation7 + $0x1138] sm:$0xff]
        %v3244 = vld [vmem:[#allocation7 + $0x1140] sm:$0xff]
        %v3245 = vld [vmem:[#allocation7 + $0x1148] sm:$0xff]
        %v3246 = vld [vmem:[#allocation7 + $0x1150] sm:$0xff]
        %v3247 = vld [vmem:[#allocation7 + $0x1158] sm:$0xff]
        %v3248 = vld [vmem:[#allocation7 + $0x1160] sm:$0xff]
        %v3249 = vld [vmem:[#allocation7 + $0x1168] sm:$0xff]
        %v3250 = vld [vmem:[#allocation7 + $0x1170] sm:$0xff]
        %v3251 = vld [vmem:[#allocation7 + $0x1178] sm:$0xff]
        %v3253 = vsel %vm783, %v3234, 0
        %v3256 = vsel %vm783, %v3235, 0
        %3258 = vmatpush.msra.mxu0 0.0
        %3259 = vmatpush.msra.mxu0 0.0
        %3260 = vmatpush.msra.mxu0 0.0
        %3261 = vmatpush.msra.mxu0 0.0
        %3262 = vmatpush.msra.mxu0 0.0
        %3263 = vmatpush.msra.mxu0 0.0
        %3264 = vmatpush.msra.mxu0 0.0
        %3265 = vmatpush.msra.mxu0 0.0
        %3266 = vmatpush.msra.mxu0 0.0
        %3267 = vmatpush.msra.mxu0 0.0
        %3268 = vmatpush.msra.mxu0 0.0
        %3269 = vmatpush.msra.mxu0 0.0
        %3270 = vmatpush.msra.mxu0 0.0
        %3271 = vmatpush.msra.mxu0 0.0
        %3272 = vmatpush.msra.mxu0 %v764
        %3273 = vmatpush.msra.mxu0 %v763
        %3274 = vmatmul.f32.gmra.mxu0 %v3253
        %v3275 = vpop.f32.mrf.mxu0
        %v3276 = vadd.f32 0.0, %v3275
        %3277 = vmatmul.f32.gmra.mxu0 %v3256
        %v3278 = vpop.f32.mrf.mxu0
        %v3279 = vadd.f32 0.0, %v3278
        %3280 = vdwg.mxu0
        %v3281 = vld [vmem:[%s9 + $0x230] sm:$0xff]
        %v3282 = vld [vmem:[%s9 + $0x238] sm:$0xff]
        %v3283 = vld [vmem:[#allocation7 + $0x1180] sm:$0xff]
        %v3284 = vld [vmem:[#allocation7 + $0x1188] sm:$0xff]
        %v3285 = vld [vmem:[#allocation7 + $0x1190] sm:$0xff]
        %v3286 = vld [vmem:[#allocation7 + $0x1198] sm:$0xff]
        %v3287 = vld [vmem:[#allocation7 + $0x11a0] sm:$0xff]
        %v3288 = vld [vmem:[#allocation7 + $0x11a8] sm:$0xff]
        %v3289 = vld [vmem:[#allocation7 + $0x11b0] sm:$0xff]
        %v3290 = vld [vmem:[#allocation7 + $0x11b8] sm:$0xff]
        %v3291 = vld [vmem:[#allocation7 + $0x11c0] sm:$0xff]
        %v3292 = vld [vmem:[#allocation7 + $0x11c8] sm:$0xff]
        %v3293 = vld [vmem:[#allocation7 + $0x11d0] sm:$0xff]
        %v3294 = vld [vmem:[#allocation7 + $0x11d8] sm:$0xff]
        %v3295 = vld [vmem:[#allocation7 + $0x11e0] sm:$0xff]
        %v3296 = vld [vmem:[#allocation7 + $0x11e8] sm:$0xff]
        %v3297 = vld [vmem:[#allocation7 + $0x11f0] sm:$0xff]
        %v3298 = vld [vmem:[#allocation7 + $0x11f8] sm:$0xff]
        %v3300 = vsel %vm783, %v3281, 0
        %v3303 = vsel %vm783, %v3282, 0
        %3305 = vmatpush.msra.mxu0 0.0
        %3306 = vmatpush.msra.mxu0 0.0
        %3307 = vmatpush.msra.mxu0 0.0
        %3308 = vmatpush.msra.mxu0 0.0
        %3309 = vmatpush.msra.mxu0 0.0
        %3310 = vmatpush.msra.mxu0 0.0
        %3311 = vmatpush.msra.mxu0 0.0
        %3312 = vmatpush.msra.mxu0 0.0
        %3313 = vmatpush.msra.mxu0 0.0
        %3314 = vmatpush.msra.mxu0 0.0
        %3315 = vmatpush.msra.mxu0 0.0
        %3316 = vmatpush.msra.mxu0 0.0
        %3317 = vmatpush.msra.mxu0 0.0
        %3318 = vmatpush.msra.mxu0 0.0
        %3319 = vmatpush.msra.mxu0 %v764
        %3320 = vmatpush.msra.mxu0 %v763
        %3321 = vmatmul.f32.gmra.mxu0 %v3300
        %v3322 = vpop.f32.mrf.mxu0
        %v3323 = vadd.f32 0.0, %v3322
        %3324 = vmatmul.f32.gmra.mxu0 %v3303
        %v3325 = vpop.f32.mrf.mxu0
        %v3326 = vadd.f32 0.0, %v3325
        %3327 = vdwg.mxu0
        %3328 = vmatpush.msra.mxu0 %v3298
        %3329 = vmatpush.msra.mxu0 %v3297
        %3330 = vmatpush.msra.mxu0 %v3296
        %3331 = vmatpush.msra.mxu0 %v3295
        %3332 = vmatpush.msra.mxu0 %v3294
        %3333 = vmatpush.msra.mxu0 %v3293
        %3334 = vmatpush.msra.mxu0 %v3292
        %3335 = vmatpush.msra.mxu0 %v3291
        %3336 = vmatpush.msra.mxu0 %v3290
        %3337 = vmatpush.msra.mxu0 %v3289
        %3338 = vmatpush.msra.mxu0 %v3288
        %3339 = vmatpush.msra.mxu0 %v3287
        %3340 = vmatpush.msra.mxu0 %v3286
        %3341 = vmatpush.msra.mxu0 %v3285
        %3342 = vmatpush.msra.mxu0 %v3284
        %3343 = vmatpush.msra.mxu0 %v3283
        %3344 = vmatmul.f32.gmra.mxu0 %v3323
        %v3345 = vpop.f32.mrf.mxu0
        %v3346 = vadd.f32 0.0, %v3345
        %3347 = vmatmul.f32.gmra.mxu0 %v3326
        %v3348 = vpop.f32.mrf.mxu0
        %v3349 = vadd.f32 0.0, %v3348
        %3350 = vdwg.mxu0
        %3351 = vmatpush.msra.mxu0 %v3251
        %3352 = vmatpush.msra.mxu0 %v3250
        %3353 = vmatpush.msra.mxu0 %v3249
        %3354 = vmatpush.msra.mxu0 %v3248
        %3355 = vmatpush.msra.mxu0 %v3247
        %3356 = vmatpush.msra.mxu0 %v3246
        %3357 = vmatpush.msra.mxu0 %v3245
        %3358 = vmatpush.msra.mxu0 %v3244
        %3359 = vmatpush.msra.mxu0 %v3243
        %3360 = vmatpush.msra.mxu0 %v3242
        %3361 = vmatpush.msra.mxu0 %v3241
        %3362 = vmatpush.msra.mxu0 %v3240
        %3363 = vmatpush.msra.mxu0 %v3239
        %3364 = vmatpush.msra.mxu0 %v3238
        %3365 = vmatpush.msra.mxu0 %v3237
        %3366 = vmatpush.msra.mxu0 %v3236
        %3367 = vmatmul.f32.gmra.mxu0 %v3276
        %v3368 = vpop.f32.mrf.mxu0
        %v3369 = vadd.f32 %v3346, %v3368
        %3370 = vmatmul.f32.gmra.mxu0 %v3279
        %v3371 = vpop.f32.mrf.mxu0
        %v3372 = vadd.f32 %v3349, %v3371
        %3373 = vdwg.mxu0
        %v3374 = vld [vmem:[%s9 + $0x240] sm:$0xff]
        %v3375 = vld [vmem:[%s9 + $0x248] sm:$0xff]
        %v3376 = vld [vmem:[#allocation7 + $0x1200] sm:$0xff]
        %v3377 = vld [vmem:[#allocation7 + $0x1208] sm:$0xff]
        %v3378 = vld [vmem:[#allocation7 + $0x1210] sm:$0xff]
        %v3379 = vld [vmem:[#allocation7 + $0x1218] sm:$0xff]
        %v3380 = vld [vmem:[#allocation7 + $0x1220] sm:$0xff]
        %v3381 = vld [vmem:[#allocation7 + $0x1228] sm:$0xff]
        %v3382 = vld [vmem:[#allocation7 + $0x1230] sm:$0xff]
        %v3383 = vld [vmem:[#allocation7 + $0x1238] sm:$0xff]
        %v3384 = vld [vmem:[#allocation7 + $0x1240] sm:$0xff]
        %v3385 = vld [vmem:[#allocation7 + $0x1248] sm:$0xff]
        %v3386 = vld [vmem:[#allocation7 + $0x1250] sm:$0xff]
        %v3387 = vld [vmem:[#allocation7 + $0x1258] sm:$0xff]
        %v3388 = vld [vmem:[#allocation7 + $0x1260] sm:$0xff]
        %v3389 = vld [vmem:[#allocation7 + $0x1268] sm:$0xff]
        %v3390 = vld [vmem:[#allocation7 + $0x1270] sm:$0xff]
        %v3391 = vld [vmem:[#allocation7 + $0x1278] sm:$0xff]
        %v3393 = vsel %vm783, %v3374, 0
        %v3396 = vsel %vm783, %v3375, 0
        %3398 = vmatpush.msra.mxu0 0.0
        %3399 = vmatpush.msra.mxu0 0.0
        %3400 = vmatpush.msra.mxu0 0.0
        %3401 = vmatpush.msra.mxu0 0.0
        %3402 = vmatpush.msra.mxu0 0.0
        %3403 = vmatpush.msra.mxu0 0.0
        %3404 = vmatpush.msra.mxu0 0.0
        %3405 = vmatpush.msra.mxu0 0.0
        %3406 = vmatpush.msra.mxu0 0.0
        %3407 = vmatpush.msra.mxu0 0.0
        %3408 = vmatpush.msra.mxu0 0.0
        %3409 = vmatpush.msra.mxu0 0.0
        %3410 = vmatpush.msra.mxu0 0.0
        %3411 = vmatpush.msra.mxu0 0.0
        %3412 = vmatpush.msra.mxu0 %v764
        %3413 = vmatpush.msra.mxu0 %v763
        %3414 = vmatmul.f32.gmra.mxu0 %v3393
        %v3415 = vpop.f32.mrf.mxu0
        %v3416 = vadd.f32 0.0, %v3415
        %3417 = vmatmul.f32.gmra.mxu0 %v3396
        %v3418 = vpop.f32.mrf.mxu0
        %v3419 = vadd.f32 0.0, %v3418
        %3420 = vdwg.mxu0
        %3421 = vmatpush.msra.mxu0 %v3391
        %3422 = vmatpush.msra.mxu0 %v3390
        %3423 = vmatpush.msra.mxu0 %v3389
        %3424 = vmatpush.msra.mxu0 %v3388
        %3425 = vmatpush.msra.mxu0 %v3387
        %3426 = vmatpush.msra.mxu0 %v3386
        %3427 = vmatpush.msra.mxu0 %v3385
        %3428 = vmatpush.msra.mxu0 %v3384
        %3429 = vmatpush.msra.mxu0 %v3383
        %3430 = vmatpush.msra.mxu0 %v3382
        %3431 = vmatpush.msra.mxu0 %v3381
        %3432 = vmatpush.msra.mxu0 %v3380
        %3433 = vmatpush.msra.mxu0 %v3379
        %3434 = vmatpush.msra.mxu0 %v3378
        %3435 = vmatpush.msra.mxu0 %v3377
        %3436 = vmatpush.msra.mxu0 %v3376
        %3437 = vmatmul.f32.gmra.mxu0 %v3416
        %v3438 = vpop.f32.mrf.mxu0
        %v3439 = vadd.f32 0.0, %v3438
        %3440 = vmatmul.f32.gmra.mxu0 %v3419
        %v3441 = vpop.f32.mrf.mxu0
        %v3442 = vadd.f32 0.0, %v3441
        %3443 = vdwg.mxu0
        %v3444 = vadd.f32 %v3369, %v3439
        %v3445 = vadd.f32 %v3372, %v3442
        %v3446 = vld [vmem:[#allocation9 + $0xc] sm:$0x1]
        %v3447 = vperm.slane %v3446, 0
        %v3448 = vadd.f32 %v3444, %v3447
        %v3449 = vadd.f32 %v3445, %v3447
        %v3450 = vadd.f32 %v3232, %v3448
        %v3451 = vadd.f32 %v3233, %v3449
        %v3452 = vld [vmem:[%s9 + $0x250] sm:$0xff]
        %v3453 = vld [vmem:[%s9 + $0x258] sm:$0xff]
        %v3454 = vld [vmem:[#allocation7 + $0x1280] sm:$0xff]
        %v3455 = vld [vmem:[#allocation7 + $0x1288] sm:$0xff]
        %v3456 = vld [vmem:[#allocation7 + $0x1290] sm:$0xff]
        %v3457 = vld [vmem:[#allocation7 + $0x1298] sm:$0xff]
        %v3458 = vld [vmem:[#allocation7 + $0x12a0] sm:$0xff]
        %v3459 = vld [vmem:[#allocation7 + $0x12a8] sm:$0xff]
        %v3460 = vld [vmem:[#allocation7 + $0x12b0] sm:$0xff]
        %v3461 = vld [vmem:[#allocation7 + $0x12b8] sm:$0xff]
        %v3462 = vld [vmem:[#allocation7 + $0x12c0] sm:$0xff]
        %v3463 = vld [vmem:[#allocation7 + $0x12c8] sm:$0xff]
        %v3464 = vld [vmem:[#allocation7 + $0x12d0] sm:$0xff]
        %v3465 = vld [vmem:[#allocation7 + $0x12d8] sm:$0xff]
        %v3466 = vld [vmem:[#allocation7 + $0x12e0] sm:$0xff]
        %v3467 = vld [vmem:[#allocation7 + $0x12e8] sm:$0xff]
        %v3468 = vld [vmem:[#allocation7 + $0x12f0] sm:$0xff]
        %v3469 = vld [vmem:[#allocation7 + $0x12f8] sm:$0xff]
        %v3471 = vsel %vm783, %v3452, 0
        %v3474 = vsel %vm783, %v3453, 0
        %3476 = vmatpush.msra.mxu0 0.0
        %3477 = vmatpush.msra.mxu0 0.0
        %3478 = vmatpush.msra.mxu0 0.0
        %3479 = vmatpush.msra.mxu0 0.0
        %3480 = vmatpush.msra.mxu0 0.0
        %3481 = vmatpush.msra.mxu0 0.0
        %3482 = vmatpush.msra.mxu0 0.0
        %3483 = vmatpush.msra.mxu0 0.0
        %3484 = vmatpush.msra.mxu0 0.0
        %3485 = vmatpush.msra.mxu0 0.0
        %3486 = vmatpush.msra.mxu0 0.0
        %3487 = vmatpush.msra.mxu0 0.0
        %3488 = vmatpush.msra.mxu0 0.0
        %3489 = vmatpush.msra.mxu0 0.0
        %3490 = vmatpush.msra.mxu0 %v2361
        %3491 = vmatpush.msra.mxu0 %v2360
        %3492 = vmatmul.f32.gmra.mxu0 %v3471
        %v3493 = vpop.f32.mrf.mxu0
        %v3494 = vadd.f32 0.0, %v3493
        %3495 = vmatmul.f32.gmra.mxu0 %v3474
        %v3496 = vpop.f32.mrf.mxu0
        %v3497 = vadd.f32 0.0, %v3496
        %3498 = vdwg.mxu0
        %v3499 = vld [vmem:[%s9 + $0x260] sm:$0xff]
        %v3500 = vld [vmem:[%s9 + $0x268] sm:$0xff]
        %v3501 = vld [vmem:[#allocation7 + $0x1300] sm:$0xff]
        %v3502 = vld [vmem:[#allocation7 + $0x1308] sm:$0xff]
        %v3503 = vld [vmem:[#allocation7 + $0x1310] sm:$0xff]
        %v3504 = vld [vmem:[#allocation7 + $0x1318] sm:$0xff]
        %v3505 = vld [vmem:[#allocation7 + $0x1320] sm:$0xff]
        %v3506 = vld [vmem:[#allocation7 + $0x1328] sm:$0xff]
        %v3507 = vld [vmem:[#allocation7 + $0x1330] sm:$0xff]
        %v3508 = vld [vmem:[#allocation7 + $0x1338] sm:$0xff]
        %v3509 = vld [vmem:[#allocation7 + $0x1340] sm:$0xff]
        %v3510 = vld [vmem:[#allocation7 + $0x1348] sm:$0xff]
        %v3511 = vld [vmem:[#allocation7 + $0x1350] sm:$0xff]
        %v3512 = vld [vmem:[#allocation7 + $0x1358] sm:$0xff]
        %v3513 = vld [vmem:[#allocation7 + $0x1360] sm:$0xff]
        %v3514 = vld [vmem:[#allocation7 + $0x1368] sm:$0xff]
        %v3515 = vld [vmem:[#allocation7 + $0x1370] sm:$0xff]
        %v3516 = vld [vmem:[#allocation7 + $0x1378] sm:$0xff]
        %v3518 = vsel %vm783, %v3499, 0
        %v3521 = vsel %vm783, %v3500, 0
        %3523 = vmatpush.msra.mxu0 0.0
        %3524 = vmatpush.msra.mxu0 0.0
        %3525 = vmatpush.msra.mxu0 0.0
        %3526 = vmatpush.msra.mxu0 0.0
        %3527 = vmatpush.msra.mxu0 0.0
        %3528 = vmatpush.msra.mxu0 0.0
        %3529 = vmatpush.msra.mxu0 0.0
        %3530 = vmatpush.msra.mxu0 0.0
        %3531 = vmatpush.msra.mxu0 0.0
        %3532 = vmatpush.msra.mxu0 0.0
        %3533 = vmatpush.msra.mxu0 0.0
        %3534 = vmatpush.msra.mxu0 0.0
        %3535 = vmatpush.msra.mxu0 0.0
        %3536 = vmatpush.msra.mxu0 0.0
        %3537 = vmatpush.msra.mxu0 %v2361
        %3538 = vmatpush.msra.mxu0 %v2360
        %3539 = vmatmul.f32.gmra.mxu0 %v3518
        %v3540 = vpop.f32.mrf.mxu0
        %v3541 = vadd.f32 0.0, %v3540
        %3542 = vmatmul.f32.gmra.mxu0 %v3521
        %v3543 = vpop.f32.mrf.mxu0
        %v3544 = vadd.f32 0.0, %v3543
        %3545 = vdwg.mxu0
        %3546 = vmatpush.msra.mxu0 %v3516
        %3547 = vmatpush.msra.mxu0 %v3515
        %3548 = vmatpush.msra.mxu0 %v3514
        %3549 = vmatpush.msra.mxu0 %v3513
        %3550 = vmatpush.msra.mxu0 %v3512
        %3551 = vmatpush.msra.mxu0 %v3511
        %3552 = vmatpush.msra.mxu0 %v3510
        %3553 = vmatpush.msra.mxu0 %v3509
        %3554 = vmatpush.msra.mxu0 %v3508
        %3555 = vmatpush.msra.mxu0 %v3507
        %3556 = vmatpush.msra.mxu0 %v3506
        %3557 = vmatpush.msra.mxu0 %v3505
        %3558 = vmatpush.msra.mxu0 %v3504
        %3559 = vmatpush.msra.mxu0 %v3503
        %3560 = vmatpush.msra.mxu0 %v3502
        %3561 = vmatpush.msra.mxu0 %v3501
        %3562 = vmatmul.f32.gmra.mxu0 %v3541
        %v3563 = vpop.f32.mrf.mxu0
        %v3564 = vadd.f32 0.0, %v3563
        %3565 = vmatmul.f32.gmra.mxu0 %v3544
        %v3566 = vpop.f32.mrf.mxu0
        %v3567 = vadd.f32 0.0, %v3566
        %3568 = vdwg.mxu0
        %3569 = vmatpush.msra.mxu0 %v3469
        %3570 = vmatpush.msra.mxu0 %v3468
        %3571 = vmatpush.msra.mxu0 %v3467
        %3572 = vmatpush.msra.mxu0 %v3466
        %3573 = vmatpush.msra.mxu0 %v3465
        %3574 = vmatpush.msra.mxu0 %v3464
        %3575 = vmatpush.msra.mxu0 %v3463
        %3576 = vmatpush.msra.mxu0 %v3462
        %3577 = vmatpush.msra.mxu0 %v3461
        %3578 = vmatpush.msra.mxu0 %v3460
        %3579 = vmatpush.msra.mxu0 %v3459
        %3580 = vmatpush.msra.mxu0 %v3458
        %3581 = vmatpush.msra.mxu0 %v3457
        %3582 = vmatpush.msra.mxu0 %v3456
        %3583 = vmatpush.msra.mxu0 %v3455
        %3584 = vmatpush.msra.mxu0 %v3454
        %3585 = vmatmul.f32.gmra.mxu0 %v3494
        %v3586 = vpop.f32.mrf.mxu0
        %v3587 = vadd.f32 %v3564, %v3586
        %3588 = vmatmul.f32.gmra.mxu0 %v3497
        %v3589 = vpop.f32.mrf.mxu0
        %v3590 = vadd.f32 %v3567, %v3589
        %3591 = vdwg.mxu0
        %v3592 = vld [vmem:[%s9 + $0x270] sm:$0xff]
        %v3593 = vld [vmem:[%s9 + $0x278] sm:$0xff]
        %v3594 = vld [vmem:[#allocation7 + $0x1380] sm:$0xff]
        %v3595 = vld [vmem:[#allocation7 + $0x1388] sm:$0xff]
        %v3596 = vld [vmem:[#allocation7 + $0x1390] sm:$0xff]
        %v3597 = vld [vmem:[#allocation7 + $0x1398] sm:$0xff]
        %v3598 = vld [vmem:[#allocation7 + $0x13a0] sm:$0xff]
        %v3599 = vld [vmem:[#allocation7 + $0x13a8] sm:$0xff]
        %v3600 = vld [vmem:[#allocation7 + $0x13b0] sm:$0xff]
        %v3601 = vld [vmem:[#allocation7 + $0x13b8] sm:$0xff]
        %v3602 = vld [vmem:[#allocation7 + $0x13c0] sm:$0xff]
        %v3603 = vld [vmem:[#allocation7 + $0x13c8] sm:$0xff]
        %v3604 = vld [vmem:[#allocation7 + $0x13d0] sm:$0xff]
        %v3605 = vld [vmem:[#allocation7 + $0x13d8] sm:$0xff]
        %v3606 = vld [vmem:[#allocation7 + $0x13e0] sm:$0xff]
        %v3607 = vld [vmem:[#allocation7 + $0x13e8] sm:$0xff]
        %v3608 = vld [vmem:[#allocation7 + $0x13f0] sm:$0xff]
        %v3609 = vld [vmem:[#allocation7 + $0x13f8] sm:$0xff]
        %v3611 = vsel %vm783, %v3592, 0
        %v3614 = vsel %vm783, %v3593, 0
        %3616 = vmatpush.msra.mxu0 0.0
        %3617 = vmatpush.msra.mxu0 0.0
        %3618 = vmatpush.msra.mxu0 0.0
        %3619 = vmatpush.msra.mxu0 0.0
        %3620 = vmatpush.msra.mxu0 0.0
        %3621 = vmatpush.msra.mxu0 0.0
        %3622 = vmatpush.msra.mxu0 0.0
        %3623 = vmatpush.msra.mxu0 0.0
        %3624 = vmatpush.msra.mxu0 0.0
        %3625 = vmatpush.msra.mxu0 0.0
        %3626 = vmatpush.msra.mxu0 0.0
        %3627 = vmatpush.msra.mxu0 0.0
        %3628 = vmatpush.msra.mxu0 0.0
        %3629 = vmatpush.msra.mxu0 0.0
        %3630 = vmatpush.msra.mxu0 %v2361
        %3631 = vmatpush.msra.mxu0 %v2360
        %3632 = vmatmul.f32.gmra.mxu0 %v3611
        %v3633 = vpop.f32.mrf.mxu0
        %v3634 = vadd.f32 0.0, %v3633
        %3635 = vmatmul.f32.gmra.mxu0 %v3614
        %v3636 = vpop.f32.mrf.mxu0
        %v3637 = vadd.f32 0.0, %v3636
        %3638 = vdwg.mxu0
        %3639 = vmatpush.msra.mxu0 %v3609
        %3640 = vmatpush.msra.mxu0 %v3608
        %3641 = vmatpush.msra.mxu0 %v3607
        %3642 = vmatpush.msra.mxu0 %v3606
        %3643 = vmatpush.msra.mxu0 %v3605
        %3644 = vmatpush.msra.mxu0 %v3604
        %3645 = vmatpush.msra.mxu0 %v3603
        %3646 = vmatpush.msra.mxu0 %v3602
        %3647 = vmatpush.msra.mxu0 %v3601
        %3648 = vmatpush.msra.mxu0 %v3600
        %3649 = vmatpush.msra.mxu0 %v3599
        %3650 = vmatpush.msra.mxu0 %v3598
        %3651 = vmatpush.msra.mxu0 %v3597
        %3652 = vmatpush.msra.mxu0 %v3596
        %3653 = vmatpush.msra.mxu0 %v3595
        %3654 = vmatpush.msra.mxu0 %v3594
        %3655 = vmatmul.f32.gmra.mxu0 %v3634
        %v3656 = vpop.f32.mrf.mxu0
        %v3657 = vadd.f32 0.0, %v3656
        %3658 = vmatmul.f32.gmra.mxu0 %v3637
        %v3659 = vpop.f32.mrf.mxu0
        %v3660 = vadd.f32 0.0, %v3659
        %3661 = vdwg.mxu0
        %v3662 = vadd.f32 %v3587, %v3657
        %v3663 = vadd.f32 %v3590, %v3660
        %v3664 = vld [vmem:[#allocation9 + $0xd] sm:$0x1]
        %v3665 = vperm.slane %v3664, 0
        %v3666 = vadd.f32 %v3662, %v3665
        %v3667 = vadd.f32 %v3663, %v3665
        %v3668 = vmax.f32 %v3666, 0.0
        %v3669 = vmax.f32 %v3667, 0.0
        %v3670 = vld [vmem:[%s9 + $0x280] sm:$0xff]
        %v3671 = vld [vmem:[%s9 + $0x288] sm:$0xff]
        %v3672 = vld [vmem:[#allocation7 + $0x1400] sm:$0xff]
        %v3673 = vld [vmem:[#allocation7 + $0x1408] sm:$0xff]
        %v3674 = vld [vmem:[#allocation7 + $0x1410] sm:$0xff]
        %v3675 = vld [vmem:[#allocation7 + $0x1418] sm:$0xff]
        %v3676 = vld [vmem:[#allocation7 + $0x1420] sm:$0xff]
        %v3677 = vld [vmem:[#allocation7 + $0x1428] sm:$0xff]
        %v3678 = vld [vmem:[#allocation7 + $0x1430] sm:$0xff]
        %v3679 = vld [vmem:[#allocation7 + $0x1438] sm:$0xff]
        %v3680 = vld [vmem:[#allocation7 + $0x1440] sm:$0xff]
        %v3681 = vld [vmem:[#allocation7 + $0x1448] sm:$0xff]
        %v3682 = vld [vmem:[#allocation7 + $0x1450] sm:$0xff]
        %v3683 = vld [vmem:[#allocation7 + $0x1458] sm:$0xff]
        %v3684 = vld [vmem:[#allocation7 + $0x1460] sm:$0xff]
        %v3685 = vld [vmem:[#allocation7 + $0x1468] sm:$0xff]
        %v3686 = vld [vmem:[#allocation7 + $0x1470] sm:$0xff]
        %v3687 = vld [vmem:[#allocation7 + $0x1478] sm:$0xff]
        %v3689 = vsel %vm783, %v3670, 0
        %v3692 = vsel %vm783, %v3671, 0
        %3694 = vmatpush.msra.mxu0 0.0
        %3695 = vmatpush.msra.mxu0 0.0
        %3696 = vmatpush.msra.mxu0 0.0
        %3697 = vmatpush.msra.mxu0 0.0
        %3698 = vmatpush.msra.mxu0 0.0
        %3699 = vmatpush.msra.mxu0 0.0
        %3700 = vmatpush.msra.mxu0 0.0
        %3701 = vmatpush.msra.mxu0 0.0
        %3702 = vmatpush.msra.mxu0 0.0
        %3703 = vmatpush.msra.mxu0 0.0
        %3704 = vmatpush.msra.mxu0 0.0
        %3705 = vmatpush.msra.mxu0 0.0
        %3706 = vmatpush.msra.mxu0 0.0
        %3707 = vmatpush.msra.mxu0 0.0
        %3708 = vmatpush.msra.mxu0 %v3669
        %3709 = vmatpush.msra.mxu0 %v3668
        %3710 = vmatmul.f32.gmra.mxu0 %v3689
        %v3711 = vpop.f32.mrf.mxu0
        %v3712 = vadd.f32 0.0, %v3711
        %3713 = vmatmul.f32.gmra.mxu0 %v3692
        %v3714 = vpop.f32.mrf.mxu0
        %v3715 = vadd.f32 0.0, %v3714
        %3716 = vdwg.mxu0
        %v3717 = vld [vmem:[%s9 + $0x290] sm:$0xff]
        %v3718 = vld [vmem:[%s9 + $0x298] sm:$0xff]
        %v3719 = vld [vmem:[#allocation7 + $0x1480] sm:$0xff]
        %v3720 = vld [vmem:[#allocation7 + $0x1488] sm:$0xff]
        %v3721 = vld [vmem:[#allocation7 + $0x1490] sm:$0xff]
        %v3722 = vld [vmem:[#allocation7 + $0x1498] sm:$0xff]
        %v3723 = vld [vmem:[#allocation7 + $0x14a0] sm:$0xff]
        %v3724 = vld [vmem:[#allocation7 + $0x14a8] sm:$0xff]
        %v3725 = vld [vmem:[#allocation7 + $0x14b0] sm:$0xff]
        %v3726 = vld [vmem:[#allocation7 + $0x14b8] sm:$0xff]
        %v3727 = vld [vmem:[#allocation7 + $0x14c0] sm:$0xff]
        %v3728 = vld [vmem:[#allocation7 + $0x14c8] sm:$0xff]
        %v3729 = vld [vmem:[#allocation7 + $0x14d0] sm:$0xff]
        %v3730 = vld [vmem:[#allocation7 + $0x14d8] sm:$0xff]
        %v3731 = vld [vmem:[#allocation7 + $0x14e0] sm:$0xff]
        %v3732 = vld [vmem:[#allocation7 + $0x14e8] sm:$0xff]
        %v3733 = vld [vmem:[#allocation7 + $0x14f0] sm:$0xff]
        %v3734 = vld [vmem:[#allocation7 + $0x14f8] sm:$0xff]
        %v3736 = vsel %vm783, %v3717, 0
        %v3739 = vsel %vm783, %v3718, 0
        %3741 = vmatpush.msra.mxu0 0.0
        %3742 = vmatpush.msra.mxu0 0.0
        %3743 = vmatpush.msra.mxu0 0.0
        %3744 = vmatpush.msra.mxu0 0.0
        %3745 = vmatpush.msra.mxu0 0.0
        %3746 = vmatpush.msra.mxu0 0.0
        %3747 = vmatpush.msra.mxu0 0.0
        %3748 = vmatpush.msra.mxu0 0.0
        %3749 = vmatpush.msra.mxu0 0.0
        %3750 = vmatpush.msra.mxu0 0.0
        %3751 = vmatpush.msra.mxu0 0.0
        %3752 = vmatpush.msra.mxu0 0.0
        %3753 = vmatpush.msra.mxu0 0.0
        %3754 = vmatpush.msra.mxu0 0.0
        %3755 = vmatpush.msra.mxu0 %v3669
        %3756 = vmatpush.msra.mxu0 %v3668
        %3757 = vmatmul.f32.gmra.mxu0 %v3736
        %v3758 = vpop.f32.mrf.mxu0
        %v3759 = vadd.f32 0.0, %v3758
        %3760 = vmatmul.f32.gmra.mxu0 %v3739
        %v3761 = vpop.f32.mrf.mxu0
        %v3762 = vadd.f32 0.0, %v3761
        %3763 = vdwg.mxu0
        %3764 = vmatpush.msra.mxu0 %v3734
        %3765 = vmatpush.msra.mxu0 %v3733
        %3766 = vmatpush.msra.mxu0 %v3732
        %3767 = vmatpush.msra.mxu0 %v3731
        %3768 = vmatpush.msra.mxu0 %v3730
        %3769 = vmatpush.msra.mxu0 %v3729
        %3770 = vmatpush.msra.mxu0 %v3728
        %3771 = vmatpush.msra.mxu0 %v3727
        %3772 = vmatpush.msra.mxu0 %v3726
        %3773 = vmatpush.msra.mxu0 %v3725
        %3774 = vmatpush.msra.mxu0 %v3724
        %3775 = vmatpush.msra.mxu0 %v3723
        %3776 = vmatpush.msra.mxu0 %v3722
        %3777 = vmatpush.msra.mxu0 %v3721
        %3778 = vmatpush.msra.mxu0 %v3720
        %3779 = vmatpush.msra.mxu0 %v3719
        %3780 = vmatmul.f32.gmra.mxu0 %v3759
        %v3781 = vpop.f32.mrf.mxu0
        %v3782 = vadd.f32 0.0, %v3781
        %3783 = vmatmul.f32.gmra.mxu0 %v3762
        %v3784 = vpop.f32.mrf.mxu0
        %v3785 = vadd.f32 0.0, %v3784
        %3786 = vdwg.mxu0
        %3787 = vmatpush.msra.mxu0 %v3687
        %3788 = vmatpush.msra.mxu0 %v3686
        %3789 = vmatpush.msra.mxu0 %v3685
        %3790 = vmatpush.msra.mxu0 %v3684
        %3791 = vmatpush.msra.mxu0 %v3683
        %3792 = vmatpush.msra.mxu0 %v3682
        %3793 = vmatpush.msra.mxu0 %v3681
        %3794 = vmatpush.msra.mxu0 %v3680
        %3795 = vmatpush.msra.mxu0 %v3679
        %3796 = vmatpush.msra.mxu0 %v3678
        %3797 = vmatpush.msra.mxu0 %v3677
        %3798 = vmatpush.msra.mxu0 %v3676
        %3799 = vmatpush.msra.mxu0 %v3675
        %3800 = vmatpush.msra.mxu0 %v3674
        %3801 = vmatpush.msra.mxu0 %v3673
        %3802 = vmatpush.msra.mxu0 %v3672
        %3803 = vmatmul.f32.gmra.mxu0 %v3712
        %v3804 = vpop.f32.mrf.mxu0
        %v3805 = vadd.f32 %v3782, %v3804
        %3806 = vmatmul.f32.gmra.mxu0 %v3715
        %v3807 = vpop.f32.mrf.mxu0
        %v3808 = vadd.f32 %v3785, %v3807
        %3809 = vdwg.mxu0
        %v3810 = vld [vmem:[%s9 + $0x2a0] sm:$0xff]
        %v3811 = vld [vmem:[%s9 + $0x2a8] sm:$0xff]
        %v3812 = vld [vmem:[#allocation7 + $0x1500] sm:$0xff]
        %v3813 = vld [vmem:[#allocation7 + $0x1508] sm:$0xff]
        %v3814 = vld [vmem:[#allocation7 + $0x1510] sm:$0xff]
        %v3815 = vld [vmem:[#allocation7 + $0x1518] sm:$0xff]
        %v3816 = vld [vmem:[#allocation7 + $0x1520] sm:$0xff]
        %v3817 = vld [vmem:[#allocation7 + $0x1528] sm:$0xff]
        %v3818 = vld [vmem:[#allocation7 + $0x1530] sm:$0xff]
        %v3819 = vld [vmem:[#allocation7 + $0x1538] sm:$0xff]
        %v3820 = vld [vmem:[#allocation7 + $0x1540] sm:$0xff]
        %v3821 = vld [vmem:[#allocation7 + $0x1548] sm:$0xff]
        %v3822 = vld [vmem:[#allocation7 + $0x1550] sm:$0xff]
        %v3823 = vld [vmem:[#allocation7 + $0x1558] sm:$0xff]
        %v3824 = vld [vmem:[#allocation7 + $0x1560] sm:$0xff]
        %v3825 = vld [vmem:[#allocation7 + $0x1568] sm:$0xff]
        %v3826 = vld [vmem:[#allocation7 + $0x1570] sm:$0xff]
        %v3827 = vld [vmem:[#allocation7 + $0x1578] sm:$0xff]
        %v3829 = vsel %vm783, %v3810, 0
        %v3832 = vsel %vm783, %v3811, 0
        %3834 = vmatpush.msra.mxu0 0.0
        %3835 = vmatpush.msra.mxu0 0.0
        %3836 = vmatpush.msra.mxu0 0.0
        %3837 = vmatpush.msra.mxu0 0.0
        %3838 = vmatpush.msra.mxu0 0.0
        %3839 = vmatpush.msra.mxu0 0.0
        %3840 = vmatpush.msra.mxu0 0.0
        %3841 = vmatpush.msra.mxu0 0.0
        %3842 = vmatpush.msra.mxu0 0.0
        %3843 = vmatpush.msra.mxu0 0.0
        %3844 = vmatpush.msra.mxu0 0.0
        %3845 = vmatpush.msra.mxu0 0.0
        %3846 = vmatpush.msra.mxu0 0.0
        %3847 = vmatpush.msra.mxu0 0.0
        %3848 = vmatpush.msra.mxu0 %v3669
        %3849 = vmatpush.msra.mxu0 %v3668
        %3850 = vmatmul.f32.gmra.mxu0 %v3829
        %v3851 = vpop.f32.mrf.mxu0
        %v3852 = vadd.f32 0.0, %v3851
        %3853 = vmatmul.f32.gmra.mxu0 %v3832
        %v3854 = vpop.f32.mrf.mxu0
        %v3855 = vadd.f32 0.0, %v3854
        %3856 = vdwg.mxu0
        %3857 = vmatpush.msra.mxu0 %v3827
        %3858 = vmatpush.msra.mxu0 %v3826
        %3859 = vmatpush.msra.mxu0 %v3825
        %3860 = vmatpush.msra.mxu0 %v3824
        %3861 = vmatpush.msra.mxu0 %v3823
        %3862 = vmatpush.msra.mxu0 %v3822
        %3863 = vmatpush.msra.mxu0 %v3821
        %3864 = vmatpush.msra.mxu0 %v3820
        %3865 = vmatpush.msra.mxu0 %v3819
        %3866 = vmatpush.msra.mxu0 %v3818
        %3867 = vmatpush.msra.mxu0 %v3817
        %3868 = vmatpush.msra.mxu0 %v3816
        %3869 = vmatpush.msra.mxu0 %v3815
        %3870 = vmatpush.msra.mxu0 %v3814
        %3871 = vmatpush.msra.mxu0 %v3813
        %3872 = vmatpush.msra.mxu0 %v3812
        %3873 = vmatmul.f32.gmra.mxu0 %v3852
        %v3874 = vpop.f32.mrf.mxu0
        %v3875 = vadd.f32 0.0, %v3874
        %3876 = vmatmul.f32.gmra.mxu0 %v3855
        %v3877 = vpop.f32.mrf.mxu0
        %v3878 = vadd.f32 0.0, %v3877
        %3879 = vdwg.mxu0
        %v3880 = vadd.f32 %v3805, %v3875
        %v3881 = vadd.f32 %v3808, %v3878
        %v3882 = vld [vmem:[#allocation9 + $0xe] sm:$0x1]
        %v3883 = vperm.slane %v3882, 0
        %v3884 = vadd.f32 %v3880, %v3883
        %v3885 = vadd.f32 %v3881, %v3883
        %v3886 = vld [vmem:[%s9 + $0x2b0] sm:$0xff]
        %v3887 = vld [vmem:[%s9 + $0x2b8] sm:$0xff]
        %v3888 = vld [vmem:[#allocation7 + $0x1580] sm:$0xff]
        %v3889 = vld [vmem:[#allocation7 + $0x1588] sm:$0xff]
        %v3890 = vld [vmem:[#allocation7 + $0x1590] sm:$0xff]
        %v3891 = vld [vmem:[#allocation7 + $0x1598] sm:$0xff]
        %v3892 = vld [vmem:[#allocation7 + $0x15a0] sm:$0xff]
        %v3893 = vld [vmem:[#allocation7 + $0x15a8] sm:$0xff]
        %v3894 = vld [vmem:[#allocation7 + $0x15b0] sm:$0xff]
        %v3895 = vld [vmem:[#allocation7 + $0x15b8] sm:$0xff]
        %v3896 = vld [vmem:[#allocation7 + $0x15c0] sm:$0xff]
        %v3897 = vld [vmem:[#allocation7 + $0x15c8] sm:$0xff]
        %v3898 = vld [vmem:[#allocation7 + $0x15d0] sm:$0xff]
        %v3899 = vld [vmem:[#allocation7 + $0x15d8] sm:$0xff]
        %v3900 = vld [vmem:[#allocation7 + $0x15e0] sm:$0xff]
        %v3901 = vld [vmem:[#allocation7 + $0x15e8] sm:$0xff]
        %v3902 = vld [vmem:[#allocation7 + $0x15f0] sm:$0xff]
        %v3903 = vld [vmem:[#allocation7 + $0x15f8] sm:$0xff]
        %v3905 = vsel %vm783, %v3886, 0
        %v3908 = vsel %vm783, %v3887, 0
        %3910 = vmatpush.msra.mxu0 0.0
        %3911 = vmatpush.msra.mxu0 0.0
        %3912 = vmatpush.msra.mxu0 0.0
        %3913 = vmatpush.msra.mxu0 0.0
        %3914 = vmatpush.msra.mxu0 0.0
        %3915 = vmatpush.msra.mxu0 0.0
        %3916 = vmatpush.msra.mxu0 0.0
        %3917 = vmatpush.msra.mxu0 0.0
        %3918 = vmatpush.msra.mxu0 0.0
        %3919 = vmatpush.msra.mxu0 0.0
        %3920 = vmatpush.msra.mxu0 0.0
        %3921 = vmatpush.msra.mxu0 0.0
        %3922 = vmatpush.msra.mxu0 0.0
        %3923 = vmatpush.msra.mxu0 0.0
        %3924 = vmatpush.msra.mxu0 %v2799
        %3925 = vmatpush.msra.mxu0 %v2798
        %3926 = vmatmul.f32.gmra.mxu0 %v3905
        %v3927 = vpop.f32.mrf.mxu0
        %v3928 = vadd.f32 0.0, %v3927
        %3929 = vmatmul.f32.gmra.mxu0 %v3908
        %v3930 = vpop.f32.mrf.mxu0
        %v3931 = vadd.f32 0.0, %v3930
        %3932 = vdwg.mxu0
        %v3933 = vld [vmem:[%s9 + $0x2c0] sm:$0xff]
        %v3934 = vld [vmem:[%s9 + $0x2c8] sm:$0xff]
        %v3935 = vld [vmem:[#allocation7 + $0x1600] sm:$0xff]
        %v3936 = vld [vmem:[#allocation7 + $0x1608] sm:$0xff]
        %v3937 = vld [vmem:[#allocation7 + $0x1610] sm:$0xff]
        %v3938 = vld [vmem:[#allocation7 + $0x1618] sm:$0xff]
        %v3939 = vld [vmem:[#allocation7 + $0x1620] sm:$0xff]
        %v3940 = vld [vmem:[#allocation7 + $0x1628] sm:$0xff]
        %v3941 = vld [vmem:[#allocation7 + $0x1630] sm:$0xff]
        %v3942 = vld [vmem:[#allocation7 + $0x1638] sm:$0xff]
        %v3943 = vld [vmem:[#allocation7 + $0x1640] sm:$0xff]
        %v3944 = vld [vmem:[#allocation7 + $0x1648] sm:$0xff]
        %v3945 = vld [vmem:[#allocation7 + $0x1650] sm:$0xff]
        %v3946 = vld [vmem:[#allocation7 + $0x1658] sm:$0xff]
        %v3947 = vld [vmem:[#allocation7 + $0x1660] sm:$0xff]
        %v3948 = vld [vmem:[#allocation7 + $0x1668] sm:$0xff]
        %v3949 = vld [vmem:[#allocation7 + $0x1670] sm:$0xff]
        %v3950 = vld [vmem:[#allocation7 + $0x1678] sm:$0xff]
        %v3952 = vsel %vm783, %v3933, 0
        %v3955 = vsel %vm783, %v3934, 0
        %3957 = vmatpush.msra.mxu0 0.0
        %3958 = vmatpush.msra.mxu0 0.0
        %3959 = vmatpush.msra.mxu0 0.0
        %3960 = vmatpush.msra.mxu0 0.0
        %3961 = vmatpush.msra.mxu0 0.0
        %3962 = vmatpush.msra.mxu0 0.0
        %3963 = vmatpush.msra.mxu0 0.0
        %3964 = vmatpush.msra.mxu0 0.0
        %3965 = vmatpush.msra.mxu0 0.0
        %3966 = vmatpush.msra.mxu0 0.0
        %3967 = vmatpush.msra.mxu0 0.0
        %3968 = vmatpush.msra.mxu0 0.0
        %3969 = vmatpush.msra.mxu0 0.0
        %3970 = vmatpush.msra.mxu0 0.0
        %3971 = vmatpush.msra.mxu0 %v2799
        %3972 = vmatpush.msra.mxu0 %v2798
        %3973 = vmatmul.f32.gmra.mxu0 %v3952
        %v3974 = vpop.f32.mrf.mxu0
        %v3975 = vadd.f32 0.0, %v3974
        %3976 = vmatmul.f32.gmra.mxu0 %v3955
        %v3977 = vpop.f32.mrf.mxu0
        %v3978 = vadd.f32 0.0, %v3977
        %3979 = vdwg.mxu0
        %3980 = vmatpush.msra.mxu0 %v3950
        %3981 = vmatpush.msra.mxu0 %v3949
        %3982 = vmatpush.msra.mxu0 %v3948
        %3983 = vmatpush.msra.mxu0 %v3947
        %3984 = vmatpush.msra.mxu0 %v3946
        %3985 = vmatpush.msra.mxu0 %v3945
        %3986 = vmatpush.msra.mxu0 %v3944
        %3987 = vmatpush.msra.mxu0 %v3943
        %3988 = vmatpush.msra.mxu0 %v3942
        %3989 = vmatpush.msra.mxu0 %v3941
        %3990 = vmatpush.msra.mxu0 %v3940
        %3991 = vmatpush.msra.mxu0 %v3939
        %3992 = vmatpush.msra.mxu0 %v3938
        %3993 = vmatpush.msra.mxu0 %v3937
        %3994 = vmatpush.msra.mxu0 %v3936
        %3995 = vmatpush.msra.mxu0 %v3935
        %3996 = vmatmul.f32.gmra.mxu0 %v3975
        %v3997 = vpop.f32.mrf.mxu0
        %v3998 = vadd.f32 0.0, %v3997
        %3999 = vmatmul.f32.gmra.mxu0 %v3978
        %v4000 = vpop.f32.mrf.mxu0
        %v4001 = vadd.f32 0.0, %v4000
        %4002 = vdwg.mxu0
        %4003 = vmatpush.msra.mxu0 %v3903
        %4004 = vmatpush.msra.mxu0 %v3902
        %4005 = vmatpush.msra.mxu0 %v3901
        %4006 = vmatpush.msra.mxu0 %v3900
        %4007 = vmatpush.msra.mxu0 %v3899
        %4008 = vmatpush.msra.mxu0 %v3898
        %4009 = vmatpush.msra.mxu0 %v3897
        %4010 = vmatpush.msra.mxu0 %v3896
        %4011 = vmatpush.msra.mxu0 %v3895
        %4012 = vmatpush.msra.mxu0 %v3894
        %4013 = vmatpush.msra.mxu0 %v3893
        %4014 = vmatpush.msra.mxu0 %v3892
        %4015 = vmatpush.msra.mxu0 %v3891
        %4016 = vmatpush.msra.mxu0 %v3890
        %4017 = vmatpush.msra.mxu0 %v3889
        %4018 = vmatpush.msra.mxu0 %v3888
        %4019 = vmatmul.f32.gmra.mxu0 %v3928
        %v4020 = vpop.f32.mrf.mxu0
        %v4021 = vadd.f32 %v3998, %v4020
        %4022 = vmatmul.f32.gmra.mxu0 %v3931
        %v4023 = vpop.f32.mrf.mxu0
        %v4024 = vadd.f32 %v4001, %v4023
        %4025 = vdwg.mxu0
        %v4026 = vld [vmem:[%s9 + $0x2d0] sm:$0xff]
        %v4027 = vld [vmem:[%s9 + $0x2d8] sm:$0xff]
        %v4028 = vld [vmem:[#allocation7 + $0x1680] sm:$0xff]
        %v4029 = vld [vmem:[#allocation7 + $0x1688] sm:$0xff]
        %v4030 = vld [vmem:[#allocation7 + $0x1690] sm:$0xff]
        %v4031 = vld [vmem:[#allocation7 + $0x1698] sm:$0xff]
        %v4032 = vld [vmem:[#allocation7 + $0x16a0] sm:$0xff]
        %v4033 = vld [vmem:[#allocation7 + $0x16a8] sm:$0xff]
        %v4034 = vld [vmem:[#allocation7 + $0x16b0] sm:$0xff]
        %v4035 = vld [vmem:[#allocation7 + $0x16b8] sm:$0xff]
        %v4036 = vld [vmem:[#allocation7 + $0x16c0] sm:$0xff]
        %v4037 = vld [vmem:[#allocation7 + $0x16c8] sm:$0xff]
        %v4038 = vld [vmem:[#allocation7 + $0x16d0] sm:$0xff]
        %v4039 = vld [vmem:[#allocation7 + $0x16d8] sm:$0xff]
        %v4040 = vld [vmem:[#allocation7 + $0x16e0] sm:$0xff]
        %v4041 = vld [vmem:[#allocation7 + $0x16e8] sm:$0xff]
        %v4042 = vld [vmem:[#allocation7 + $0x16f0] sm:$0xff]
        %v4043 = vld [vmem:[#allocation7 + $0x16f8] sm:$0xff]
        %v4045 = vsel %vm783, %v4026, 0
        %v4048 = vsel %vm783, %v4027, 0
        %4050 = vmatpush.msra.mxu0 0.0
        %4051 = vmatpush.msra.mxu0 0.0
        %4052 = vmatpush.msra.mxu0 0.0
        %4053 = vmatpush.msra.mxu0 0.0
        %4054 = vmatpush.msra.mxu0 0.0
        %4055 = vmatpush.msra.mxu0 0.0
        %4056 = vmatpush.msra.mxu0 0.0
        %4057 = vmatpush.msra.mxu0 0.0
        %4058 = vmatpush.msra.mxu0 0.0
        %4059 = vmatpush.msra.mxu0 0.0
        %4060 = vmatpush.msra.mxu0 0.0
        %4061 = vmatpush.msra.mxu0 0.0
        %4062 = vmatpush.msra.mxu0 0.0
        %4063 = vmatpush.msra.mxu0 0.0
        %4064 = vmatpush.msra.mxu0 %v2799
        %4065 = vmatpush.msra.mxu0 %v2798
        %4066 = vmatmul.f32.gmra.mxu0 %v4045
        %v4067 = vpop.f32.mrf.mxu0
        %v4068 = vadd.f32 0.0, %v4067
        %4069 = vmatmul.f32.gmra.mxu0 %v4048
        %v4070 = vpop.f32.mrf.mxu0
        %v4071 = vadd.f32 0.0, %v4070
        %4072 = vdwg.mxu0
        %4073 = vmatpush.msra.mxu0 %v4043
        %4074 = vmatpush.msra.mxu0 %v4042
        %4075 = vmatpush.msra.mxu0 %v4041
        %4076 = vmatpush.msra.mxu0 %v4040
        %4077 = vmatpush.msra.mxu0 %v4039
        %4078 = vmatpush.msra.mxu0 %v4038
        %4079 = vmatpush.msra.mxu0 %v4037
        %4080 = vmatpush.msra.mxu0 %v4036
        %4081 = vmatpush.msra.mxu0 %v4035
        %4082 = vmatpush.msra.mxu0 %v4034
        %4083 = vmatpush.msra.mxu0 %v4033
        %4084 = vmatpush.msra.mxu0 %v4032
        %4085 = vmatpush.msra.mxu0 %v4031
        %4086 = vmatpush.msra.mxu0 %v4030
        %4087 = vmatpush.msra.mxu0 %v4029
        %4088 = vmatpush.msra.mxu0 %v4028
        %4089 = vmatmul.f32.gmra.mxu0 %v4068
        %v4090 = vpop.f32.mrf.mxu0
        %v4091 = vadd.f32 0.0, %v4090
        %4092 = vmatmul.f32.gmra.mxu0 %v4071
        %v4093 = vpop.f32.mrf.mxu0
        %v4094 = vadd.f32 0.0, %v4093
        %4095 = vdwg.mxu0
        %v4096 = vadd.f32 %v4021, %v4091
        %v4097 = vadd.f32 %v4024, %v4094
        %v4098 = vld [vmem:[#allocation9 + $0xf] sm:$0x1]
        %v4099 = vperm.slane %v4098, 0
        %v4100 = vadd.f32 %v4096, %v4099
        %v4101 = vadd.f32 %v4097, %v4099
        %v4102 = vadd.f32 %v3884, %v4100
        %v4103 = vadd.f32 %v3885, %v4101
        %4104 = vst [vmem:[%s503] sm:$0xff] %v1924
        %4105 = vst [vmem:[%s503 + $0x8] sm:$0xff] %v1925
        %s4106 = scalar_lea.vmem %s503, 16
        %4107 = vst [vmem:[%s4106] sm:$0xff] %v2796
        %4108 = vst [vmem:[%s4106 + $0x8] sm:$0xff] %v2797
        %s4109 = scalar_lea.vmem %s503, 32
        %4110 = vst [vmem:[%s4109] sm:$0xff] %v3450
        %4111 = vst [vmem:[%s4109 + $0x8] sm:$0xff] %v3451
        %s4112 = scalar_lea.vmem %s503, 48
        %4113 = vst [vmem:[%s4112] sm:$0xff] %v4102
        %4114 = vst [vmem:[%s4112 + $0x8] sm:$0xff] %v4103
        %p4115 = scmp.lt.s32.totalorder %s25, 1
        %s4116 = scalar_select %p4115, %s25, 1
        %s4117 = smul.addr %s4116, 8
        %s4118 = smul.addr %s4117, 8
        %s4119 = scalar_lea.vmem %s11, %s4118
        // Predicated region
        $region85: #{up_fused_forward.1} parent=63 // pred_check
          %p4120 = pneg %p289
        $region86: #{up_fused_forward.1} parent=63 // pred_check_branch
          %4122 = sbr.rel (%p4120) target = $region88
        $region87: #{up_fused_forward.1} parent=63 // pred_region
          _
        $region88: #{up_fused_forward.1} parent=63 // pred_fallthru
          _
      $region64: #{up_fused_forward.1} parent=5 // pred_fallthru
        _
      %p4123 = scmp.le.s32.totalorder 2, %s20
      // Predicated region
      $region89: #{up_fused_forward.1} parent=5 // pred_check
        %p4124 = pneg %p4123
      $region90: #{up_fused_forward.1} parent=5 // pred_check_branch
        %4126 = sbr.rel (%p4124) target = $region92
      $region91: #{up_fused_forward.1} parent=5 // pred_region
        %s4127 = ssub.s32 %s20, 2
        // Predicated region
        $region93: #{up_fused_forward.1} parent=91 // pred_check
          %p4128 = pneg %p295
        $region94: #{up_fused_forward.1} parent=91 // pred_check_branch
          %4130 = sbr.rel (%p4128) target = $region96
        $region95: #{up_fused_forward.1} parent=91 // pred_region
          %p4131 = scmp.lt.s32.totalorder %s26, 1
          %s4132 = scalar_select %p4131, %s26, 1
          %s4133 = smul.addr %s4132, 8
          %s4134 = smul.addr %s4133, 8
          %s4135 = scalar_lea.vmem %s11, %s4134
        $region96: #{up_fused_forward.1} parent=91 // pred_fallthru
          _
      $region92: #{up_fused_forward.1} parent=5 // pred_fallthru
        _
    $region6: #{up_fused_forward.1} parent=1 // loop_footer
      %s24 = sadd.s32 1, %s20
    $region7: #{up_fused_forward.1} parent=1 // loop_footer_branch
      %19 = sbr.rel target = $region3
    $region8: #{up_fused_forward.1} parent=1 // loop_exit
      _
    %4136 = vsyncpa [#allocation3], 1
    %s4137 = scalar_lea.sflag [#allocation3], 1
    %4138 = vsyncpa %s4137, 1
    %4139 = vsyncpa [#allocation5], 1
    %4140 = vsyncpa [#allocation8], 1

</llo_original>
